<compile_context>
chip_gen: v5e
topology: v5e:2x2
jax: 0.10.0
libtpu: 0.0.40
codegen_flags: <defaults>
</compile_context>

<pallas_src>
import functools

import jax
import jax.numpy as jnp
from jax import lax
from jax.experimental import pallas as pl
from jax.experimental.pallas import tpu as pltpu

EPS = 1e-5
NUM_GROUPS = 32


def _silu(x):
    return x * jax.nn.sigmoid(x)


# ----------------------------------------------------------------------------- in-kernel helpers
def _gn_silu(x, agg, agg_t, gamma, beta):
    """GroupNorm(32) + SiLU on an (HW, C) f32 tile.

    agg: (C, G) 0/1 membership; agg_t: (G, C) pre-transposed membership.
    Two-pass (subtract-mean) variance for numerical stability; stats in f32.
    """
    hw, c = x.shape
    g = agg.shape[1]
    n = float(hw * (c // g))
    s = jnp.sum(x, axis=0, keepdims=True)                                   # (1, C)
    mean_g = jnp.dot(s, agg, preferred_element_type=jnp.float32) / n        # (1, G)
    mean_c = jnp.dot(mean_g, agg_t, preferred_element_type=jnp.float32)     # (1, C)
    xc = x - mean_c
    ss = jnp.sum(xc * xc, axis=0, keepdims=True)                            # (1, C)
    var_g = jnp.dot(ss, agg, preferred_element_type=jnp.float32) / n        # (1, G)
    var_c = jnp.dot(var_g, agg_t, preferred_element_type=jnp.float32)       # (1, C)
    y = xc * lax.rsqrt(var_c + EPS)
    y = y * gamma + beta
    return _silu(y)


def _conv3x3(y, pad_ref, col_ref, w_ref, b, H, W):
    """3x3 'same' conv of y (HW, Cin) -> (HW, Cout) as ONE bf16 im2col MXU matmul.

    pad_ref : VMEM (H+2, W+2, Cin) bf16 scratch (halo lives only here, never HBM).
    col_ref : VMEM (HW, 9*Cin) bf16 im2col scratch.
    w_ref   : (9*Cin, Cout) bf16 weights, rows ordered (ky, kx, cin).
    b       : (1, Cout) f32 bias.
    """
    cin = y.shape[1]
    # Zero only the halo frame (not the whole buffer); interior is overwritten.
    z_row = jnp.zeros((1, W + 2, cin), pad_ref.dtype)
    pad_ref[0:1, :, :] = z_row
    pad_ref[H + 1:H + 2, :, :] = z_row
    z_col = jnp.zeros((H, 1, cin), pad_ref.dtype)
    pad_ref[1:H + 1, 0:1, :] = z_col
    pad_ref[1:H + 1, W + 1:W + 2, :] = z_col
    # Interior write (cast to bf16 once; halves patch-copy bytes).
    pad_ref[1:H + 1, 1:W + 1, :] = y.reshape(H, W, cin).astype(pad_ref.dtype)
    # im2col: big-K (9*Cin) single matmul on the MXU, f32 accumulation.
    for ky in range(3):
        for kx in range(3):
            t = ky * 3 + kx
            col_ref[:, t * cin:(t + 1) * cin] = (
                pad_ref[ky:ky + H, kx:kx + W, :].reshape(H * W, cin))
    acc = jnp.dot(col_ref[...], w_ref[...], preferred_element_type=jnp.float32)
    return acc + b


# ----------------------------------------------------------------------------- fused kernel
def resblock_kernel(*refs, H, W, project_residual):
    """Whole residual block for one batch element, fully fused in VMEM."""
    if project_residual:
        (x_ref, t_ref, agg_in_ref, aggT_in_ref, g1_ref, b1g_ref, w1_ref, b1_ref,
         agg_out_ref, aggT_out_ref, g2_ref, b2g_ref, w2_ref, b2_ref,
         wres_ref, bres_ref,
         o_ref, pad1_ref, col1_ref, pad2_ref, col2_ref) = refs
    else:
        (x_ref, t_ref, agg_in_ref, aggT_in_ref, g1_ref, b1g_ref, w1_ref, b1_ref,
         agg_out_ref, aggT_out_ref, g2_ref, b2g_ref, w2_ref, b2_ref,
         o_ref, pad1_ref, col1_ref, pad2_ref, col2_ref) = refs
        wres_ref = bres_ref = None

    x = x_ref[0].astype(jnp.float32)                                        # (HW, Cin)

    # ---- GroupNorm(feature) + SiLU (no time bias here) ----
    y = _gn_silu(x, agg_in_ref[...], aggT_in_ref[...], g1_ref[...], b1g_ref[...])

    # ---- conv_feature (3x3, pad 1): bf16 im2col matmul ----
    h = _conv3x3(y, pad1_ref, col1_ref, w1_ref, b1_ref[...], H, W)          # (HW, Cout)

    # ---- + time embedding (f32, broadcast over spatial) ----
    h = h + t_ref[0]

    # ---- GroupNorm(merged) + SiLU ----
    y2 = _gn_silu(h, agg_out_ref[...], aggT_out_ref[...], g2_ref[...], b2g_ref[...])

    # ---- conv_merged (3x3, pad 1) ----
    out = _conv3x3(y2, pad2_ref, col2_ref, w2_ref, b2_ref[...], H, W)

    # ---- residual (identity, or 1x1 projection fused as one extra MXU matmul) ----
    if project_residual:
        res = jnp.dot(x.astype(wres_ref.dtype), wres_ref[...],
                      preferred_element_type=jnp.float32) + bres_ref[...]
    else:
        res = x
    o_ref[0] = (out + res).astype(o_ref.dtype)


# ----------------------------------------------------------------------------- wrapper
def make_group_agg(C, groups):
    cg = C // groups
    c = jnp.arange(C)[:, None]
    g = jnp.arange(groups)[None, :]
    return ((c // cg) == g).astype(jnp.float32)                             # (C, G)


def _vmem_limit_bytes():
    """Per-generation VMEM budget: ~7/8 of the chip's physical VMEM."""
    try:
        cap = pltpu.get_tpu_info().vmem_capacity_bytes
    except Exception:
        cap = 64 * 1024 * 1024          # safe on every generation (v7x = 64 MiB)
    return int(cap * 7 // 8)


def unet_residual_block(x, time, params):
    """Forward of Unet_residualBlock. x: (B, Cin, H, W) NCHW, time: (B, d_time)."""
    B, Cin, H, W = x.shape
    Cout = params['conv_feature_w'].shape[0]
    HW = H * W
    G = NUM_GROUPS

    xh = jnp.transpose(x, (0, 2, 3, 1)).reshape(B, HW, Cin)                 # (B, HW, Cin)

    # time embedding in plain JAX: SiLU(time) @ W.T + b (tiny; not worth a launch).
    # Kept f32 so the in-kernel bias add is not pre-quantized.
    t_emb = (_silu(time.astype(jnp.float32))
             @ params['linear_time_w'].astype(jnp.float32).T
             + params['linear_time_b'].astype(jnp.float32))
    t_emb = t_emb.reshape(B, 1, Cout)

    agg_in = make_group_agg(Cin, G)
    aggT_in = agg_in.T
    agg_out = make_group_agg(Cout, G)
    aggT_out = agg_out.T

    # Conv weights: (Cout, Cin, 3, 3) -> (ky, kx, Cin, Cout) -> (9*Cin, Cout), bf16 for MXU.
    w1 = jnp.transpose(params['conv_feature_w'], (2, 3, 1, 0)).reshape(9 * Cin, Cout)
    w1 = w1.astype(jnp.bfloat16)
    b1 = params['conv_feature_b'].reshape(1, Cout).astype(jnp.float32)
    w2 = jnp.transpose(params['conv_merged_w'], (2, 3, 1, 0)).reshape(9 * Cout, Cout)
    w2 = w2.astype(jnp.bfloat16)
    b2 = params['conv_merged_b'].reshape(1, Cout).astype(jnp.float32)
    g1 = params['gn1_g'].reshape(1, Cin).astype(jnp.float32)
    b1g = params['gn1_b'].reshape(1, Cin).astype(jnp.float32)
    g2 = params['gn2_g'].reshape(1, Cout).astype(jnp.float32)
    b2g = params['gn2_b'].reshape(1, Cout).astype(jnp.float32)

    project_residual = (Cin != Cout)

    inputs = [xh, t_emb, agg_in, aggT_in, g1, b1g, w1, b1,
              agg_out, aggT_out, g2, b2g, w2, b2]
    in_specs = [
        pl.BlockSpec((1, HW, Cin), lambda b: (b, 0, 0)),
        pl.BlockSpec((1, 1, Cout), lambda b: (b, 0, 0)),
        pl.BlockSpec((Cin, G), lambda b: (0, 0)),
        pl.BlockSpec((G, Cin), lambda b: (0, 0)),
        pl.BlockSpec((1, Cin), lambda b: (0, 0)),
        pl.BlockSpec((1, Cin), lambda b: (0, 0)),
        pl.BlockSpec((9 * Cin, Cout), lambda b: (0, 0)),
        pl.BlockSpec((1, Cout), lambda b: (0, 0)),
        pl.BlockSpec((Cout, G), lambda b: (0, 0)),
        pl.BlockSpec((G, Cout), lambda b: (0, 0)),
        pl.BlockSpec((1, Cout), lambda b: (0, 0)),
        pl.BlockSpec((1, Cout), lambda b: (0, 0)),
        pl.BlockSpec((9 * Cout, Cout), lambda b: (0, 0)),
        pl.BlockSpec((1, Cout), lambda b: (0, 0)),
    ]
    if project_residual:
        wres = params['res_w'].reshape(Cout, Cin).T.astype(jnp.bfloat16)    # (Cin, Cout)
        bres = params['res_b'].reshape(1, Cout).astype(jnp.float32)
        inputs += [wres, bres]
        in_specs += [pl.BlockSpec((Cin, Cout), lambda b: (0, 0)),
                     pl.BlockSpec((1, Cout), lambda b: (0, 0))]

    kern = functools.partial(resblock_kernel, H=H, W=W,
                             project_residual=project_residual)

    out_flat = pl.pallas_call(
        kern,
        out_shape=jax.ShapeDtypeStruct((B, HW, Cout), x.dtype),
        grid=(B,),
        in_specs=in_specs,
        out_specs=pl.BlockSpec((1, HW, Cout), lambda b: (b, 0, 0)),
        scratch_shapes=[pltpu.VMEM((H + 2, W + 2, Cin), jnp.bfloat16),
                        pltpu.VMEM((HW, 9 * Cin), jnp.bfloat16),
                        pltpu.VMEM((H + 2, W + 2, Cout), jnp.bfloat16),
                        pltpu.VMEM((HW, 9 * Cout), jnp.bfloat16)],
        compiler_params=pltpu.CompilerParams(
            dimension_semantics=("parallel",),
            vmem_limit_bytes=_vmem_limit_bytes()),
    )(*inputs)

    return jnp.transpose(out_flat.reshape(B, H, W, Cout), (0, 3, 1, 2))     # back to NCHW


# ----------------------------------------------------------------------------- reference
def reference(x, time, params, cin, cout):
    def gn(v, gamma, beta):
        B, C, H, W = v.shape
        vr = v.reshape(B, NUM_GROUPS, -1)
        mean = vr.mean(-1, keepdims=True)
        var = vr.var(-1, keepdims=True)
        vr = (vr - mean) / jnp.sqrt(var + EPS)
        v = vr.reshape(B, C, H, W)
        return v * gamma[None, :, None, None] + beta[None, :, None, None]

    def conv(v, w, b, pad):
        o = lax.conv_general_dilated(v, w, (1, 1), [(pad, pad), (pad, pad)],
                                     dimension_numbers=('NCHW', 'OIHW', 'NCHW'))
        return o + b[None, :, None, None]

    silu = jax.nn.silu
    residue = x if cin == cout else conv(x, params['res_w'], params['res_b'], 0)
    h = silu(gn(x, params['gn1_g'], params['gn1_b']))
    h = conv(h, params['conv_feature_w'], params['conv_feature_b'], 1)
    t = silu(time) @ params['linear_time_w'].T + params['linear_time_b']
    m = h + t[:, :, None, None]
    m = silu(gn(m, params['gn2_g'], params['gn2_b']))
    m = conv(m, params['conv_merged_w'], params['conv_merged_b'], 1)
    return m + residue


# ----------------------------------------------------------------------------- main
def init_params(key, cin, cout, d_time):
    ks = jax.random.split(key, 12)
    n = lambda k, s, sc=0.05: (sc * jax.random.normal(k, s)).astype(jnp.float32)
    bf = lambda w: w.astype(jnp.bfloat16).astype(jnp.float32)   # bf16-representable weights
    params = dict(
        gn1_g=1.0 + n(ks[0], (cin,)),
        gn1_b=n(ks[1], (cin,)),
        conv_feature_w=bf(n(ks[2], (cout, cin, 3, 3))),
        conv_feature_b=n(ks[3], (cout,)),
        linear_time_w=n(ks[4], (cout, d_time)),
        linear_time_b=n(ks[5], (cout,)),
        gn2_g=1.0 + n(ks[6], (cout,)),
        gn2_b=n(ks[7], (cout,)),
        conv_merged_w=bf(n(ks[8], (cout, cout, 3, 3))),
        conv_merged_b=n(ks[9], (cout,)),
    )
    if cin != cout:
        params['res_w'] = bf(n(ks[10], (cout, cin, 1, 1)))
        params['res_b'] = n(ks[11], (cout,))
    return params


if __name__ == "__main__":
    B, Cin, Cout, H, W, D_TIME = 2, 32, 64, 8, 8, 128   # GroupNorm(32) => C % 32 == 0

    key = jax.random.PRNGKey(0)
    kx, kt, kp = jax.random.split(key, 3)
    x = jax.random.normal(kx, (B, Cin, H, W), jnp.float32)
    time = jax.random.normal(kt, (B, D_TIME), jnp.float32)
    params = init_params(kp, Cin, Cout, D_TIME)

    out = unet_residual_block(x, time, params)
    out = jax.block_until_ready(out)

    ref = jax.block_until_ready(reference(x, time, params, Cin, Cout))
    assert out.shape == (B, Cout, H, W), out.shape
    max_err = float(jnp.max(jnp.abs(out - ref)))
    # Kernel feeds the MXU bf16 activations (weights are bf16-representable in
    # both paths), so allow bf16-level activation-rounding error vs f32 ref.
    assert jnp.allclose(out, ref, atol=2e-2, rtol=2e-2), max_err

    print("KERNEL_OK")
</pallas_src>

<mosaic_0001>
module attributes {stable_mosaic.version = 11 : i64} {
  func.func @resblock_kernel(%arg0: i32, %arg1: memref<1x64x32xf32, #tpu.memory_space<vmem>>, %arg2: memref<1x1x64xf32, #tpu.memory_space<vmem>>, %arg3: memref<32x32xf32, #tpu.memory_space<vmem>>, %arg4: memref<32x32xf32, #tpu.memory_space<vmem>>, %arg5: memref<1x32xf32, #tpu.memory_space<vmem>>, %arg6: memref<1x32xf32, #tpu.memory_space<vmem>>, %arg7: memref<288x64xbf16, #tpu.memory_space<vmem>>, %arg8: memref<1x64xf32, #tpu.memory_space<vmem>>, %arg9: memref<64x32xf32, #tpu.memory_space<vmem>>, %arg10: memref<32x64xf32, #tpu.memory_space<vmem>>, %arg11: memref<1x64xf32, #tpu.memory_space<vmem>>, %arg12: memref<1x64xf32, #tpu.memory_space<vmem>>, %arg13: memref<576x64xbf16, #tpu.memory_space<vmem>>, %arg14: memref<1x64xf32, #tpu.memory_space<vmem>>, %arg15: memref<32x64xbf16, #tpu.memory_space<vmem>>, %arg16: memref<1x64xf32, #tpu.memory_space<vmem>>, %arg17: memref<1x64x64xf32, #tpu.memory_space<vmem>>, %arg18: memref<10x10x32xbf16, #tpu.memory_space<vmem>>, %arg19: memref<64x288xbf16, #tpu.memory_space<vmem>>, %arg20: memref<10x10x64xbf16, #tpu.memory_space<vmem>>, %arg21: memref<64x576xbf16, #tpu.memory_space<vmem>>) attributes {dimension_semantics = [#tpu.dimension_semantics<parallel>], iteration_bounds = array<i64: 2>, scalar_prefetch = 0 : i64, scratch_operands = 4 : i64, tpu.core_type = #tpu.core_type<tc>, window_params = [{transform_indices = @transform_0, window_bounds = array<i64: 1, 64, 32>}, {transform_indices = @transform_1, window_bounds = array<i64: 1, 1, 64>}, {pipeline_mode = #tpu.pipeline_mode<synchronous>, transform_indices = @transform_2, window_bounds = array<i64: 32, 32>}, {pipeline_mode = #tpu.pipeline_mode<synchronous>, transform_indices = @transform_3, window_bounds = array<i64: 32, 32>}, {pipeline_mode = #tpu.pipeline_mode<synchronous>, transform_indices = @transform_4, window_bounds = array<i64: 1, 32>}, {pipeline_mode = #tpu.pipeline_mode<synchronous>, transform_indices = @transform_5, window_bounds = array<i64: 1, 32>}, {pipeline_mode = #tpu.pipeline_mode<synchronous>, transform_indices = @transform_6, window_bounds = array<i64: 288, 64>}, {pipeline_mode = #tpu.pipeline_mode<synchronous>, transform_indices = @transform_7, window_bounds = array<i64: 1, 64>}, {pipeline_mode = #tpu.pipeline_mode<synchronous>, transform_indices = @transform_8, window_bounds = array<i64: 64, 32>}, {pipeline_mode = #tpu.pipeline_mode<synchronous>, transform_indices = @transform_9, window_bounds = array<i64: 32, 64>}, {pipeline_mode = #tpu.pipeline_mode<synchronous>, transform_indices = @transform_10, window_bounds = array<i64: 1, 64>}, {pipeline_mode = #tpu.pipeline_mode<synchronous>, transform_indices = @transform_11, window_bounds = array<i64: 1, 64>}, {pipeline_mode = #tpu.pipeline_mode<synchronous>, transform_indices = @transform_12, window_bounds = array<i64: 576, 64>}, {pipeline_mode = #tpu.pipeline_mode<synchronous>, transform_indices = @transform_13, window_bounds = array<i64: 1, 64>}, {pipeline_mode = #tpu.pipeline_mode<synchronous>, transform_indices = @transform_14, window_bounds = array<i64: 32, 64>}, {pipeline_mode = #tpu.pipeline_mode<synchronous>, transform_indices = @transform_15, window_bounds = array<i64: 1, 64>}, {transform_indices = @transform_16, window_bounds = array<i64: 1, 64, 64>}]} {
    %c0 = arith.constant 0 : index
    %c0_0 = arith.constant 0 : index
    %c0_1 = arith.constant 0 : index
    %0 = vector.load %arg1[%c0, %c0_0, %c0_1] : memref<1x64x32xf32, #tpu.memory_space<vmem>>, vector<1x64x32xf32>
    %1 = vector.shape_cast %0 : vector<1x64x32xf32> to vector<64x32xf32>
    %c0_2 = arith.constant 0 : index
    %c0_3 = arith.constant 0 : index
    %2 = vector.load %arg3[%c0_2, %c0_3] : memref<32x32xf32, #tpu.memory_space<vmem>>, vector<32x32xf32>
    %c0_4 = arith.constant 0 : index
    %c0_5 = arith.constant 0 : index
    %3 = vector.load %arg4[%c0_4, %c0_5] : memref<32x32xf32, #tpu.memory_space<vmem>>, vector<32x32xf32>
    %c0_6 = arith.constant 0 : index
    %c0_7 = arith.constant 0 : index
    %4 = vector.load %arg5[%c0_6, %c0_7] : memref<1x32xf32, #tpu.memory_space<vmem>>, vector<1x32xf32>
    %c0_8 = arith.constant 0 : index
    %c0_9 = arith.constant 0 : index
    %5 = vector.load %arg6[%c0_8, %c0_9] : memref<1x32xf32, #tpu.memory_space<vmem>>, vector<1x32xf32>
    %cst = arith.constant dense<0.000000e+00> : vector<32xf32>
    %6 = vector.multi_reduction <add>, %1, %cst [0] : vector<64x32xf32> to vector<32xf32>
    %7 = vector.shape_cast %6 : vector<32xf32> to vector<1x32xf32>
    %cst_10 = arith.constant dense<0.000000e+00> : vector<1x32xf32>
    %8 = tpu.matmul %7, %2, %cst_10 {dimension_numbers = #tpu.dot_dimension_numbers<[1], [0], [0], [1], [0, 0, 1, 1], [], []>} : vector<1x32xf32>, vector<32x32xf32>, vector<1x32xf32> -> vector<1x32xf32>
    %cst_11 = arith.constant 6.400000e+01 : f32
    %9 = vector.broadcast %cst_11 : f32 to vector<1x32xf32>
    %10 = arith.divf %8, %9 : vector<1x32xf32>
    %cst_12 = arith.constant dense<0.000000e+00> : vector<1x32xf32>
    %11 = tpu.matmul %10, %3, %cst_12 {dimension_numbers = #tpu.dot_dimension_numbers<[1], [0], [0], [1], [0, 0, 1, 1], [], []>} : vector<1x32xf32>, vector<32x32xf32>, vector<1x32xf32> -> vector<1x32xf32>
    %12 = vector.broadcast %11 : vector<1x32xf32> to vector<64x32xf32>
    %13 = arith.subf %1, %12 : vector<64x32xf32>
    %14 = arith.mulf %13, %13 : vector<64x32xf32>
    %cst_13 = arith.constant dense<0.000000e+00> : vector<32xf32>
    %15 = vector.multi_reduction <add>, %14, %cst_13 [0] : vector<64x32xf32> to vector<32xf32>
    %16 = vector.shape_cast %15 : vector<32xf32> to vector<1x32xf32>
    %cst_14 = arith.constant dense<0.000000e+00> : vector<1x32xf32>
    %17 = tpu.matmul %16, %2, %cst_14 {dimension_numbers = #tpu.dot_dimension_numbers<[1], [0], [0], [1], [0, 0, 1, 1], [], []>} : vector<1x32xf32>, vector<32x32xf32>, vector<1x32xf32> -> vector<1x32xf32>
    %cst_15 = arith.constant 6.400000e+01 : f32
    %18 = vector.broadcast %cst_15 : f32 to vector<1x32xf32>
    %19 = arith.divf %17, %18 : vector<1x32xf32>
    %cst_16 = arith.constant dense<0.000000e+00> : vector<1x32xf32>
    %20 = tpu.matmul %19, %3, %cst_16 {dimension_numbers = #tpu.dot_dimension_numbers<[1], [0], [0], [1], [0, 0, 1, 1], [], []>} : vector<1x32xf32>, vector<32x32xf32>, vector<1x32xf32> -> vector<1x32xf32>
    %cst_17 = arith.constant 9.99999974E-6 : f32
    %21 = vector.broadcast %cst_17 : f32 to vector<1x32xf32>
    %22 = arith.addf %20, %21 : vector<1x32xf32>
    %23 = math.rsqrt %22 : vector<1x32xf32>
    %24 = vector.broadcast %23 : vector<1x32xf32> to vector<64x32xf32>
    %25 = arith.mulf %13, %24 : vector<64x32xf32>
    %26 = vector.broadcast %4 : vector<1x32xf32> to vector<64x32xf32>
    %27 = arith.mulf %25, %26 : vector<64x32xf32>
    %28 = vector.broadcast %5 : vector<1x32xf32> to vector<64x32xf32>
    %29 = arith.addf %27, %28 : vector<64x32xf32>
    %30 = arith.negf %29 : vector<64x32xf32>
    %31 = math.exp %30 : vector<64x32xf32>
    %cst_18 = arith.constant 1.000000e+00 : f32
    %32 = vector.broadcast %cst_18 : f32 to vector<64x32xf32>
    %33 = arith.addf %32, %31 : vector<64x32xf32>
    %34 = arith.divf %32, %33 : vector<64x32xf32>
    %35 = arith.mulf %29, %34 : vector<64x32xf32>
    %c0_19 = arith.constant 0 : index
    %c0_20 = arith.constant 0 : index
    %36 = vector.load %arg8[%c0_19, %c0_20] : memref<1x64xf32, #tpu.memory_space<vmem>>, vector<1x64xf32>
    %cst_21 = arith.constant 0.000000e+00 : bf16
    %37 = vector.broadcast %cst_21 : bf16 to vector<1x10x32xbf16>
    %c0_22 = arith.constant 0 : index
    %c0_23 = arith.constant 0 : index
    %c0_24 = arith.constant 0 : index
    %38 = vector.load %arg18[%c0_22, %c0_23, %c0_24] : memref<10x10x32xbf16, #tpu.memory_space<vmem>>, vector<1x10x32xbf16>
    tpu.vector_store %arg18[%c0_22, %c0_23, %c0_24], %37 {strides = array<i32>} : memref<10x10x32xbf16, #tpu.memory_space<vmem>>, vector<1x10x32xbf16>,
    %c9 = arith.constant 9 : index
    %c0_25 = arith.constant 0 : index
    %c0_26 = arith.constant 0 : index
    %39 = vector.load %arg18[%c9, %c0_25, %c0_26] : memref<10x10x32xbf16, #tpu.memory_space<vmem>>, vector<1x10x32xbf16>
    tpu.vector_store %arg18[%c9, %c0_25, %c0_26], %37 {strides = array<i32>} : memref<10x10x32xbf16, #tpu.memory_space<vmem>>, vector<1x10x32xbf16>,
    %cst_27 = arith.constant 0.000000e+00 : bf16
    %40 = vector.broadcast %cst_27 : bf16 to vector<8x1x32xbf16>
    %c1 = arith.constant 1 : index
    %c0_28 = arith.constant 0 : index
    %c0_29 = arith.constant 0 : index
    %41 = vector.load %arg18[%c1, %c0_28, %c0_29] : memref<10x10x32xbf16, #tpu.memory_space<vmem>>, vector<8x1x32xbf16>
    tpu.vector_store %arg18[%c1, %c0_28, %c0_29], %40 {strides = array<i32>} : memref<10x10x32xbf16, #tpu.memory_space<vmem>>, vector<8x1x32xbf16>,
    %c1_30 = arith.constant 1 : index
    %c9_31 = arith.constant 9 : index
    %c0_32 = arith.constant 0 : index
    %42 = vector.load %arg18[%c1_30, %c9_31, %c0_32] : memref<10x10x32xbf16, #tpu.memory_space<vmem>>, vector<8x1x32xbf16>
    tpu.vector_store %arg18[%c1_30, %c9_31, %c0_32], %40 {strides = array<i32>} : memref<10x10x32xbf16, #tpu.memory_space<vmem>>, vector<8x1x32xbf16>,
    %43 = vector.shape_cast %35 : vector<64x32xf32> to vector<8x8x32xf32>
    %44 = arith.truncf %43 : vector<8x8x32xf32> to vector<8x8x32xbf16>
    %c1_33 = arith.constant 1 : index
    %c1_34 = arith.constant 1 : index
    %c0_35 = arith.constant 0 : index
    %45 = vector.load %arg18[%c1_33, %c1_34, %c0_35] : memref<10x10x32xbf16, #tpu.memory_space<vmem>>, vector<8x8x32xbf16>
    tpu.vector_store %arg18[%c1_33, %c1_34, %c0_35], %44 {strides = array<i32>} : memref<10x10x32xbf16, #tpu.memory_space<vmem>>, vector<8x8x32xbf16>,
    %c0_36 = arith.constant 0 : index
    %c0_37 = arith.constant 0 : index
    %c0_38 = arith.constant 0 : index
    %46 = vector.load %arg18[%c0_36, %c0_37, %c0_38] : memref<10x10x32xbf16, #tpu.memory_space<vmem>>, vector<8x8x32xbf16>
    %47 = vector.shape_cast %46 : vector<8x8x32xbf16> to vector<64x32xbf16>
    %c0_39 = arith.constant 0 : index
    %c0_40 = arith.constant 0 : index
    %48 = vector.load %arg19[%c0_39, %c0_40] : memref<64x288xbf16, #tpu.memory_space<vmem>>, vector<64x32xbf16>
    tpu.vector_store %arg19[%c0_39, %c0_40], %47 {strides = array<i32>} : memref<64x288xbf16, #tpu.memory_space<vmem>>, vector<64x32xbf16>,
    %c0_41 = arith.constant 0 : index
    %c1_42 = arith.constant 1 : index
    %c0_43 = arith.constant 0 : index
    %49 = vector.load %arg18[%c0_41, %c1_42, %c0_43] : memref<10x10x32xbf16, #tpu.memory_space<vmem>>, vector<8x8x32xbf16>
    %50 = vector.shape_cast %49 : vector<8x8x32xbf16> to vector<64x32xbf16>
    %c0_44 = arith.constant 0 : index
    %c32 = arith.constant 32 : index
    %51 = vector.load %arg19[%c0_44, %c32] : memref<64x288xbf16, #tpu.memory_space<vmem>>, vector<64x32xbf16>
    tpu.vector_store %arg19[%c0_44, %c32], %50 {strides = array<i32>} : memref<64x288xbf16, #tpu.memory_space<vmem>>, vector<64x32xbf16>,
    %c0_45 = arith.constant 0 : index
    %c2 = arith.constant 2 : index
    %c0_46 = arith.constant 0 : index
    %52 = vector.load %arg18[%c0_45, %c2, %c0_46] : memref<10x10x32xbf16, #tpu.memory_space<vmem>>, vector<8x8x32xbf16>
    %53 = vector.shape_cast %52 : vector<8x8x32xbf16> to vector<64x32xbf16>
    %c0_47 = arith.constant 0 : index
    %c64 = arith.constant 64 : index
    %54 = vector.load %arg19[%c0_47, %c64] : memref<64x288xbf16, #tpu.memory_space<vmem>>, vector<64x32xbf16>
    tpu.vector_store %arg19[%c0_47, %c64], %53 {strides = array<i32>} : memref<64x288xbf16, #tpu.memory_space<vmem>>, vector<64x32xbf16>,
    %c1_48 = arith.constant 1 : index
    %c0_49 = arith.constant 0 : index
    %c0_50 = arith.constant 0 : index
    %55 = vector.load %arg18[%c1_48, %c0_49, %c0_50] : memref<10x10x32xbf16, #tpu.memory_space<vmem>>, vector<8x8x32xbf16>
    %56 = vector.shape_cast %55 : vector<8x8x32xbf16> to vector<64x32xbf16>
    %c0_51 = arith.constant 0 : index
    %c96 = arith.constant 96 : index
    %57 = vector.load %arg19[%c0_51, %c96] : memref<64x288xbf16, #tpu.memory_space<vmem>>, vector<64x32xbf16>
    tpu.vector_store %arg19[%c0_51, %c96], %56 {strides = array<i32>} : memref<64x288xbf16, #tpu.memory_space<vmem>>, vector<64x32xbf16>,
    %c1_52 = arith.constant 1 : index
    %c1_53 = arith.constant 1 : index
    %c0_54 = arith.constant 0 : index
    %58 = vector.load %arg18[%c1_52, %c1_53, %c0_54] : memref<10x10x32xbf16, #tpu.memory_space<vmem>>, vector<8x8x32xbf16>
    %59 = vector.shape_cast %58 : vector<8x8x32xbf16> to vector<64x32xbf16>
    %c0_55 = arith.constant 0 : index
    %c128 = arith.constant 128 : index
    %60 = vector.load %arg19[%c0_55, %c128] : memref<64x288xbf16, #tpu.memory_space<vmem>>, vector<64x32xbf16>
    tpu.vector_store %arg19[%c0_55, %c128], %59 {strides = array<i32>} : memref<64x288xbf16, #tpu.memory_space<vmem>>, vector<64x32xbf16>,
    %c1_56 = arith.constant 1 : index
    %c2_57 = arith.constant 2 : index
    %c0_58 = arith.constant 0 : index
    %61 = vector.load %arg18[%c1_56, %c2_57, %c0_58] : memref<10x10x32xbf16, #tpu.memory_space<vmem>>, vector<8x8x32xbf16>
    %62 = vector.shape_cast %61 : vector<8x8x32xbf16> to vector<64x32xbf16>
    %c0_59 = arith.constant 0 : index
    %c160 = arith.constant 160 : index
    %63 = vector.load %arg19[%c0_59, %c160] : memref<64x288xbf16, #tpu.memory_space<vmem>>, vector<64x32xbf16>
    tpu.vector_store %arg19[%c0_59, %c160], %62 {strides = array<i32>} : memref<64x288xbf16, #tpu.memory_space<vmem>>, vector<64x32xbf16>,
    %c2_60 = arith.constant 2 : index
    %c0_61 = arith.constant 0 : index
    %c0_62 = arith.constant 0 : index
    %64 = vector.load %arg18[%c2_60, %c0_61, %c0_62] : memref<10x10x32xbf16, #tpu.memory_space<vmem>>, vector<8x8x32xbf16>
    %65 = vector.shape_cast %64 : vector<8x8x32xbf16> to vector<64x32xbf16>
    %c0_63 = arith.constant 0 : index
    %c192 = arith.constant 192 : index
    %66 = vector.load %arg19[%c0_63, %c192] : memref<64x288xbf16, #tpu.memory_space<vmem>>, vector<64x32xbf16>
    tpu.vector_store %arg19[%c0_63, %c192], %65 {strides = array<i32>} : memref<64x288xbf16, #tpu.memory_space<vmem>>, vector<64x32xbf16>,
    %c2_64 = arith.constant 2 : index
    %c1_65 = arith.constant 1 : index
    %c0_66 = arith.constant 0 : index
    %67 = vector.load %arg18[%c2_64, %c1_65, %c0_66] : memref<10x10x32xbf16, #tpu.memory_space<vmem>>, vector<8x8x32xbf16>
    %68 = vector.shape_cast %67 : vector<8x8x32xbf16> to vector<64x32xbf16>
    %c0_67 = arith.constant 0 : index
    %c224 = arith.constant 224 : index
    %69 = vector.load %arg19[%c0_67, %c224] : memref<64x288xbf16, #tpu.memory_space<vmem>>, vector<64x32xbf16>
    tpu.vector_store %arg19[%c0_67, %c224], %68 {strides = array<i32>} : memref<64x288xbf16, #tpu.memory_space<vmem>>, vector<64x32xbf16>,
    %c2_68 = arith.constant 2 : index
    %c2_69 = arith.constant 2 : index
    %c0_70 = arith.constant 0 : index
    %70 = vector.load %arg18[%c2_68, %c2_69, %c0_70] : memref<10x10x32xbf16, #tpu.memory_space<vmem>>, vector<8x8x32xbf16>
    %71 = vector.shape_cast %70 : vector<8x8x32xbf16> to vector<64x32xbf16>
    %c0_71 = arith.constant 0 : index
    %c256 = arith.constant 256 : index
    %72 = vector.load %arg19[%c0_71, %c256] : memref<64x288xbf16, #tpu.memory_space<vmem>>, vector<64x32xbf16>
    tpu.vector_store %arg19[%c0_71, %c256], %71 {strides = array<i32>} : memref<64x288xbf16, #tpu.memory_space<vmem>>, vector<64x32xbf16>,
    %c0_72 = arith.constant 0 : index
    %c0_73 = arith.constant 0 : index
    %73 = vector.load %arg19[%c0_72, %c0_73] : memref<64x288xbf16, #tpu.memory_space<vmem>>, vector<64x288xbf16>
    %c0_74 = arith.constant 0 : index
    %c0_75 = arith.constant 0 : index
    %74 = vector.load %arg7[%c0_74, %c0_75] : memref<288x64xbf16, #tpu.memory_space<vmem>>, vector<288x64xbf16>
    %cst_76 = arith.constant dense<0.000000e+00> : vector<64x64xf32>
    %75 = tpu.matmul %73, %74, %cst_76 {dimension_numbers = #tpu.dot_dimension_numbers<[1], [0], [0], [1], [0, 0, 1, 1], [], []>} : vector<64x288xbf16>, vector<288x64xbf16>, vector<64x64xf32> -> vector<64x64xf32>
    %76 = vector.broadcast %36 : vector<1x64xf32> to vector<64x64xf32>
    %77 = arith.addf %75, %76 : vector<64x64xf32>
    %c0_77 = arith.constant 0 : index
    %c0_78 = arith.constant 0 : index
    %c0_79 = arith.constant 0 : index
    %78 = vector.load %arg2[%c0_77, %c0_78, %c0_79] : memref<1x1x64xf32, #tpu.memory_space<vmem>>, vector<1x1x64xf32>
    %79 = vector.shape_cast %78 : vector<1x1x64xf32> to vector<1x64xf32>
    %80 = vector.broadcast %79 : vector<1x64xf32> to vector<64x64xf32>
    %81 = arith.addf %77, %80 : vector<64x64xf32>
    %c0_80 = arith.constant 0 : index
    %c0_81 = arith.constant 0 : index
    %82 = vector.load %arg9[%c0_80, %c0_81] : memref<64x32xf32, #tpu.memory_space<vmem>>, vector<64x32xf32>
    %c0_82 = arith.constant 0 : index
    %c0_83 = arith.constant 0 : index
    %83 = vector.load %arg10[%c0_82, %c0_83] : memref<32x64xf32, #tpu.memory_space<vmem>>, vector<32x64xf32>
    %c0_84 = arith.constant 0 : index
    %c0_85 = arith.constant 0 : index
    %84 = vector.load %arg11[%c0_84, %c0_85] : memref<1x64xf32, #tpu.memory_space<vmem>>, vector<1x64xf32>
    %c0_86 = arith.constant 0 : index
    %c0_87 = arith.constant 0 : index
    %85 = vector.load %arg12[%c0_86, %c0_87] : memref<1x64xf32, #tpu.memory_space<vmem>>, vector<1x64xf32>
    %cst_88 = arith.constant dense<0.000000e+00> : vector<64xf32>
    %86 = vector.multi_reduction <add>, %81, %cst_88 [0] : vector<64x64xf32> to vector<64xf32>
    %87 = vector.shape_cast %86 : vector<64xf32> to vector<1x64xf32>
    %cst_89 = arith.constant dense<0.000000e+00> : vector<1x32xf32>
    %88 = tpu.matmul %87, %82, %cst_89 {dimension_numbers = #tpu.dot_dimension_numbers<[1], [0], [0], [1], [0, 0, 1, 1], [], []>} : vector<1x64xf32>, vector<64x32xf32>, vector<1x32xf32> -> vector<1x32xf32>
    %cst_90 = arith.constant 1.280000e+02 : f32
    %89 = vector.broadcast %cst_90 : f32 to vector<1x32xf32>
    %90 = arith.divf %88, %89 : vector<1x32xf32>
    %cst_91 = arith.constant dense<0.000000e+00> : vector<1x64xf32>
    %91 = tpu.matmul %90, %83, %cst_91 {dimension_numbers = #tpu.dot_dimension_numbers<[1], [0], [0], [1], [0, 0, 1, 1], [], []>} : vector<1x32xf32>, vector<32x64xf32>, vector<1x64xf32> -> vector<1x64xf32>
    %92 = vector.broadcast %91 : vector<1x64xf32> to vector<64x64xf32>
    %93 = arith.subf %81, %92 : vector<64x64xf32>
    %94 = arith.mulf %93, %93 : vector<64x64xf32>
    %cst_92 = arith.constant dense<0.000000e+00> : vector<64xf32>
    %95 = vector.multi_reduction <add>, %94, %cst_92 [0] : vector<64x64xf32> to vector<64xf32>
    %96 = vector.shape_cast %95 : vector<64xf32> to vector<1x64xf32>
    %cst_93 = arith.constant dense<0.000000e+00> : vector<1x32xf32>
    %97 = tpu.matmul %96, %82, %cst_93 {dimension_numbers = #tpu.dot_dimension_numbers<[1], [0], [0], [1], [0, 0, 1, 1], [], []>} : vector<1x64xf32>, vector<64x32xf32>, vector<1x32xf32> -> vector<1x32xf32>
    %cst_94 = arith.constant 1.280000e+02 : f32
    %98 = vector.broadcast %cst_94 : f32 to vector<1x32xf32>
    %99 = arith.divf %97, %98 : vector<1x32xf32>
    %cst_95 = arith.constant dense<0.000000e+00> : vector<1x64xf32>
    %100 = tpu.matmul %99, %83, %cst_95 {dimension_numbers = #tpu.dot_dimension_numbers<[1], [0], [0], [1], [0, 0, 1, 1], [], []>} : vector<1x32xf32>, vector<32x64xf32>, vector<1x64xf32> -> vector<1x64xf32>
    %cst_96 = arith.constant 9.99999974E-6 : f32
    %101 = vector.broadcast %cst_96 : f32 to vector<1x64xf32>
    %102 = arith.addf %100, %101 : vector<1x64xf32>
    %103 = math.rsqrt %102 : vector<1x64xf32>
    %104 = vector.broadcast %103 : vector<1x64xf32> to vector<64x64xf32>
    %105 = arith.mulf %93, %104 : vector<64x64xf32>
    %106 = vector.broadcast %84 : vector<1x64xf32> to vector<64x64xf32>
    %107 = arith.mulf %105, %106 : vector<64x64xf32>
    %108 = vector.broadcast %85 : vector<1x64xf32> to vector<64x64xf32>
    %109 = arith.addf %107, %108 : vector<64x64xf32>
    %110 = arith.negf %109 : vector<64x64xf32>
    %111 = math.exp %110 : vector<64x64xf32>
    %cst_97 = arith.constant 1.000000e+00 : f32
    %112 = vector.broadcast %cst_97 : f32 to vector<64x64xf32>
    %113 = arith.addf %112, %111 : vector<64x64xf32>
    %114 = arith.divf %112, %113 : vector<64x64xf32>
    %115 = arith.mulf %109, %114 : vector<64x64xf32>
    %c0_98 = arith.constant 0 : index
    %c0_99 = arith.constant 0 : index
    %116 = vector.load %arg14[%c0_98, %c0_99] : memref<1x64xf32, #tpu.memory_space<vmem>>, vector<1x64xf32>
    %cst_100 = arith.constant 0.000000e+00 : bf16
    %117 = vector.broadcast %cst_100 : bf16 to vector<1x10x64xbf16>
    %c0_101 = arith.constant 0 : index
    %c0_102 = arith.constant 0 : index
    %c0_103 = arith.constant 0 : index
    %118 = vector.load %arg20[%c0_101, %c0_102, %c0_103] : memref<10x10x64xbf16, #tpu.memory_space<vmem>>, vector<1x10x64xbf16>
    tpu.vector_store %arg20[%c0_101, %c0_102, %c0_103], %117 {strides = array<i32>} : memref<10x10x64xbf16, #tpu.memory_space<vmem>>, vector<1x10x64xbf16>,
    %c9_104 = arith.constant 9 : index
    %c0_105 = arith.constant 0 : index
    %c0_106 = arith.constant 0 : index
    %119 = vector.load %arg20[%c9_104, %c0_105, %c0_106] : memref<10x10x64xbf16, #tpu.memory_space<vmem>>, vector<1x10x64xbf16>
    tpu.vector_store %arg20[%c9_104, %c0_105, %c0_106], %117 {strides = array<i32>} : memref<10x10x64xbf16, #tpu.memory_space<vmem>>, vector<1x10x64xbf16>,
    %cst_107 = arith.constant 0.000000e+00 : bf16
    %120 = vector.broadcast %cst_107 : bf16 to vector<8x1x64xbf16>
    %c1_108 = arith.constant 1 : index
    %c0_109 = arith.constant 0 : index
    %c0_110 = arith.constant 0 : index
    %121 = vector.load %arg20[%c1_108, %c0_109, %c0_110] : memref<10x10x64xbf16, #tpu.memory_space<vmem>>, vector<8x1x64xbf16>
    tpu.vector_store %arg20[%c1_108, %c0_109, %c0_110], %120 {strides = array<i32>} : memref<10x10x64xbf16, #tpu.memory_space<vmem>>, vector<8x1x64xbf16>,
    %c1_111 = arith.constant 1 : index
    %c9_112 = arith.constant 9 : index
    %c0_113 = arith.constant 0 : index
    %122 = vector.load %arg20[%c1_111, %c9_112, %c0_113] : memref<10x10x64xbf16, #tpu.memory_space<vmem>>, vector<8x1x64xbf16>
    tpu.vector_store %arg20[%c1_111, %c9_112, %c0_113], %120 {strides = array<i32>} : memref<10x10x64xbf16, #tpu.memory_space<vmem>>, vector<8x1x64xbf16>,
    %123 = vector.shape_cast %115 : vector<64x64xf32> to vector<8x8x64xf32>
    %124 = arith.truncf %123 : vector<8x8x64xf32> to vector<8x8x64xbf16>
    %c1_114 = arith.constant 1 : index
    %c1_115 = arith.constant 1 : index
    %c0_116 = arith.constant 0 : index
    %125 = vector.load %arg20[%c1_114, %c1_115, %c0_116] : memref<10x10x64xbf16, #tpu.memory_space<vmem>>, vector<8x8x64xbf16>
    tpu.vector_store %arg20[%c1_114, %c1_115, %c0_116], %124 {strides = array<i32>} : memref<10x10x64xbf16, #tpu.memory_space<vmem>>, vector<8x8x64xbf16>,
    %c0_117 = arith.constant 0 : index
    %c0_118 = arith.constant 0 : index
    %c0_119 = arith.constant 0 : index
    %126 = vector.load %arg20[%c0_117, %c0_118, %c0_119] : memref<10x10x64xbf16, #tpu.memory_space<vmem>>, vector<8x8x64xbf16>
    %127 = vector.shape_cast %126 : vector<8x8x64xbf16> to vector<64x64xbf16>
    %c0_120 = arith.constant 0 : index
    %c0_121 = arith.constant 0 : index
    %128 = vector.load %arg21[%c0_120, %c0_121] : memref<64x576xbf16, #tpu.memory_space<vmem>>, vector<64x64xbf16>
    tpu.vector_store %arg21[%c0_120, %c0_121], %127 {strides = array<i32>} : memref<64x576xbf16, #tpu.memory_space<vmem>>, vector<64x64xbf16>,
    %c0_122 = arith.constant 0 : index
    %c1_123 = arith.constant 1 : index
    %c0_124 = arith.constant 0 : index
    %129 = vector.load %arg20[%c0_122, %c1_123, %c0_124] : memref<10x10x64xbf16, #tpu.memory_space<vmem>>, vector<8x8x64xbf16>
    %130 = vector.shape_cast %129 : vector<8x8x64xbf16> to vector<64x64xbf16>
    %c0_125 = arith.constant 0 : index
    %c64_126 = arith.constant 64 : index
    %131 = vector.load %arg21[%c0_125, %c64_126] : memref<64x576xbf16, #tpu.memory_space<vmem>>, vector<64x64xbf16>
    tpu.vector_store %arg21[%c0_125, %c64_126], %130 {strides = array<i32>} : memref<64x576xbf16, #tpu.memory_space<vmem>>, vector<64x64xbf16>,
    %c0_127 = arith.constant 0 : index
    %c2_128 = arith.constant 2 : index
    %c0_129 = arith.constant 0 : index
    %132 = vector.load %arg20[%c0_127, %c2_128, %c0_129] : memref<10x10x64xbf16, #tpu.memory_space<vmem>>, vector<8x8x64xbf16>
    %133 = vector.shape_cast %132 : vector<8x8x64xbf16> to vector<64x64xbf16>
    %c0_130 = arith.constant 0 : index
    %c128_131 = arith.constant 128 : index
    %134 = vector.load %arg21[%c0_130, %c128_131] : memref<64x576xbf16, #tpu.memory_space<vmem>>, vector<64x64xbf16>
    tpu.vector_store %arg21[%c0_130, %c128_131], %133 {strides = array<i32>} : memref<64x576xbf16, #tpu.memory_space<vmem>>, vector<64x64xbf16>,
    %c1_132 = arith.constant 1 : index
    %c0_133 = arith.constant 0 : index
    %c0_134 = arith.constant 0 : index
    %135 = vector.load %arg20[%c1_132, %c0_133, %c0_134] : memref<10x10x64xbf16, #tpu.memory_space<vmem>>, vector<8x8x64xbf16>
    %136 = vector.shape_cast %135 : vector<8x8x64xbf16> to vector<64x64xbf16>
    %c0_135 = arith.constant 0 : index
    %c192_136 = arith.constant 192 : index
    %137 = vector.load %arg21[%c0_135, %c192_136] : memref<64x576xbf16, #tpu.memory_space<vmem>>, vector<64x64xbf16>
    tpu.vector_store %arg21[%c0_135, %c192_136], %136 {strides = array<i32>} : memref<64x576xbf16, #tpu.memory_space<vmem>>, vector<64x64xbf16>,
    %c1_137 = arith.constant 1 : index
    %c1_138 = arith.constant 1 : index
    %c0_139 = arith.constant 0 : index
    %138 = vector.load %arg20[%c1_137, %c1_138, %c0_139] : memref<10x10x64xbf16, #tpu.memory_space<vmem>>, vector<8x8x64xbf16>
    %139 = vector.shape_cast %138 : vector<8x8x64xbf16> to vector<64x64xbf16>
    %c0_140 = arith.constant 0 : index
    %c256_141 = arith.constant 256 : index
    %140 = vector.load %arg21[%c0_140, %c256_141] : memref<64x576xbf16, #tpu.memory_space<vmem>>, vector<64x64xbf16>
    tpu.vector_store %arg21[%c0_140, %c256_141], %139 {strides = array<i32>} : memref<64x576xbf16, #tpu.memory_space<vmem>>, vector<64x64xbf16>,
    %c1_142 = arith.constant 1 : index
    %c2_143 = arith.constant 2 : index
    %c0_144 = arith.constant 0 : index
    %141 = vector.load %arg20[%c1_142, %c2_143, %c0_144] : memref<10x10x64xbf16, #tpu.memory_space<vmem>>, vector<8x8x64xbf16>
    %142 = vector.shape_cast %141 : vector<8x8x64xbf16> to vector<64x64xbf16>
    %c0_145 = arith.constant 0 : index
    %c320 = arith.constant 320 : index
    %143 = vector.load %arg21[%c0_145, %c320] : memref<64x576xbf16, #tpu.memory_space<vmem>>, vector<64x64xbf16>
    tpu.vector_store %arg21[%c0_145, %c320], %142 {strides = array<i32>} : memref<64x576xbf16, #tpu.memory_space<vmem>>, vector<64x64xbf16>,
    %c2_146 = arith.constant 2 : index
    %c0_147 = arith.constant 0 : index
    %c0_148 = arith.constant 0 : index
    %144 = vector.load %arg20[%c2_146, %c0_147, %c0_148] : memref<10x10x64xbf16, #tpu.memory_space<vmem>>, vector<8x8x64xbf16>
    %145 = vector.shape_cast %144 : vector<8x8x64xbf16> to vector<64x64xbf16>
    %c0_149 = arith.constant 0 : index
    %c384 = arith.constant 384 : index
    %146 = vector.load %arg21[%c0_149, %c384] : memref<64x576xbf16, #tpu.memory_space<vmem>>, vector<64x64xbf16>
    tpu.vector_store %arg21[%c0_149, %c384], %145 {strides = array<i32>} : memref<64x576xbf16, #tpu.memory_space<vmem>>, vector<64x64xbf16>,
    %c2_150 = arith.constant 2 : index
    %c1_151 = arith.constant 1 : index
    %c0_152 = arith.constant 0 : index
    %147 = vector.load %arg20[%c2_150, %c1_151, %c0_152] : memref<10x10x64xbf16, #tpu.memory_space<vmem>>, vector<8x8x64xbf16>
    %148 = vector.shape_cast %147 : vector<8x8x64xbf16> to vector<64x64xbf16>
    %c0_153 = arith.constant 0 : index
    %c448 = arith.constant 448 : index
    %149 = vector.load %arg21[%c0_153, %c448] : memref<64x576xbf16, #tpu.memory_space<vmem>>, vector<64x64xbf16>
    tpu.vector_store %arg21[%c0_153, %c448], %148 {strides = array<i32>} : memref<64x576xbf16, #tpu.memory_space<vmem>>, vector<64x64xbf16>,
    %c2_154 = arith.constant 2 : index
    %c2_155 = arith.constant 2 : index
    %c0_156 = arith.constant 0 : index
    %150 = vector.load %arg20[%c2_154, %c2_155, %c0_156] : memref<10x10x64xbf16, #tpu.memory_space<vmem>>, vector<8x8x64xbf16>
    %151 = vector.shape_cast %150 : vector<8x8x64xbf16> to vector<64x64xbf16>
    %c0_157 = arith.constant 0 : index
    %c512 = arith.constant 512 : index
    %152 = vector.load %arg21[%c0_157, %c512] : memref<64x576xbf16, #tpu.memory_space<vmem>>, vector<64x64xbf16>
    tpu.vector_store %arg21[%c0_157, %c512], %151 {strides = array<i32>} : memref<64x576xbf16, #tpu.memory_space<vmem>>, vector<64x64xbf16>,
    %c0_158 = arith.constant 0 : index
    %c0_159 = arith.constant 0 : index
    %153 = vector.load %arg21[%c0_158, %c0_159] : memref<64x576xbf16, #tpu.memory_space<vmem>>, vector<64x576xbf16>
    %c0_160 = arith.constant 0 : index
    %c0_161 = arith.constant 0 : index
    %154 = vector.load %arg13[%c0_160, %c0_161] : memref<576x64xbf16, #tpu.memory_space<vmem>>, vector<576x64xbf16>
    %cst_162 = arith.constant dense<0.000000e+00> : vector<64x64xf32>
    %155 = tpu.matmul %153, %154, %cst_162 {dimension_numbers = #tpu.dot_dimension_numbers<[1], [0], [0], [1], [0, 0, 1, 1], [], []>} : vector<64x576xbf16>, vector<576x64xbf16>, vector<64x64xf32> -> vector<64x64xf32>
    %156 = vector.broadcast %116 : vector<1x64xf32> to vector<64x64xf32>
    %157 = arith.addf %155, %156 : vector<64x64xf32>
    %158 = arith.truncf %1 : vector<64x32xf32> to vector<64x32xbf16>
    %c0_163 = arith.constant 0 : index
    %c0_164 = arith.constant 0 : index
    %159 = vector.load %arg15[%c0_163, %c0_164] : memref<32x64xbf16, #tpu.memory_space<vmem>>, vector<32x64xbf16>
    %cst_165 = arith.constant dense<0.000000e+00> : vector<64x64xf32>
    %160 = tpu.matmul %158, %159, %cst_165 {dimension_numbers = #tpu.dot_dimension_numbers<[1], [0], [0], [1], [0, 0, 1, 1], [], []>} : vector<64x32xbf16>, vector<32x64xbf16>, vector<64x64xf32> -> vector<64x64xf32>
    %c0_166 = arith.constant 0 : index
    %c0_167 = arith.constant 0 : index
    %161 = vector.load %arg16[%c0_166, %c0_167] : memref<1x64xf32, #tpu.memory_space<vmem>>, vector<1x64xf32>
    %162 = vector.broadcast %161 : vector<1x64xf32> to vector<64x64xf32>
    %163 = arith.addf %160, %162 : vector<64x64xf32>
    %164 = arith.addf %157, %163 : vector<64x64xf32>
    %c0_168 = arith.constant 0 : index
    %c0_169 = arith.constant 0 : index
    %c0_170 = arith.constant 0 : index
    %165 = vector.load %arg17[%c0_168, %c0_169, %c0_170] : memref<1x64x64xf32, #tpu.memory_space<vmem>>, vector<1x64x64xf32>
    %166 = vector.shape_cast %165 : vector<1x64x64xf32> to vector<64x64xf32>
    %167 = vector.shape_cast %164 : vector<64x64xf32> to vector<1x64x64xf32>
    tpu.vector_store %arg17[%c0_168, %c0_169, %c0_170], %167 {strides = array<i32>} : memref<1x64x64xf32, #tpu.memory_space<vmem>>, vector<1x64x64xf32>,
    return
  }
  func.func @transform_0(%arg0: i32) -> (i32, i32, i32) {
    %c0_i32 = arith.constant 0 : i32
    %c0_i32_0 = arith.constant 0 : i32
    %c0_i32_1 = arith.constant 0 : i32
    return %arg0, %c0_i32, %c0_i32_0 : i32, i32, i32
  }
  func.func @transform_1(%arg0: i32) -> (i32, i32, i32) {
    %c0_i32 = arith.constant 0 : i32
    %c0_i32_0 = arith.constant 0 : i32
    %c0_i32_1 = arith.constant 0 : i32
    return %arg0, %c0_i32, %c0_i32_0 : i32, i32, i32
  }
  func.func @transform_2(%arg0: i32) -> (i32, i32) {
    %c0_i32 = arith.constant 0 : i32
    %c0_i32_0 = arith.constant 0 : i32
    %c0_i32_1 = arith.constant 0 : i32
    return %c0_i32, %c0_i32_0 : i32, i32
  }
  func.func @transform_3(%arg0: i32) -> (i32, i32) {
    %c0_i32 = arith.constant 0 : i32
    %c0_i32_0 = arith.constant 0 : i32
    %c0_i32_1 = arith.constant 0 : i32
    return %c0_i32, %c0_i32_0 : i32, i32
  }
  func.func @transform_4(%arg0: i32) -> (i32, i32) {
    %c0_i32 = arith.constant 0 : i32
    %c0_i32_0 = arith.constant 0 : i32
    %c0_i32_1 = arith.constant 0 : i32
    return %c0_i32, %c0_i32_0 : i32, i32
  }
  func.func @transform_5(%arg0: i32) -> (i32, i32) {
    %c0_i32 = arith.constant 0 : i32
    %c0_i32_0 = arith.constant 0 : i32
    %c0_i32_1 = arith.constant 0 : i32
    return %c0_i32, %c0_i32_0 : i32, i32
  }
  func.func @transform_6(%arg0: i32) -> (i32, i32) {
    %c0_i32 = arith.constant 0 : i32
    %c0_i32_0 = arith.constant 0 : i32
    %c0_i32_1 = arith.constant 0 : i32
    return %c0_i32, %c0_i32_0 : i32, i32
  }
  func.func @transform_7(%arg0: i32) -> (i32, i32) {
    %c0_i32 = arith.constant 0 : i32
    %c0_i32_0 = arith.constant 0 : i32
    %c0_i32_1 = arith.constant 0 : i32
    return %c0_i32, %c0_i32_0 : i32, i32
  }
  func.func @transform_8(%arg0: i32) -> (i32, i32) {
    %c0_i32 = arith.constant 0 : i32
    %c0_i32_0 = arith.constant 0 : i32
    %c0_i32_1 = arith.constant 0 : i32
    return %c0_i32, %c0_i32_0 : i32, i32
  }
  func.func @transform_9(%arg0: i32) -> (i32, i32) {
    %c0_i32 = arith.constant 0 : i32
    %c0_i32_0 = arith.constant 0 : i32
    %c0_i32_1 = arith.constant 0 : i32
    return %c0_i32, %c0_i32_0 : i32, i32
  }
  func.func @transform_10(%arg0: i32) -> (i32, i32) {
    %c0_i32 = arith.constant 0 : i32
    %c0_i32_0 = arith.constant 0 : i32
    %c0_i32_1 = arith.constant 0 : i32
    return %c0_i32, %c0_i32_0 : i32, i32
  }
  func.func @transform_11(%arg0: i32) -> (i32, i32) {
    %c0_i32 = arith.constant 0 : i32
    %c0_i32_0 = arith.constant 0 : i32
    %c0_i32_1 = arith.constant 0 : i32
    return %c0_i32, %c0_i32_0 : i32, i32
  }
  func.func @transform_12(%arg0: i32) -> (i32, i32) {
    %c0_i32 = arith.constant 0 : i32
    %c0_i32_0 = arith.constant 0 : i32
    %c0_i32_1 = arith.constant 0 : i32
    return %c0_i32, %c0_i32_0 : i32, i32
  }
  func.func @transform_13(%arg0: i32) -> (i32, i32) {
    %c0_i32 = arith.constant 0 : i32
    %c0_i32_0 = arith.constant 0 : i32
    %c0_i32_1 = arith.constant 0 : i32
    return %c0_i32, %c0_i32_0 : i32, i32
  }
  func.func @transform_14(%arg0: i32) -> (i32, i32) {
    %c0_i32 = arith.constant 0 : i32
    %c0_i32_0 = arith.constant 0 : i32
    %c0_i32_1 = arith.constant 0 : i32
    return %c0_i32, %c0_i32_0 : i32, i32
  }
  func.func @transform_15(%arg0: i32) -> (i32, i32) {
    %c0_i32 = arith.constant 0 : i32
    %c0_i32_0 = arith.constant 0 : i32
    %c0_i32_1 = arith.constant 0 : i32
    return %c0_i32, %c0_i32_0 : i32, i32
  }
  func.func @transform_16(%arg0: i32) -> (i32, i32, i32) {
    %c0_i32 = arith.constant 0 : i32
    %c0_i32_0 = arith.constant 0 : i32
    %c0_i32_1 = arith.constant 0 : i32
    return %arg0, %c0_i32, %c0_i32_0 : i32, i32, i32
  }
}

</mosaic_0001>

<llo_original>
// kernel: tpu_custom_call.1
$region0: #{tpu_custom_call.1}
  #allocation0 [shape = 'u32[]', space=smem, size = 0x4, offset = 0x4, fixed_abs, tag = 'smem constant byte address 0x4 - core index']
  #allocation1 [shape = 'u32[72,128]{1,0:T(1,128)}', space=vmem, size = 0x9000, scoped, tag = 'internal scratch']
  #allocation2 [shape = 'bf16[10,10,32]{2,1,0:T(8,128)(2,1)}', space=vmem, size = 0xa000, scoped, tag = 'scratch operand']
  #allocation3 [shape = 'bf16[64,288]{1,0:T(8,128)(2,1)}', space=vmem, size = 0xc000, scoped, tag = 'scratch operand']
  #allocation4 [shape = 'bf16[10,10,64]{2,1,0:T(8,128)(2,1)}', space=vmem, size = 0xa000, scoped, tag = 'scratch operand']
  #allocation5 [shape = 'bf16[64,576]{1,0:T(8,128)(2,1)}', space=vmem, size = 0x14000, scoped, tag = 'scratch operand']
  %s0 = inlined_call_operand.vmem [shape: f32[2,64,32], index: 0, kind: input, shape index: {}]
  %s1 = inlined_call_operand.vmem [shape: f32[2,1,64], index: 1, kind: input, shape index: {}]
  %s2 = inlined_call_operand.vmem [shape: f32[32,32], index: 2, kind: input, shape index: {}]
  %s3 = inlined_call_operand.vmem [shape: f32[32,32], index: 3, kind: input, shape index: {}]
  %s4 = inlined_call_operand.vmem [shape: f32[1,32], index: 4, kind: input, shape index: {}]
  %s5 = inlined_call_operand.vmem [shape: f32[1,32], index: 5, kind: input, shape index: {}]
  %s6 = inlined_call_operand.vmem [shape: bf16[288,64], index: 6, kind: input, shape index: {}]
  %s7 = inlined_call_operand.vmem [shape: f32[1,64], index: 7, kind: input, shape index: {}]
  %s8 = inlined_call_operand.vmem [shape: f32[64,32], index: 8, kind: input, shape index: {}]
  %s9 = inlined_call_operand.vmem [shape: f32[32,64], index: 9, kind: input, shape index: {}]
  %s10 = inlined_call_operand.vmem [shape: f32[1,64], index: 10, kind: input, shape index: {}]
  %s11 = inlined_call_operand.vmem [shape: f32[1,64], index: 11, kind: input, shape index: {}]
  %s12 = inlined_call_operand.vmem [shape: bf16[576,64], index: 12, kind: input, shape index: {}]
  %s13 = inlined_call_operand.vmem [shape: f32[1,64], index: 13, kind: input, shape index: {}]
  %s14 = inlined_call_operand.vmem [shape: bf16[32,64], index: 14, kind: input, shape index: {}]
  %s15 = inlined_call_operand.vmem [shape: f32[1,64], index: 15, kind: input, shape index: {}]
  %s16 = inlined_call_operand.hbm [shape: f32[2,64,64], index: 16, kind: output, shape index: {}]
  %s17 = sld [smem:[#allocation0]]
  $region97: #{tpu_custom_call.1} parent=0
    _
  %s19 = ssub.s32 1, %s17
  %s20 = scalar_select 0, %s19, %s17
  $region1: #{tpu_custom_call.1} parent=0
    #allocation6 [shape = 'u8[65536]{0}', space=vmem, size = 0x10000, scoped, tag = 'output window, operand 0']
    #allocation7 [shape = 's32[2]{0}', space=sflag, size = 0x8, scoped, tag = 'scoped memory for tpu_custom_call.1']
    %21 = vsyncpa [#allocation7], 0
    %s22 = scalar_lea.sflag [#allocation7], 1
    %23 = vsyncpa %s22, 0
    loop: start=0, step=1, limit=4
    $region2: #{tpu_custom_call.1} parent=1 // loop_pre_header
      _
    $region3: #{tpu_custom_call.1} parent=1 // loop_header
      %s25 = sphi 0, %s29
      %p26 = scmp.ge.s32.totalorder %s25, 4
      %s35 = sphi 0, %s37
      %s38 = sphi 0, %s35
      %s39 = sphi 0, %s38
      %s55 = sphi 0, %s39
      %s61 = sphi 0, %s63
      %s64 = sphi 0, %s61
      %s65 = sphi 0, %s64
      %s81 = sphi 0, %s65
      %s85 = sphi 0, %s85
      %s87 = sphi 0, %s85
      %s88 = sphi 0, %s87
      %s102 = sphi 0, %s88
      %s106 = sphi 0, %s106
      %s108 = sphi 0, %s106
      %s109 = sphi 0, %s108
      %s123 = sphi 0, %s109
      %s127 = sphi 0, %s127
      %s129 = sphi 0, %s127
      %s130 = sphi 0, %s129
      %s144 = sphi 0, %s130
      %s148 = sphi 0, %s148
      %s150 = sphi 0, %s148
      %s151 = sphi 0, %s150
      %s165 = sphi 0, %s151
      %s169 = sphi 0, %s169
      %s171 = sphi 0, %s169
      %s172 = sphi 0, %s171
      %s186 = sphi 0, %s172
      %s190 = sphi 0, %s190
      %s192 = sphi 0, %s190
      %s193 = sphi 0, %s192
      %s207 = sphi 0, %s193
      %s211 = sphi 0, %s211
      %s213 = sphi 0, %s211
      %s214 = sphi 0, %s213
      %s228 = sphi 0, %s214
      %s232 = sphi 0, %s232
      %s234 = sphi 0, %s232
      %s235 = sphi 0, %s234
      %s249 = sphi 0, %s235
      %s253 = sphi 0, %s253
      %s255 = sphi 0, %s253
      %s256 = sphi 0, %s255
      %s270 = sphi 0, %s256
      %s274 = sphi 0, %s274
      %s276 = sphi 0, %s274
      %s277 = sphi 0, %s276
      %s291 = sphi 0, %s277
      %s295 = sphi 0, %s295
      %s297 = sphi 0, %s295
      %s298 = sphi 0, %s297
      %s312 = sphi 0, %s298
      %s316 = sphi 0, %s316
      %s318 = sphi 0, %s316
      %s319 = sphi 0, %s318
      %s333 = sphi 0, %s319
      %s337 = sphi 0, %s337
      %s339 = sphi 0, %s337
      %s340 = sphi 0, %s339
      %s354 = sphi 0, %s340
      %s358 = sphi 0, %s358
      %s360 = sphi 0, %s358
      %s361 = sphi 0, %s360
      %s375 = sphi 0, %s361
      %s381 = sphi 0, %s383
      %s384 = sphi 0, %s381
      %s385 = sphi 0, %s384
      %s401 = sphi 0, %s385
    $region4: #{tpu_custom_call.1} parent=1 // loop_header_branch
      %28 = sbr.rel (%p26) target = $region8
    $region5: #{tpu_custom_call.1} parent=1 // loop_body
      %s30 = ssub.s32 %s25, 1
      %s31 = ssub.s32 %s25, 2
      %s32 = sadd.s32 %s25, 1
      %s33 = ssub.s32 %s25, %s32
      %p34 = scmp.eq.s32.totalorder %s33, 0
      %s36 = sadd.s32 %s35, 1
      %s37 = scalar_select %p34, %s35, %s36
      %p40 = pneg %p34
      %p41 = scmp.eq.s32.totalorder %s25, 1
      %p42 = por %p40, %p41
      %p43 = scmp.ne.s32.totalorder %s35, %s38
      %p44 = scmp.eq.s32.totalorder %s25, 0
      %p45 = por %p43, %p44
      %p46 = scmp.ne.s32.totalorder %s35, %s38
      %p47 = scmp.eq.s32.totalorder %s30, 1
      %p48 = por %p46, %p47
      %p49 = scmp.ne.s32.totalorder %s38, %s39
      %p50 = scmp.eq.s32.totalorder %s30, 0
      %p51 = por %p49, %p50
      %p52 = scmp.ne.s32.totalorder %s38, %s39
      %p53 = scmp.eq.s32.totalorder %s31, 1
      %p54 = por %p52, %p53
      %p56 = scmp.ne.s32.totalorder %s39, %s55
      %p57 = scmp.eq.s32.totalorder %s31, 0
      %p58 = por %p56, %p57
      %s59 = ssub.s32 %s25, %s32
      %p60 = scmp.eq.s32.totalorder %s59, 0
      %s62 = sadd.s32 %s61, 1
      %s63 = scalar_select %p60, %s61, %s62
      %p66 = pneg %p60
      %p67 = scmp.eq.s32.totalorder %s25, 1
      %p68 = por %p66, %p67
      %p69 = scmp.ne.s32.totalorder %s61, %s64
      %p70 = scmp.eq.s32.totalorder %s25, 0
      %p71 = por %p69, %p70
      %p72 = scmp.ne.s32.totalorder %s61, %s64
      %p73 = scmp.eq.s32.totalorder %s30, 1
      %p74 = por %p72, %p73
      %p75 = scmp.ne.s32.totalorder %s64, %s65
      %p76 = scmp.eq.s32.totalorder %s30, 0
      %p77 = por %p75, %p76
      %p78 = scmp.ne.s32.totalorder %s64, %s65
      %p79 = scmp.eq.s32.totalorder %s31, 1
      %p80 = por %p78, %p79
      %p82 = scmp.ne.s32.totalorder %s65, %s81
      %p83 = scmp.eq.s32.totalorder %s31, 0
      %p84 = por %p82, %p83
      %s86 = sadd.s32 %s85, 1
      %p89 = scmp.eq.s32.totalorder %s25, 1
      %p90 = scmp.ne.s32.totalorder %s85, %s87
      %p91 = scmp.eq.s32.totalorder %s25, 0
      %p92 = por %p90, %p91
      %p93 = scmp.ne.s32.totalorder %s85, %s87
      %p94 = scmp.eq.s32.totalorder %s30, 1
      %p95 = por %p93, %p94
      %p96 = scmp.ne.s32.totalorder %s87, %s88
      %p97 = scmp.eq.s32.totalorder %s30, 0
      %p98 = por %p96, %p97
      %p99 = scmp.ne.s32.totalorder %s87, %s88
      %p100 = scmp.eq.s32.totalorder %s31, 1
      %p101 = por %p99, %p100
      %p103 = scmp.ne.s32.totalorder %s88, %s102
      %p104 = scmp.eq.s32.totalorder %s31, 0
      %p105 = por %p103, %p104
      %s107 = sadd.s32 %s106, 1
      %p110 = scmp.eq.s32.totalorder %s25, 1
      %p111 = scmp.ne.s32.totalorder %s106, %s108
      %p112 = scmp.eq.s32.totalorder %s25, 0
      %p113 = por %p111, %p112
      %p114 = scmp.ne.s32.totalorder %s106, %s108
      %p115 = scmp.eq.s32.totalorder %s30, 1
      %p116 = por %p114, %p115
      %p117 = scmp.ne.s32.totalorder %s108, %s109
      %p118 = scmp.eq.s32.totalorder %s30, 0
      %p119 = por %p117, %p118
      %p120 = scmp.ne.s32.totalorder %s108, %s109
      %p121 = scmp.eq.s32.totalorder %s31, 1
      %p122 = por %p120, %p121
      %p124 = scmp.ne.s32.totalorder %s109, %s123
      %p125 = scmp.eq.s32.totalorder %s31, 0
      %p126 = por %p124, %p125
      %s128 = sadd.s32 %s127, 1
      %p131 = scmp.eq.s32.totalorder %s25, 1
      %p132 = scmp.ne.s32.totalorder %s127, %s129
      %p133 = scmp.eq.s32.totalorder %s25, 0
      %p134 = por %p132, %p133
      %p135 = scmp.ne.s32.totalorder %s127, %s129
      %p136 = scmp.eq.s32.totalorder %s30, 1
      %p137 = por %p135, %p136
      %p138 = scmp.ne.s32.totalorder %s129, %s130
      %p139 = scmp.eq.s32.totalorder %s30, 0
      %p140 = por %p138, %p139
      %p141 = scmp.ne.s32.totalorder %s129, %s130
      %p142 = scmp.eq.s32.totalorder %s31, 1
      %p143 = por %p141, %p142
      %p145 = scmp.ne.s32.totalorder %s130, %s144
      %p146 = scmp.eq.s32.totalorder %s31, 0
      %p147 = por %p145, %p146
      %s149 = sadd.s32 %s148, 1
      %p152 = scmp.eq.s32.totalorder %s25, 1
      %p153 = scmp.ne.s32.totalorder %s148, %s150
      %p154 = scmp.eq.s32.totalorder %s25, 0
      %p155 = por %p153, %p154
      %p156 = scmp.ne.s32.totalorder %s148, %s150
      %p157 = scmp.eq.s32.totalorder %s30, 1
      %p158 = por %p156, %p157
      %p159 = scmp.ne.s32.totalorder %s150, %s151
      %p160 = scmp.eq.s32.totalorder %s30, 0
      %p161 = por %p159, %p160
      %p162 = scmp.ne.s32.totalorder %s150, %s151
      %p163 = scmp.eq.s32.totalorder %s31, 1
      %p164 = por %p162, %p163
      %p166 = scmp.ne.s32.totalorder %s151, %s165
      %p167 = scmp.eq.s32.totalorder %s31, 0
      %p168 = por %p166, %p167
      %s170 = sadd.s32 %s169, 1
      %p173 = scmp.eq.s32.totalorder %s25, 1
      %p174 = scmp.ne.s32.totalorder %s169, %s171
      %p175 = scmp.eq.s32.totalorder %s25, 0
      %p176 = por %p174, %p175
      %p177 = scmp.ne.s32.totalorder %s169, %s171
      %p178 = scmp.eq.s32.totalorder %s30, 1
      %p179 = por %p177, %p178
      %p180 = scmp.ne.s32.totalorder %s171, %s172
      %p181 = scmp.eq.s32.totalorder %s30, 0
      %p182 = por %p180, %p181
      %p183 = scmp.ne.s32.totalorder %s171, %s172
      %p184 = scmp.eq.s32.totalorder %s31, 1
      %p185 = por %p183, %p184
      %p187 = scmp.ne.s32.totalorder %s172, %s186
      %p188 = scmp.eq.s32.totalorder %s31, 0
      %p189 = por %p187, %p188
      %s191 = sadd.s32 %s190, 1
      %p194 = scmp.eq.s32.totalorder %s25, 1
      %p195 = scmp.ne.s32.totalorder %s190, %s192
      %p196 = scmp.eq.s32.totalorder %s25, 0
      %p197 = por %p195, %p196
      %p198 = scmp.ne.s32.totalorder %s190, %s192
      %p199 = scmp.eq.s32.totalorder %s30, 1
      %p200 = por %p198, %p199
      %p201 = scmp.ne.s32.totalorder %s192, %s193
      %p202 = scmp.eq.s32.totalorder %s30, 0
      %p203 = por %p201, %p202
      %p204 = scmp.ne.s32.totalorder %s192, %s193
      %p205 = scmp.eq.s32.totalorder %s31, 1
      %p206 = por %p204, %p205
      %p208 = scmp.ne.s32.totalorder %s193, %s207
      %p209 = scmp.eq.s32.totalorder %s31, 0
      %p210 = por %p208, %p209
      %s212 = sadd.s32 %s211, 1
      %p215 = scmp.eq.s32.totalorder %s25, 1
      %p216 = scmp.ne.s32.totalorder %s211, %s213
      %p217 = scmp.eq.s32.totalorder %s25, 0
      %p218 = por %p216, %p217
      %p219 = scmp.ne.s32.totalorder %s211, %s213
      %p220 = scmp.eq.s32.totalorder %s30, 1
      %p221 = por %p219, %p220
      %p222 = scmp.ne.s32.totalorder %s213, %s214
      %p223 = scmp.eq.s32.totalorder %s30, 0
      %p224 = por %p222, %p223
      %p225 = scmp.ne.s32.totalorder %s213, %s214
      %p226 = scmp.eq.s32.totalorder %s31, 1
      %p227 = por %p225, %p226
      %p229 = scmp.ne.s32.totalorder %s214, %s228
      %p230 = scmp.eq.s32.totalorder %s31, 0
      %p231 = por %p229, %p230
      %s233 = sadd.s32 %s232, 1
      %p236 = scmp.eq.s32.totalorder %s25, 1
      %p237 = scmp.ne.s32.totalorder %s232, %s234
      %p238 = scmp.eq.s32.totalorder %s25, 0
      %p239 = por %p237, %p238
      %p240 = scmp.ne.s32.totalorder %s232, %s234
      %p241 = scmp.eq.s32.totalorder %s30, 1
      %p242 = por %p240, %p241
      %p243 = scmp.ne.s32.totalorder %s234, %s235
      %p244 = scmp.eq.s32.totalorder %s30, 0
      %p245 = por %p243, %p244
      %p246 = scmp.ne.s32.totalorder %s234, %s235
      %p247 = scmp.eq.s32.totalorder %s31, 1
      %p248 = por %p246, %p247
      %p250 = scmp.ne.s32.totalorder %s235, %s249
      %p251 = scmp.eq.s32.totalorder %s31, 0
      %p252 = por %p250, %p251
      %s254 = sadd.s32 %s253, 1
      %p257 = scmp.eq.s32.totalorder %s25, 1
      %p258 = scmp.ne.s32.totalorder %s253, %s255
      %p259 = scmp.eq.s32.totalorder %s25, 0
      %p260 = por %p258, %p259
      %p261 = scmp.ne.s32.totalorder %s253, %s255
      %p262 = scmp.eq.s32.totalorder %s30, 1
      %p263 = por %p261, %p262
      %p264 = scmp.ne.s32.totalorder %s255, %s256
      %p265 = scmp.eq.s32.totalorder %s30, 0
      %p266 = por %p264, %p265
      %p267 = scmp.ne.s32.totalorder %s255, %s256
      %p268 = scmp.eq.s32.totalorder %s31, 1
      %p269 = por %p267, %p268
      %p271 = scmp.ne.s32.totalorder %s256, %s270
      %p272 = scmp.eq.s32.totalorder %s31, 0
      %p273 = por %p271, %p272
      %s275 = sadd.s32 %s274, 1
      %p278 = scmp.eq.s32.totalorder %s25, 1
      %p279 = scmp.ne.s32.totalorder %s274, %s276
      %p280 = scmp.eq.s32.totalorder %s25, 0
      %p281 = por %p279, %p280
      %p282 = scmp.ne.s32.totalorder %s274, %s276
      %p283 = scmp.eq.s32.totalorder %s30, 1
      %p284 = por %p282, %p283
      %p285 = scmp.ne.s32.totalorder %s276, %s277
      %p286 = scmp.eq.s32.totalorder %s30, 0
      %p287 = por %p285, %p286
      %p288 = scmp.ne.s32.totalorder %s276, %s277
      %p289 = scmp.eq.s32.totalorder %s31, 1
      %p290 = por %p288, %p289
      %p292 = scmp.ne.s32.totalorder %s277, %s291
      %p293 = scmp.eq.s32.totalorder %s31, 0
      %p294 = por %p292, %p293
      %s296 = sadd.s32 %s295, 1
      %p299 = scmp.eq.s32.totalorder %s25, 1
      %p300 = scmp.ne.s32.totalorder %s295, %s297
      %p301 = scmp.eq.s32.totalorder %s25, 0
      %p302 = por %p300, %p301
      %p303 = scmp.ne.s32.totalorder %s295, %s297
      %p304 = scmp.eq.s32.totalorder %s30, 1
      %p305 = por %p303, %p304
      %p306 = scmp.ne.s32.totalorder %s297, %s298
      %p307 = scmp.eq.s32.totalorder %s30, 0
      %p308 = por %p306, %p307
      %p309 = scmp.ne.s32.totalorder %s297, %s298
      %p310 = scmp.eq.s32.totalorder %s31, 1
      %p311 = por %p309, %p310
      %p313 = scmp.ne.s32.totalorder %s298, %s312
      %p314 = scmp.eq.s32.totalorder %s31, 0
      %p315 = por %p313, %p314
      %s317 = sadd.s32 %s316, 1
      %p320 = scmp.eq.s32.totalorder %s25, 1
      %p321 = scmp.ne.s32.totalorder %s316, %s318
      %p322 = scmp.eq.s32.totalorder %s25, 0
      %p323 = por %p321, %p322
      %p324 = scmp.ne.s32.totalorder %s316, %s318
      %p325 = scmp.eq.s32.totalorder %s30, 1
      %p326 = por %p324, %p325
      %p327 = scmp.ne.s32.totalorder %s318, %s319
      %p328 = scmp.eq.s32.totalorder %s30, 0
      %p329 = por %p327, %p328
      %p330 = scmp.ne.s32.totalorder %s318, %s319
      %p331 = scmp.eq.s32.totalorder %s31, 1
      %p332 = por %p330, %p331
      %p334 = scmp.ne.s32.totalorder %s319, %s333
      %p335 = scmp.eq.s32.totalorder %s31, 0
      %p336 = por %p334, %p335
      %s338 = sadd.s32 %s337, 1
      %p341 = scmp.eq.s32.totalorder %s25, 1
      %p342 = scmp.ne.s32.totalorder %s337, %s339
      %p343 = scmp.eq.s32.totalorder %s25, 0
      %p344 = por %p342, %p343
      %p345 = scmp.ne.s32.totalorder %s337, %s339
      %p346 = scmp.eq.s32.totalorder %s30, 1
      %p347 = por %p345, %p346
      %p348 = scmp.ne.s32.totalorder %s339, %s340
      %p349 = scmp.eq.s32.totalorder %s30, 0
      %p350 = por %p348, %p349
      %p351 = scmp.ne.s32.totalorder %s339, %s340
      %p352 = scmp.eq.s32.totalorder %s31, 1
      %p353 = por %p351, %p352
      %p355 = scmp.ne.s32.totalorder %s340, %s354
      %p356 = scmp.eq.s32.totalorder %s31, 0
      %p357 = por %p355, %p356
      %s359 = sadd.s32 %s358, 1
      %p362 = scmp.eq.s32.totalorder %s25, 1
      %p363 = scmp.ne.s32.totalorder %s358, %s360
      %p364 = scmp.eq.s32.totalorder %s25, 0
      %p365 = por %p363, %p364
      %p366 = scmp.ne.s32.totalorder %s358, %s360
      %p367 = scmp.eq.s32.totalorder %s30, 1
      %p368 = por %p366, %p367
      %p369 = scmp.ne.s32.totalorder %s360, %s361
      %p370 = scmp.eq.s32.totalorder %s30, 0
      %p371 = por %p369, %p370
      %p372 = scmp.ne.s32.totalorder %s360, %s361
      %p373 = scmp.eq.s32.totalorder %s31, 1
      %p374 = por %p372, %p373
      %p376 = scmp.ne.s32.totalorder %s361, %s375
      %p377 = scmp.eq.s32.totalorder %s31, 0
      %p378 = por %p376, %p377
      %s379 = ssub.s32 %s25, %s32
      %p380 = scmp.eq.s32.totalorder %s379, 0
      %s382 = sadd.s32 %s381, 1
      %s383 = scalar_select %p380, %s381, %s382
      %p386 = pneg %p380
      %p387 = scmp.eq.s32.totalorder %s25, 1
      %p388 = por %p386, %p387
      %p389 = scmp.ne.s32.totalorder %s381, %s384
      %p390 = scmp.eq.s32.totalorder %s25, 0
      %p391 = por %p389, %p390
      %p392 = scmp.ne.s32.totalorder %s381, %s384
      %p393 = scmp.eq.s32.totalorder %s30, 1
      %p394 = por %p392, %p393
      %p395 = scmp.ne.s32.totalorder %s384, %s385
      %p396 = scmp.eq.s32.totalorder %s30, 0
      %p397 = por %p395, %p396
      %p398 = scmp.ne.s32.totalorder %s384, %s385
      %p399 = scmp.eq.s32.totalorder %s31, 1
      %p400 = por %p398, %p399
      %p402 = scmp.ne.s32.totalorder %s385, %s401
      %p403 = scmp.eq.s32.totalorder %s31, 0
      %p404 = por %p402, %p403
      %p405 = scmp.le.s32.totalorder 1, %s25
      %p406 = scmp.lt.s32.totalorder %s25, 3
      %p407 = pnand %p405, %p406
      %p408 = pneg %p407
      // Predicated region
      $region9: #{tpu_custom_call.1} parent=5 // pred_check
        _
      $region10: #{tpu_custom_call.1} parent=5 // pred_check_branch
        %410 = sbr.rel (%p407) target = $region12
      $region11: #{tpu_custom_call.1} parent=5 // pred_region
        %s411 = ssub.s32 %s25, 1
        // Predicated region
        $region13: #{tpu_custom_call.1} parent=11 // pred_check
          %p412 = pneg %p98
        $region14: #{tpu_custom_call.1} parent=11 // pred_check_branch
          %414 = sbr.rel (%p412) target = $region16
        $region15: #{tpu_custom_call.1} parent=11 // pred_region
          _
        $region16: #{tpu_custom_call.1} parent=11 // pred_fallthru
          _
        // Predicated region
        $region17: #{tpu_custom_call.1} parent=11 // pred_check
          %p415 = pneg %p119
        $region18: #{tpu_custom_call.1} parent=11 // pred_check_branch
          %417 = sbr.rel (%p415) target = $region20
        $region19: #{tpu_custom_call.1} parent=11 // pred_region
          _
        $region20: #{tpu_custom_call.1} parent=11 // pred_fallthru
          _
        // Predicated region
        $region21: #{tpu_custom_call.1} parent=11 // pred_check
          %p418 = pneg %p140
        $region22: #{tpu_custom_call.1} parent=11 // pred_check_branch
          %420 = sbr.rel (%p418) target = $region24
        $region23: #{tpu_custom_call.1} parent=11 // pred_region
          _
        $region24: #{tpu_custom_call.1} parent=11 // pred_fallthru
          _
        // Predicated region
        $region25: #{tpu_custom_call.1} parent=11 // pred_check
          %p421 = pneg %p161
        $region26: #{tpu_custom_call.1} parent=11 // pred_check_branch
          %423 = sbr.rel (%p421) target = $region28
        $region27: #{tpu_custom_call.1} parent=11 // pred_region
          _
        $region28: #{tpu_custom_call.1} parent=11 // pred_fallthru
          _
        // Predicated region
        $region29: #{tpu_custom_call.1} parent=11 // pred_check
          %p424 = pneg %p182
        $region30: #{tpu_custom_call.1} parent=11 // pred_check_branch
          %426 = sbr.rel (%p424) target = $region32
        $region31: #{tpu_custom_call.1} parent=11 // pred_region
          _
        $region32: #{tpu_custom_call.1} parent=11 // pred_fallthru
          _
        // Predicated region
        $region33: #{tpu_custom_call.1} parent=11 // pred_check
          %p427 = pneg %p203
        $region34: #{tpu_custom_call.1} parent=11 // pred_check_branch
          %429 = sbr.rel (%p427) target = $region36
        $region35: #{tpu_custom_call.1} parent=11 // pred_region
          _
        $region36: #{tpu_custom_call.1} parent=11 // pred_fallthru
          _
        // Predicated region
        $region37: #{tpu_custom_call.1} parent=11 // pred_check
          %p430 = pneg %p224
        $region38: #{tpu_custom_call.1} parent=11 // pred_check_branch
          %432 = sbr.rel (%p430) target = $region40
        $region39: #{tpu_custom_call.1} parent=11 // pred_region
          _
        $region40: #{tpu_custom_call.1} parent=11 // pred_fallthru
          _
        // Predicated region
        $region41: #{tpu_custom_call.1} parent=11 // pred_check
          %p433 = pneg %p245
        $region42: #{tpu_custom_call.1} parent=11 // pred_check_branch
          %435 = sbr.rel (%p433) target = $region44
        $region43: #{tpu_custom_call.1} parent=11 // pred_region
          _
        $region44: #{tpu_custom_call.1} parent=11 // pred_fallthru
          _
        // Predicated region
        $region45: #{tpu_custom_call.1} parent=11 // pred_check
          %p436 = pneg %p266
        $region46: #{tpu_custom_call.1} parent=11 // pred_check_branch
          %438 = sbr.rel (%p436) target = $region48
        $region47: #{tpu_custom_call.1} parent=11 // pred_region
          _
        $region48: #{tpu_custom_call.1} parent=11 // pred_fallthru
          _
        // Predicated region
        $region49: #{tpu_custom_call.1} parent=11 // pred_check
          %p439 = pneg %p287
        $region50: #{tpu_custom_call.1} parent=11 // pred_check_branch
          %441 = sbr.rel (%p439) target = $region52
        $region51: #{tpu_custom_call.1} parent=11 // pred_region
          _
        $region52: #{tpu_custom_call.1} parent=11 // pred_fallthru
          _
        // Predicated region
        $region53: #{tpu_custom_call.1} parent=11 // pred_check
          %p442 = pneg %p308
        $region54: #{tpu_custom_call.1} parent=11 // pred_check_branch
          %444 = sbr.rel (%p442) target = $region56
        $region55: #{tpu_custom_call.1} parent=11 // pred_region
          _
        $region56: #{tpu_custom_call.1} parent=11 // pred_fallthru
          _
        // Predicated region
        $region57: #{tpu_custom_call.1} parent=11 // pred_check
          %p445 = pneg %p329
        $region58: #{tpu_custom_call.1} parent=11 // pred_check_branch
          %447 = sbr.rel (%p445) target = $region60
        $region59: #{tpu_custom_call.1} parent=11 // pred_region
          _
        $region60: #{tpu_custom_call.1} parent=11 // pred_fallthru
          _
        // Predicated region
        $region61: #{tpu_custom_call.1} parent=11 // pred_check
          %p448 = pneg %p350
        $region62: #{tpu_custom_call.1} parent=11 // pred_check_branch
          %450 = sbr.rel (%p448) target = $region64
        $region63: #{tpu_custom_call.1} parent=11 // pred_region
          _
        $region64: #{tpu_custom_call.1} parent=11 // pred_fallthru
          _
        // Predicated region
        $region65: #{tpu_custom_call.1} parent=11 // pred_check
          %p451 = pneg %p371
        $region66: #{tpu_custom_call.1} parent=11 // pred_check_branch
          %453 = sbr.rel (%p451) target = $region68
        $region67: #{tpu_custom_call.1} parent=11 // pred_region
          _
        $region68: #{tpu_custom_call.1} parent=11 // pred_fallthru
          _
      $region12: #{tpu_custom_call.1} parent=5 // pred_fallthru
        _
      %p454 = scmp.lt.s32.totalorder %s25, 2
      // Predicated region
      $region69: #{tpu_custom_call.1} parent=5 // pred_check
        %p455 = pneg %p454
      $region70: #{tpu_custom_call.1} parent=5 // pred_check_branch
        %457 = sbr.rel (%p455) target = $region72
      $region71: #{tpu_custom_call.1} parent=5 // pred_region
        // Predicated region
        $region73: #{tpu_custom_call.1} parent=71 // pred_check
          %p458 = pneg %p45
        $region74: #{tpu_custom_call.1} parent=71 // pred_check_branch
          %460 = sbr.rel (%p458) target = $region76
        $region75: #{tpu_custom_call.1} parent=71 // pred_region
          %p461 = scmp.lt.s32.totalorder %s25, 1
          %s462 = scalar_select %p461, %s25, 1
          %s463 = smul.addr %s462, 8
          %s464 = smul.addr %s463, 8
          %s465 = scalar_lea.vmem %s0, %s464
        $region76: #{tpu_custom_call.1} parent=71 // pred_fallthru
          _
        // Predicated region
        $region77: #{tpu_custom_call.1} parent=71 // pred_check
          %p466 = pneg %p71
        $region78: #{tpu_custom_call.1} parent=71 // pred_check_branch
          %468 = sbr.rel (%p466) target = $region80
        $region79: #{tpu_custom_call.1} parent=71 // pred_region
          %p469 = scmp.lt.s32.totalorder %s25, 1
          %s470 = scalar_select %p469, %s25, 1
          %s471 = scalar_lea.vmem %s1, %s470
        $region80: #{tpu_custom_call.1} parent=71 // pred_fallthru
          _
      $region72: #{tpu_custom_call.1} parent=5 // pred_fallthru
        _
      %p472 = scmp.le.s32.totalorder 1, %s25
      %p473 = scmp.lt.s32.totalorder %s25, 3
      %p474 = pnand %p472, %p473
      %p475 = pneg %p474
      // Predicated region
      $region81: #{tpu_custom_call.1} parent=5 // pred_check
        _
      $region82: #{tpu_custom_call.1} parent=5 // pred_check_branch
        %477 = sbr.rel (%p474) target = $region84
      $region83: #{tpu_custom_call.1} parent=5 // pred_region
        %s478 = ssub.s32 %s25, 1
        %p479 = scmp.lt.s32.totalorder %s30, 1
        %s480 = scalar_select %p479, %s30, 1
        %s481 = smul.addr %s480, 8
        %s482 = smul.addr %s481, 8
        %s483 = scalar_lea.vmem %s0, %s482
        %p484 = pneg %p51
        %p485 = pneg %p48
        %p486 = scmp.lt.s32.totalorder %s30, 1
        %s487 = scalar_select %p486, %s30, 1
        %s488 = scalar_lea.vmem %s1, %s487
        %p489 = pneg %p77
        %p490 = pneg %p74
        %p491 = pneg %p98
        %p492 = pneg %p95
        %p493 = pneg %p119
        %p494 = pneg %p116
        %p495 = pneg %p140
        %p496 = pneg %p137
        %p497 = pneg %p161
        %p498 = pneg %p158
        %p499 = pneg %p182
        %p500 = pneg %p179
        %p501 = pneg %p203
        %p502 = pneg %p200
        %p503 = pneg %p224
        %p504 = pneg %p221
        %p505 = pneg %p245
        %p506 = pneg %p242
        %p507 = pneg %p266
        %p508 = pneg %p263
        %p509 = pneg %p287
        %p510 = pneg %p284
        %p511 = pneg %p308
        %p512 = pneg %p305
        %p513 = pneg %p329
        %p514 = pneg %p326
        %p515 = pneg %p350
        %p516 = pneg %p347
        %p517 = pneg %p371
        %p518 = pneg %p368
        %p519 = pneg %p397
        %p520 = pneg %p394
        %s521 = sand.u32 %s384, 1
        %s522 = scalar_lea.sflag [#allocation7], %s521
        %s523 = sand.u32 %s384, 1
        %s524 = smul.addr %s523, 64
        %s525 = scalar_lea.vmem [#allocation6], %s524
        %p526 = scmp.lt.s32.totalorder %s30, 1
        %s527 = scalar_select %p526, %s30, 1
        %s528 = smul.addr %s527, 8
        %s529 = smul.addr %s528, 8
        %s530 = scalar_lea.vmem %s0, %s529
        %p531 = scmp.lt.s32.totalorder %s30, 1
        %s532 = scalar_select %p531, %s30, 1
        %s533 = scalar_lea.vmem %s1, %s532
        %v535 = vld [vmem:[%s530] sm:$0xff]
        %v536 = vld [vmem:[%s530 + $0x8] sm:$0xff]
        %v537 = vld [vmem:[%s530 + $0x10] sm:$0xff]
        %v538 = vld [vmem:[%s530 + $0x18] sm:$0xff]
        %v539 = vld [vmem:[%s530 + $0x20] sm:$0xff]
        %v540 = vld [vmem:[%s530 + $0x28] sm:$0xff]
        %v541 = vld [vmem:[%s530 + $0x30] sm:$0xff]
        %v542 = vld [vmem:[%s530 + $0x38] sm:$0xff]
        %v543 = vld [vmem:[%s2] sm:$0xff]
        %v544 = vld [vmem:[%s2 + $0x8] sm:$0xff]
        %v545 = vld [vmem:[%s2 + $0x10] sm:$0xff]
        %v546 = vld [vmem:[%s2 + $0x18] sm:$0xff]
        %v547 = vld [vmem:[%s3] sm:$0xff]
        %v548 = vld [vmem:[%s3 + $0x8] sm:$0xff]
        %v549 = vld [vmem:[%s3 + $0x10] sm:$0xff]
        %v550 = vld [vmem:[%s3 + $0x18] sm:$0xff]
        %v551 = vld [vmem:[%s4] sm:$0x1]
        %v552 = vld [vmem:[%s5] sm:$0x1]
        %vm553 = vcmask 261120
        %v554 = vsel %vm553, %v535, 0.0
        %v555 = vsel %vm553, %v536, 0.0
        %v556 = vadd.f32 %v554, %v555
        %v557 = vsel %vm553, %v537, 0.0
        %v558 = vadd.f32 %v556, %v557
        %v559 = vsel %vm553, %v538, 0.0
        %v560 = vadd.f32 %v558, %v559
        %v561 = vsel %vm553, %v539, 0.0
        %v562 = vadd.f32 %v560, %v561
        %v563 = vsel %vm553, %v540, 0.0
        %v564 = vadd.f32 %v562, %v563
        %v565 = vsel %vm553, %v541, 0.0
        %v566 = vadd.f32 %v564, %v565
        %v567 = vsel %vm553, %v542, 0.0
        %v568 = vadd.f32 %v566, %v567
        %v569 = vrot.slane %v568, 4
        %v570 = vadd.f32 %v568, %v569
        %v571 = vrot.slane %v570, 2
        %v572 = vadd.f32 %v570, %v571
        %v573 = vrot.slane %v572, 1
        %v574 = vadd.f32 %v572, %v573
        %v576 = vsel %vm553, %v574, 0
        %578 = vmatpush.msra.mxu0 0.0
        %579 = vmatpush.msra.mxu0 0.0
        %580 = vmatpush.msra.mxu0 0.0
        %581 = vmatpush.msra.mxu0 0.0
        %582 = vmatpush.msra.mxu0 0.0
        %583 = vmatpush.msra.mxu0 0.0
        %584 = vmatpush.msra.mxu0 0.0
        %585 = vmatpush.msra.mxu0 0.0
        %586 = vmatpush.msra.mxu0 0.0
        %587 = vmatpush.msra.mxu0 0.0
        %588 = vmatpush.msra.mxu0 0.0
        %589 = vmatpush.msra.mxu0 0.0
        %590 = vmatpush.msra.mxu0 %v546
        %591 = vmatpush.msra.mxu0 %v545
        %592 = vmatpush.msra.mxu0 %v544
        %593 = vmatpush.msra.mxu0 %v543
        %594 = vmatmul.f32.gmra.mxu0 %v576
        %v595 = vpop.f32.mrf.mxu0
        %v596 = vadd.f32 0.0, %v595
        %597 = vdwg.mxu0
        %v598 = vrcp.pop 64.0
        %v599 = vmul.f32 64.0, %v598
        %v600 = vsub.f32 1.0, %v599
        %v601 = vmul.f32 %v598, %v600
        %v602 = vadd.f32 %v598, %v601
        %vm603 = vweird.f32 %v598
        %v604 = vsel %vm603, %v598, %v602
        %v605 = vmul.f32 %v596, %v604
        %v607 = vsel %vm553, %v605, 0
        %609 = vmatpush.msra.mxu0 0.0
        %610 = vmatpush.msra.mxu0 0.0
        %611 = vmatpush.msra.mxu0 0.0
        %612 = vmatpush.msra.mxu0 0.0
        %613 = vmatpush.msra.mxu0 0.0
        %614 = vmatpush.msra.mxu0 0.0
        %615 = vmatpush.msra.mxu0 0.0
        %616 = vmatpush.msra.mxu0 0.0
        %617 = vmatpush.msra.mxu0 0.0
        %618 = vmatpush.msra.mxu0 0.0
        %619 = vmatpush.msra.mxu0 0.0
        %620 = vmatpush.msra.mxu0 0.0
        %621 = vmatpush.msra.mxu0 %v550
        %622 = vmatpush.msra.mxu0 %v549
        %623 = vmatpush.msra.mxu0 %v548
        %624 = vmatpush.msra.mxu0 %v547
        %625 = vmatmul.f32.gmra.mxu0 %v607
        %v626 = vpop.f32.mrf.mxu0
        %v627 = vadd.f32 0.0, %v626
        %628 = vdwg.mxu0
        %v629 = vperm.slane %v627, 0
        %v630 = vsub.f32 %v535, %v629
        %v631 = vsub.f32 %v536, %v629
        %v632 = vsub.f32 %v537, %v629
        %v633 = vsub.f32 %v538, %v629
        %v634 = vsub.f32 %v539, %v629
        %v635 = vsub.f32 %v540, %v629
        %v636 = vsub.f32 %v541, %v629
        %v637 = vsub.f32 %v542, %v629
        %v638 = vmul.f32 %v630, %v630
        %v639 = vmul.f32 %v631, %v631
        %v640 = vmul.f32 %v632, %v632
        %v641 = vmul.f32 %v633, %v633
        %v642 = vmul.f32 %v634, %v634
        %v643 = vmul.f32 %v635, %v635
        %v644 = vmul.f32 %v636, %v636
        %v645 = vmul.f32 %v637, %v637
        %v646 = vsel %vm553, %v638, 0.0
        %v647 = vsel %vm553, %v639, 0.0
        %v648 = vadd.f32 %v646, %v647
        %v649 = vsel %vm553, %v640, 0.0
        %v650 = vadd.f32 %v648, %v649
        %v651 = vsel %vm553, %v641, 0.0
        %v652 = vadd.f32 %v650, %v651
        %v653 = vsel %vm553, %v642, 0.0
        %v654 = vadd.f32 %v652, %v653
        %v655 = vsel %vm553, %v643, 0.0
        %v656 = vadd.f32 %v654, %v655
        %v657 = vsel %vm553, %v644, 0.0
        %v658 = vadd.f32 %v656, %v657
        %v659 = vsel %vm553, %v645, 0.0
        %v660 = vadd.f32 %v658, %v659
        %v661 = vrot.slane %v660, 4
        %v662 = vadd.f32 %v660, %v661
        %v663 = vrot.slane %v662, 2
        %v664 = vadd.f32 %v662, %v663
        %v665 = vrot.slane %v664, 1
        %v666 = vadd.f32 %v664, %v665
        %v668 = vsel %vm553, %v666, 0
        %670 = vmatpush.msra.mxu0 0.0
        %671 = vmatpush.msra.mxu0 0.0
        %672 = vmatpush.msra.mxu0 0.0
        %673 = vmatpush.msra.mxu0 0.0
        %674 = vmatpush.msra.mxu0 0.0
        %675 = vmatpush.msra.mxu0 0.0
        %676 = vmatpush.msra.mxu0 0.0
        %677 = vmatpush.msra.mxu0 0.0
        %678 = vmatpush.msra.mxu0 0.0
        %679 = vmatpush.msra.mxu0 0.0
        %680 = vmatpush.msra.mxu0 0.0
        %681 = vmatpush.msra.mxu0 0.0
        %682 = vmatpush.msra.mxu0 %v546
        %683 = vmatpush.msra.mxu0 %v545
        %684 = vmatpush.msra.mxu0 %v544
        %685 = vmatpush.msra.mxu0 %v543
        %686 = vmatmul.f32.gmra.mxu0 %v668
        %v687 = vpop.f32.mrf.mxu0
        %v688 = vadd.f32 0.0, %v687
        %689 = vdwg.mxu0
        %v690 = vmul.f32 %v688, %v604
        %v692 = vsel %vm553, %v690, 0
        %694 = vmatpush.msra.mxu0 0.0
        %695 = vmatpush.msra.mxu0 0.0
        %696 = vmatpush.msra.mxu0 0.0
        %697 = vmatpush.msra.mxu0 0.0
        %698 = vmatpush.msra.mxu0 0.0
        %699 = vmatpush.msra.mxu0 0.0
        %700 = vmatpush.msra.mxu0 0.0
        %701 = vmatpush.msra.mxu0 0.0
        %702 = vmatpush.msra.mxu0 0.0
        %703 = vmatpush.msra.mxu0 0.0
        %704 = vmatpush.msra.mxu0 0.0
        %705 = vmatpush.msra.mxu0 0.0
        %706 = vmatpush.msra.mxu0 %v550
        %707 = vmatpush.msra.mxu0 %v549
        %708 = vmatpush.msra.mxu0 %v548
        %709 = vmatpush.msra.mxu0 %v547
        %710 = vmatmul.f32.gmra.mxu0 %v692
        %v711 = vpop.f32.mrf.mxu0
        %v712 = vadd.f32 1e-05, %v711
        %713 = vdwg.mxu0
        %v714 = vrsqrt.pop %v712
        %v715 = vmul.f32 %v714, %v712
        %v716 = vmul.f32 %v715, %v714
        %v717 = vmul.f32 0.5, %v716
        %v718 = vsub.f32 1.5, %v717
        %v719 = vmul.f32 %v714, %v718
        %vm720 = vweird.f32 %v712
        %vm721 = vweird.f32 %v714
        %vm722 = vmor %vm720, %vm721
        %v723 = vsel %vm722, %v714, %v719
        %v724 = vperm.slane %v723, 0
        %v725 = vmul.f32 %v630, %v724
        %v726 = vmul.f32 %v631, %v724
        %v727 = vmul.f32 %v632, %v724
        %v728 = vmul.f32 %v633, %v724
        %v729 = vmul.f32 %v634, %v724
        %v730 = vmul.f32 %v635, %v724
        %v731 = vmul.f32 %v636, %v724
        %v732 = vmul.f32 %v637, %v724
        %v734 = vperm.slane %v551, 0
        %v736 = vmul.f32 %v725, %v734
        %v737 = vmul.f32 %v726, %v734
        %v738 = vmul.f32 %v727, %v734
        %v739 = vmul.f32 %v728, %v734
        %v740 = vmul.f32 %v729, %v734
        %v741 = vmul.f32 %v730, %v734
        %v742 = vmul.f32 %v731, %v734
        %v743 = vmul.f32 %v732, %v734
        %v745 = vperm.slane %v552, 0
        %v747 = vadd.f32 %v736, %v745
        %v748 = vadd.f32 %v737, %v745
        %v749 = vadd.f32 %v738, %v745
        %v750 = vadd.f32 %v739, %v745
        %v751 = vadd.f32 %v740, %v745
        %v752 = vadd.f32 %v741, %v745
        %v753 = vadd.f32 %v742, %v745
        %v754 = vadd.f32 %v743, %v745
        %v755 = vxor.u32 %v747, 2147483648
        %v756 = vxor.u32 %v748, 2147483648
        %v757 = vxor.u32 %v749, 2147483648
        %v758 = vxor.u32 %v750, 2147483648
        %v759 = vxor.u32 %v751, 2147483648
        %v760 = vxor.u32 %v752, 2147483648
        %v761 = vxor.u32 %v753, 2147483648
        %v762 = vxor.u32 %v754, 2147483648
        %v763 = vmul.f32 %v755, 1.442695
        %v764 = vpow.pop %v763
        %v765 = vmul.f32 %v756, 1.442695
        %v766 = vpow.pop %v765
        %v767 = vmul.f32 %v757, 1.442695
        %v768 = vpow.pop %v767
        %v769 = vmul.f32 %v758, 1.442695
        %v770 = vpow.pop %v769
        %v771 = vmul.f32 %v759, 1.442695
        %v772 = vpow.pop %v771
        %v773 = vmul.f32 %v760, 1.442695
        %v774 = vpow.pop %v773
        %v775 = vmul.f32 %v761, 1.442695
        %v776 = vpow.pop %v775
        %v777 = vmul.f32 %v762, 1.442695
        %v778 = vpow.pop %v777
        %v779 = vadd.f32 %v764, 1.0
        %v780 = vadd.f32 %v766, 1.0
        %v781 = vadd.f32 %v768, 1.0
        %v782 = vadd.f32 %v770, 1.0
        %v783 = vadd.f32 %v772, 1.0
        %v784 = vadd.f32 %v774, 1.0
        %v785 = vadd.f32 %v776, 1.0
        %v786 = vadd.f32 %v778, 1.0
        %v787 = vrcp.pop %v779
        %v788 = vmul.f32 %v779, %v787
        %v789 = vsub.f32 1.0, %v788
        %v790 = vmul.f32 %v787, %v789
        %v791 = vadd.f32 %v787, %v790
        %vm792 = vweird.f32 %v779
        %vm793 = vweird.f32 %v787
        %vm794 = vmor %vm792, %vm793
        %v795 = vsel %vm794, %v787, %v791
        %v796 = vand.u32 2147483647, %v779
        %vm797 = vcmp.eq.f32.partialorder %v796, 8.507059e+37
        %v798 = vand.u32 %v779, 2147483648
        %v799 = vor.u32 1.1754944e-38, %v798
        %v800 = vsel %vm797, %v799, %v795
        %v801 = vmul.f32 1.0, %v800
        %v802 = vrcp.pop %v780
        %v803 = vmul.f32 %v780, %v802
        %v804 = vsub.f32 1.0, %v803
        %v805 = vmul.f32 %v802, %v804
        %v806 = vadd.f32 %v802, %v805
        %vm807 = vweird.f32 %v780
        %vm808 = vweird.f32 %v802
        %vm809 = vmor %vm807, %vm808
        %v810 = vsel %vm809, %v802, %v806
        %v811 = vand.u32 2147483647, %v780
        %vm812 = vcmp.eq.f32.partialorder %v811, 8.507059e+37
        %v813 = vand.u32 %v780, 2147483648
        %v814 = vor.u32 1.1754944e-38, %v813
        %v815 = vsel %vm812, %v814, %v810
        %v816 = vmul.f32 1.0, %v815
        %v817 = vrcp.pop %v781
        %v818 = vmul.f32 %v781, %v817
        %v819 = vsub.f32 1.0, %v818
        %v820 = vmul.f32 %v817, %v819
        %v821 = vadd.f32 %v817, %v820
        %vm822 = vweird.f32 %v781
        %vm823 = vweird.f32 %v817
        %vm824 = vmor %vm822, %vm823
        %v825 = vsel %vm824, %v817, %v821
        %v826 = vand.u32 2147483647, %v781
        %vm827 = vcmp.eq.f32.partialorder %v826, 8.507059e+37
        %v828 = vand.u32 %v781, 2147483648
        %v829 = vor.u32 1.1754944e-38, %v828
        %v830 = vsel %vm827, %v829, %v825
        %v831 = vmul.f32 1.0, %v830
        %v832 = vrcp.pop %v782
        %v833 = vmul.f32 %v782, %v832
        %v834 = vsub.f32 1.0, %v833
        %v835 = vmul.f32 %v832, %v834
        %v836 = vadd.f32 %v832, %v835
        %vm837 = vweird.f32 %v782
        %vm838 = vweird.f32 %v832
        %vm839 = vmor %vm837, %vm838
        %v840 = vsel %vm839, %v832, %v836
        %v841 = vand.u32 2147483647, %v782
        %vm842 = vcmp.eq.f32.partialorder %v841, 8.507059e+37
        %v843 = vand.u32 %v782, 2147483648
        %v844 = vor.u32 1.1754944e-38, %v843
        %v845 = vsel %vm842, %v844, %v840
        %v846 = vmul.f32 1.0, %v845
        %v847 = vrcp.pop %v783
        %v848 = vmul.f32 %v783, %v847
        %v849 = vsub.f32 1.0, %v848
        %v850 = vmul.f32 %v847, %v849
        %v851 = vadd.f32 %v847, %v850
        %vm852 = vweird.f32 %v783
        %vm853 = vweird.f32 %v847
        %vm854 = vmor %vm852, %vm853
        %v855 = vsel %vm854, %v847, %v851
        %v856 = vand.u32 2147483647, %v783
        %vm857 = vcmp.eq.f32.partialorder %v856, 8.507059e+37
        %v858 = vand.u32 %v783, 2147483648
        %v859 = vor.u32 1.1754944e-38, %v858
        %v860 = vsel %vm857, %v859, %v855
        %v861 = vmul.f32 1.0, %v860
        %v862 = vrcp.pop %v784
        %v863 = vmul.f32 %v784, %v862
        %v864 = vsub.f32 1.0, %v863
        %v865 = vmul.f32 %v862, %v864
        %v866 = vadd.f32 %v862, %v865
        %vm867 = vweird.f32 %v784
        %vm868 = vweird.f32 %v862
        %vm869 = vmor %vm867, %vm868
        %v870 = vsel %vm869, %v862, %v866
        %v871 = vand.u32 2147483647, %v784
        %vm872 = vcmp.eq.f32.partialorder %v871, 8.507059e+37
        %v873 = vand.u32 %v784, 2147483648
        %v874 = vor.u32 1.1754944e-38, %v873
        %v875 = vsel %vm872, %v874, %v870
        %v876 = vmul.f32 1.0, %v875
        %v877 = vrcp.pop %v785
        %v878 = vmul.f32 %v785, %v877
        %v879 = vsub.f32 1.0, %v878
        %v880 = vmul.f32 %v877, %v879
        %v881 = vadd.f32 %v877, %v880
        %vm882 = vweird.f32 %v785
        %vm883 = vweird.f32 %v877
        %vm884 = vmor %vm882, %vm883
        %v885 = vsel %vm884, %v877, %v881
        %v886 = vand.u32 2147483647, %v785
        %vm887 = vcmp.eq.f32.partialorder %v886, 8.507059e+37
        %v888 = vand.u32 %v785, 2147483648
        %v889 = vor.u32 1.1754944e-38, %v888
        %v890 = vsel %vm887, %v889, %v885
        %v891 = vmul.f32 1.0, %v890
        %v892 = vrcp.pop %v786
        %v893 = vmul.f32 %v786, %v892
        %v894 = vsub.f32 1.0, %v893
        %v895 = vmul.f32 %v892, %v894
        %v896 = vadd.f32 %v892, %v895
        %vm897 = vweird.f32 %v786
        %vm898 = vweird.f32 %v892
        %vm899 = vmor %vm897, %vm898
        %v900 = vsel %vm899, %v892, %v896
        %v901 = vand.u32 2147483647, %v786
        %vm902 = vcmp.eq.f32.partialorder %v901, 8.507059e+37
        %v903 = vand.u32 %v786, 2147483648
        %v904 = vor.u32 1.1754944e-38, %v903
        %v905 = vsel %vm902, %v904, %v900
        %v906 = vmul.f32 1.0, %v905
        %v907 = vmul.f32 %v747, %v801
        %v908 = vmul.f32 %v748, %v816
        %v909 = vmul.f32 %v749, %v831
        %v910 = vmul.f32 %v750, %v846
        %v911 = vmul.f32 %v751, %v861
        %v912 = vmul.f32 %v752, %v876
        %v913 = vmul.f32 %v753, %v891
        %v914 = vmul.f32 %v754, %v906
        %v915 = vld [vmem:[%s7] sm:$0x1]
        %vm916 = vcmask 257024
        %917 = vst.msk [vmem:[#allocation2] sm:$0xf] %vm916, 0
        %vm918 = vcmask 253952
        %919 = vst.msk [vmem:[#allocation2 + $0x4] sm:$0x1] %vm918, 0
        %s920 = scalar_lea.vmem [#allocation2], 72
        %921 = vst.msk [vmem:[%s920] sm:$0xf] %vm916, 0
        %922 = vst.msk [vmem:[%s920 + $0x4] sm:$0x1] %vm918, 0
        %s923 = scalar_lea.vmem [#allocation2], 8
        %vm924 = vcmask 253952
        %vm925 = vsmask.f32 256
        %vm926 = vmand %vm924, %vm925
        %v927 = vld [vmem:[%s923] sm:$0x1]
        %v928 = vsel %vm926, 0, %v927
        %929 = vst [vmem:[%s923] sm:$0x1] %v928
        %v930 = vld [vmem:[%s923 + $0x8] sm:$0x1]
        %v931 = vsel %vm926, 0, %v930
        %932 = vst [vmem:[%s923 + $0x8] sm:$0x1] %v931
        %v933 = vld [vmem:[%s923 + $0x10] sm:$0x1]
        %v934 = vsel %vm926, 0, %v933
        %935 = vst [vmem:[%s923 + $0x10] sm:$0x1] %v934
        %v936 = vld [vmem:[%s923 + $0x18] sm:$0x1]
        %v937 = vsel %vm926, 0, %v936
        %938 = vst [vmem:[%s923 + $0x18] sm:$0x1] %v937
        %v939 = vld [vmem:[%s923 + $0x20] sm:$0x1]
        %v940 = vsel %vm926, 0, %v939
        %941 = vst [vmem:[%s923 + $0x20] sm:$0x1] %v940
        %v942 = vld [vmem:[%s923 + $0x28] sm:$0x1]
        %v943 = vsel %vm926, 0, %v942
        %944 = vst [vmem:[%s923 + $0x28] sm:$0x1] %v943
        %v945 = vld [vmem:[%s923 + $0x30] sm:$0x1]
        %v946 = vsel %vm926, 0, %v945
        %947 = vst [vmem:[%s923 + $0x30] sm:$0x1] %v946
        %v948 = vld [vmem:[%s923 + $0x38] sm:$0x1]
        %v949 = vsel %vm926, 0, %v948
        %950 = vst [vmem:[%s923 + $0x38] sm:$0x1] %v949
        %vm951 = vsmask.f32 7938
        %vm952 = vmand %vm924, %vm951
        %v953 = vld [vmem:[%s923 + $0x4] sm:$0x1]
        %v954 = vsel %vm952, 0, %v953
        %955 = vst [vmem:[%s923 + $0x4] sm:$0x1] %v954
        %v956 = vld [vmem:[%s923 + $0xc] sm:$0x1]
        %v957 = vsel %vm952, 0, %v956
        %958 = vst [vmem:[%s923 + $0xc] sm:$0x1] %v957
        %v959 = vld [vmem:[%s923 + $0x14] sm:$0x1]
        %v960 = vsel %vm952, 0, %v959
        %961 = vst [vmem:[%s923 + $0x14] sm:$0x1] %v960
        %v962 = vld [vmem:[%s923 + $0x1c] sm:$0x1]
        %v963 = vsel %vm952, 0, %v962
        %964 = vst [vmem:[%s923 + $0x1c] sm:$0x1] %v963
        %v965 = vld [vmem:[%s923 + $0x24] sm:$0x1]
        %v966 = vsel %vm952, 0, %v965
        %967 = vst [vmem:[%s923 + $0x24] sm:$0x1] %v966
        %v968 = vld [vmem:[%s923 + $0x2c] sm:$0x1]
        %v969 = vsel %vm952, 0, %v968
        %970 = vst [vmem:[%s923 + $0x2c] sm:$0x1] %v969
        %v971 = vld [vmem:[%s923 + $0x34] sm:$0x1]
        %v972 = vsel %vm952, 0, %v971
        %973 = vst [vmem:[%s923 + $0x34] sm:$0x1] %v972
        %v974 = vld [vmem:[%s923 + $0x3c] sm:$0x1]
        %v975 = vsel %vm952, 0, %v974
        %976 = vst [vmem:[%s923 + $0x3c] sm:$0x1] %v975
        %v977 = vpack.c.bf16 %v907, %v907
        %v978 = vpack.c.bf16 %v908, %v908
        %v979 = vpack.c.bf16 %v909, %v909
        %v980 = vpack.c.bf16 %v910, %v910
        %v981 = vpack.c.bf16 %v911, %v911
        %v982 = vpack.c.bf16 %v912, %v912
        %v983 = vpack.c.bf16 %v913, %v913
        %v984 = vpack.c.bf16 %v914, %v914
        %v986 = vshrl.u32 %v977, 16
        %v988 = vrot.slane %v986, 7
        %v989 = vshll.u32 %v977, 16
        %v991 = vor.u32 %v988, %v989
        %v992 = vrot.slane %v988, 4
        %v994 = vshrl.u32 %v978, 16
        %v996 = vrot.slane %v994, 7
        %v997 = vshll.u32 %v978, 16
        %v999 = vor.u32 %v996, %v997
        %v1000 = vrot.slane %v996, 4
        %v1002 = vshrl.u32 %v979, 16
        %v1004 = vrot.slane %v1002, 7
        %v1005 = vshll.u32 %v979, 16
        %v1007 = vor.u32 %v1004, %v1005
        %v1008 = vrot.slane %v1004, 4
        %v1010 = vshrl.u32 %v980, 16
        %v1012 = vrot.slane %v1010, 7
        %v1013 = vshll.u32 %v980, 16
        %v1015 = vor.u32 %v1012, %v1013
        %v1016 = vrot.slane %v1012, 4
        %v1018 = vshrl.u32 %v981, 16
        %v1020 = vrot.slane %v1018, 7
        %v1021 = vshll.u32 %v981, 16
        %v1023 = vor.u32 %v1020, %v1021
        %v1024 = vrot.slane %v1020, 4
        %v1026 = vshrl.u32 %v982, 16
        %v1028 = vrot.slane %v1026, 7
        %v1029 = vshll.u32 %v982, 16
        %v1031 = vor.u32 %v1028, %v1029
        %v1032 = vrot.slane %v1028, 4
        %v1034 = vshrl.u32 %v983, 16
        %v1036 = vrot.slane %v1034, 7
        %v1037 = vshll.u32 %v983, 16
        %v1039 = vor.u32 %v1036, %v1037
        %v1040 = vrot.slane %v1036, 4
        %v1042 = vshrl.u32 %v984, 16
        %v1044 = vrot.slane %v1042, 7
        %v1045 = vshll.u32 %v984, 16
        %v1047 = vor.u32 %v1044, %v1045
        %v1048 = vrot.slane %v1044, 4
        %vm1065 = vcmask 257024
        %vm1066 = vmand %vm1065, %vm951
        %v1067 = vld [vmem:[%s923] sm:$0xf]
        %v1068 = vsel %vm1066, %v991, %v1067
        %1069 = vst [vmem:[%s923] sm:$0xf] %v1068
        %v1070 = vld [vmem:[%s923 + $0x4] sm:$0x1]
        %v1071 = vsel %vm926, %v992, %v1070
        %1072 = vst [vmem:[%s923 + $0x4] sm:$0x1] %v1071
        %v1073 = vld [vmem:[%s923 + $0x8] sm:$0xf]
        %v1074 = vsel %vm1066, %v999, %v1073
        %1075 = vst [vmem:[%s923 + $0x8] sm:$0xf] %v1074
        %v1076 = vld [vmem:[%s923 + $0xc] sm:$0x1]
        %v1077 = vsel %vm926, %v1000, %v1076
        %1078 = vst [vmem:[%s923 + $0xc] sm:$0x1] %v1077
        %v1079 = vld [vmem:[%s923 + $0x10] sm:$0xf]
        %v1080 = vsel %vm1066, %v1007, %v1079
        %1081 = vst [vmem:[%s923 + $0x10] sm:$0xf] %v1080
        %v1082 = vld [vmem:[%s923 + $0x14] sm:$0x1]
        %v1083 = vsel %vm926, %v1008, %v1082
        %1084 = vst [vmem:[%s923 + $0x14] sm:$0x1] %v1083
        %v1085 = vld [vmem:[%s923 + $0x18] sm:$0xf]
        %v1086 = vsel %vm1066, %v1015, %v1085
        %1087 = vst [vmem:[%s923 + $0x18] sm:$0xf] %v1086
        %v1088 = vld [vmem:[%s923 + $0x1c] sm:$0x1]
        %v1089 = vsel %vm926, %v1016, %v1088
        %1090 = vst [vmem:[%s923 + $0x1c] sm:$0x1] %v1089
        %v1091 = vld [vmem:[%s923 + $0x20] sm:$0xf]
        %v1092 = vsel %vm1066, %v1023, %v1091
        %1093 = vst [vmem:[%s923 + $0x20] sm:$0xf] %v1092
        %v1094 = vld [vmem:[%s923 + $0x24] sm:$0x1]
        %v1095 = vsel %vm926, %v1024, %v1094
        %1096 = vst [vmem:[%s923 + $0x24] sm:$0x1] %v1095
        %v1097 = vld [vmem:[%s923 + $0x28] sm:$0xf]
        %v1098 = vsel %vm1066, %v1031, %v1097
        %1099 = vst [vmem:[%s923 + $0x28] sm:$0xf] %v1098
        %v1100 = vld [vmem:[%s923 + $0x2c] sm:$0x1]
        %v1101 = vsel %vm926, %v1032, %v1100
        %1102 = vst [vmem:[%s923 + $0x2c] sm:$0x1] %v1101
        %v1103 = vld [vmem:[%s923 + $0x30] sm:$0xf]
        %v1104 = vsel %vm1066, %v1039, %v1103
        %1105 = vst [vmem:[%s923 + $0x30] sm:$0xf] %v1104
        %v1106 = vld [vmem:[%s923 + $0x34] sm:$0x1]
        %v1107 = vsel %vm926, %v1040, %v1106
        %1108 = vst [vmem:[%s923 + $0x34] sm:$0x1] %v1107
        %v1109 = vld [vmem:[%s923 + $0x38] sm:$0xf]
        %v1110 = vsel %vm1066, %v1047, %v1109
        %1111 = vst [vmem:[%s923 + $0x38] sm:$0xf] %v1110
        %v1112 = vld [vmem:[%s923 + $0x3c] sm:$0x1]
        %v1113 = vsel %vm926, %v1048, %v1112
        %1114 = vst [vmem:[%s923 + $0x3c] sm:$0x1] %v1113
        %v1115 = vld [vmem:[#allocation2] sm:$0xf]
        %v1116 = vld [vmem:[#allocation2 + $0x8] sm:$0xf]
        %v1117 = vld [vmem:[#allocation2 + $0x10] sm:$0xf]
        %v1118 = vld [vmem:[#allocation2 + $0x18] sm:$0xf]
        %v1119 = vld [vmem:[#allocation2 + $0x20] sm:$0xf]
        %v1120 = vld [vmem:[#allocation2 + $0x28] sm:$0xf]
        %v1121 = vld [vmem:[#allocation2 + $0x30] sm:$0xf]
        %v1122 = vld [vmem:[#allocation2 + $0x38] sm:$0xf]
        %1123 = vst.msk [vmem:[#allocation3] sm:$0xf] %vm916, %v1115
        %1124 = vst.msk [vmem:[#allocation3 + $0xc] sm:$0xf] %vm916, %v1116
        %1125 = vst.msk [vmem:[#allocation3 + $0x18] sm:$0xf] %vm916, %v1117
        %1126 = vst.msk [vmem:[#allocation3 + $0x24] sm:$0xf] %vm916, %v1118
        %1127 = vst.msk [vmem:[#allocation3 + $0x30] sm:$0xf] %vm916, %v1119
        %1128 = vst.msk [vmem:[#allocation3 + $0x3c] sm:$0xf] %vm916, %v1120
        %1129 = vst.msk [vmem:[#allocation3 + $0x48] sm:$0xf] %vm916, %v1121
        %1130 = vst.msk [vmem:[#allocation3 + $0x54] sm:$0xf] %vm916, %v1122
        %v1131 = vld [vmem:[#allocation2] sm:$0xf]
        %v1132 = vld [vmem:[#allocation2 + $0x4] sm:$0x1]
        %v1133 = vld [vmem:[#allocation2 + $0x8] sm:$0xf]
        %v1134 = vld [vmem:[#allocation2 + $0xc] sm:$0x1]
        %v1135 = vld [vmem:[#allocation2 + $0x10] sm:$0xf]
        %v1136 = vld [vmem:[#allocation2 + $0x14] sm:$0x1]
        %v1137 = vld [vmem:[#allocation2 + $0x18] sm:$0xf]
        %v1138 = vld [vmem:[#allocation2 + $0x1c] sm:$0x1]
        %v1139 = vld [vmem:[#allocation2 + $0x20] sm:$0xf]
        %v1140 = vld [vmem:[#allocation2 + $0x24] sm:$0x1]
        %v1141 = vld [vmem:[#allocation2 + $0x28] sm:$0xf]
        %v1142 = vld [vmem:[#allocation2 + $0x2c] sm:$0x1]
        %v1143 = vld [vmem:[#allocation2 + $0x30] sm:$0xf]
        %v1144 = vld [vmem:[#allocation2 + $0x34] sm:$0x1]
        %v1145 = vld [vmem:[#allocation2 + $0x38] sm:$0xf]
        %v1146 = vld [vmem:[#allocation2 + $0x3c] sm:$0x1]
        %vm1147 = vsmask.f32 3328
        %vm1148 = vsmask.f32 7440
        %vm1149 = vmor %vm1147, %vm1148
        %v1151 = vshrl.u32 %v1131, 16
        %v1153 = vrot.slane %v1151, 4
        %v1154 = vshll.u32 %v1131, 16
        %v1156 = vrot.slane %v1154, 5
        %v1157 = vor.u32 %v1153, %v1156
        %v1158 = vrot.slane %v1157, 4
        %v1160 = vshll.u32 %v1132, 16
        %v1162 = vrot.slane %v1160, 5
        %v1163 = vsel %vm1149, %v1158, %v1162
        %v1165 = vshrl.u32 %v1133, 16
        %v1167 = vrot.slane %v1165, 4
        %v1168 = vshll.u32 %v1133, 16
        %v1170 = vrot.slane %v1168, 5
        %v1171 = vor.u32 %v1167, %v1170
        %v1172 = vrot.slane %v1171, 4
        %v1174 = vshll.u32 %v1134, 16
        %v1176 = vrot.slane %v1174, 5
        %v1177 = vsel %vm1149, %v1172, %v1176
        %v1179 = vshrl.u32 %v1135, 16
        %v1181 = vrot.slane %v1179, 4
        %v1182 = vshll.u32 %v1135, 16
        %v1184 = vrot.slane %v1182, 5
        %v1185 = vor.u32 %v1181, %v1184
        %v1186 = vrot.slane %v1185, 4
        %v1188 = vshll.u32 %v1136, 16
        %v1190 = vrot.slane %v1188, 5
        %v1191 = vsel %vm1149, %v1186, %v1190
        %v1193 = vshrl.u32 %v1137, 16
        %v1195 = vrot.slane %v1193, 4
        %v1196 = vshll.u32 %v1137, 16
        %v1198 = vrot.slane %v1196, 5
        %v1199 = vor.u32 %v1195, %v1198
        %v1200 = vrot.slane %v1199, 4
        %v1202 = vshll.u32 %v1138, 16
        %v1204 = vrot.slane %v1202, 5
        %v1205 = vsel %vm1149, %v1200, %v1204
        %v1207 = vshrl.u32 %v1139, 16
        %v1209 = vrot.slane %v1207, 4
        %v1210 = vshll.u32 %v1139, 16
        %v1212 = vrot.slane %v1210, 5
        %v1213 = vor.u32 %v1209, %v1212
        %v1214 = vrot.slane %v1213, 4
        %v1216 = vshll.u32 %v1140, 16
        %v1218 = vrot.slane %v1216, 5
        %v1219 = vsel %vm1149, %v1214, %v1218
        %v1221 = vshrl.u32 %v1141, 16
        %v1223 = vrot.slane %v1221, 4
        %v1224 = vshll.u32 %v1141, 16
        %v1226 = vrot.slane %v1224, 5
        %v1227 = vor.u32 %v1223, %v1226
        %v1228 = vrot.slane %v1227, 4
        %v1230 = vshll.u32 %v1142, 16
        %v1232 = vrot.slane %v1230, 5
        %v1233 = vsel %vm1149, %v1228, %v1232
        %v1235 = vshrl.u32 %v1143, 16
        %v1237 = vrot.slane %v1235, 4
        %v1238 = vshll.u32 %v1143, 16
        %v1240 = vrot.slane %v1238, 5
        %v1241 = vor.u32 %v1237, %v1240
        %v1242 = vrot.slane %v1241, 4
        %v1244 = vshll.u32 %v1144, 16
        %v1246 = vrot.slane %v1244, 5
        %v1247 = vsel %vm1149, %v1242, %v1246
        %v1249 = vshrl.u32 %v1145, 16
        %v1251 = vrot.slane %v1249, 4
        %v1252 = vshll.u32 %v1145, 16
        %v1254 = vrot.slane %v1252, 5
        %v1255 = vor.u32 %v1251, %v1254
        %v1256 = vrot.slane %v1255, 4
        %v1258 = vshll.u32 %v1146, 16
        %v1260 = vrot.slane %v1258, 5
        %v1261 = vsel %vm1149, %v1256, %v1260
        %1262 = vrot.lane.b32.xlu0 %v1163, 32
        %v1263 = vpop.permute.xlu0 %1262
        %1264 = vrot.lane.b32.xlu0 %v1177, 32
        %v1265 = vpop.permute.xlu0 %1264
        %1266 = vrot.lane.b32.xlu0 %v1191, 32
        %v1267 = vpop.permute.xlu0 %1266
        %1268 = vrot.lane.b32.xlu0 %v1205, 32
        %v1269 = vpop.permute.xlu0 %1268
        %1270 = vrot.lane.b32.xlu0 %v1219, 32
        %v1271 = vpop.permute.xlu0 %1270
        %1272 = vrot.lane.b32.xlu0 %v1233, 32
        %v1273 = vpop.permute.xlu0 %1272
        %1274 = vrot.lane.b32.xlu0 %v1247, 32
        %v1275 = vpop.permute.xlu0 %1274
        %1276 = vrot.lane.b32.xlu0 %v1261, 32
        %v1277 = vpop.permute.xlu0 %1276
        %vm1286 = vcmask 519424
        %1287 = vst.msk [vmem:[#allocation3] sm:$0xf] %vm1286, %v1263
        %1288 = vst.msk [vmem:[#allocation3 + $0xc] sm:$0xf] %vm1286, %v1265
        %1289 = vst.msk [vmem:[#allocation3 + $0x18] sm:$0xf] %vm1286, %v1267
        %1290 = vst.msk [vmem:[#allocation3 + $0x24] sm:$0xf] %vm1286, %v1269
        %1291 = vst.msk [vmem:[#allocation3 + $0x30] sm:$0xf] %vm1286, %v1271
        %1292 = vst.msk [vmem:[#allocation3 + $0x3c] sm:$0xf] %vm1286, %v1273
        %1293 = vst.msk [vmem:[#allocation3 + $0x48] sm:$0xf] %vm1286, %v1275
        %1294 = vst.msk [vmem:[#allocation3 + $0x54] sm:$0xf] %vm1286, %v1277
        %v1295 = vld [vmem:[#allocation2] sm:$0xe]
        %v1296 = vld [vmem:[#allocation2 + $0x4] sm:$0x1]
        %v1297 = vld [vmem:[#allocation2 + $0x8] sm:$0xe]
        %v1298 = vld [vmem:[#allocation2 + $0xc] sm:$0x1]
        %v1299 = vld [vmem:[#allocation2 + $0x10] sm:$0xe]
        %v1300 = vld [vmem:[#allocation2 + $0x14] sm:$0x1]
        %v1301 = vld [vmem:[#allocation2 + $0x18] sm:$0xe]
        %v1302 = vld [vmem:[#allocation2 + $0x1c] sm:$0x1]
        %v1303 = vld [vmem:[#allocation2 + $0x20] sm:$0xe]
        %v1304 = vld [vmem:[#allocation2 + $0x24] sm:$0x1]
        %v1305 = vld [vmem:[#allocation2 + $0x28] sm:$0xe]
        %v1306 = vld [vmem:[#allocation2 + $0x2c] sm:$0x1]
        %v1307 = vld [vmem:[#allocation2 + $0x30] sm:$0xe]
        %v1308 = vld [vmem:[#allocation2 + $0x34] sm:$0x1]
        %v1309 = vld [vmem:[#allocation2 + $0x38] sm:$0xe]
        %v1310 = vld [vmem:[#allocation2 + $0x3c] sm:$0x1]
        %vm1327 = vcmask 1042432
        %vm1328 = vcmask 1046532
        %vm1329 = vmor %vm1327, %vm1328
        %v1330 = vrot.slane %v1295, 5
        %v1331 = vrot.slane %v1330, 4
        %v1332 = vrot.slane %v1296, 5
        %v1333 = vsel %vm1329, %v1331, %v1332
        %v1334 = vrot.slane %v1297, 5
        %v1335 = vrot.slane %v1334, 4
        %v1336 = vrot.slane %v1298, 5
        %v1337 = vsel %vm1329, %v1335, %v1336
        %v1338 = vrot.slane %v1299, 5
        %v1339 = vrot.slane %v1338, 4
        %v1340 = vrot.slane %v1300, 5
        %v1341 = vsel %vm1329, %v1339, %v1340
        %v1342 = vrot.slane %v1301, 5
        %v1343 = vrot.slane %v1342, 4
        %v1344 = vrot.slane %v1302, 5
        %v1345 = vsel %vm1329, %v1343, %v1344
        %v1346 = vrot.slane %v1303, 5
        %v1347 = vrot.slane %v1346, 4
        %v1348 = vrot.slane %v1304, 5
        %v1349 = vsel %vm1329, %v1347, %v1348
        %v1350 = vrot.slane %v1305, 5
        %v1351 = vrot.slane %v1350, 4
        %v1352 = vrot.slane %v1306, 5
        %v1353 = vsel %vm1329, %v1351, %v1352
        %v1354 = vrot.slane %v1307, 5
        %v1355 = vrot.slane %v1354, 4
        %v1356 = vrot.slane %v1308, 5
        %v1357 = vsel %vm1329, %v1355, %v1356
        %v1358 = vrot.slane %v1309, 5
        %v1359 = vrot.slane %v1358, 4
        %v1360 = vrot.slane %v1310, 5
        %v1361 = vsel %vm1329, %v1359, %v1360
        %1362 = vrot.lane.b32.xlu0 %v1333, 64
        %v1363 = vpop.permute.xlu0 %1362
        %1364 = vrot.lane.b32.xlu0 %v1337, 64
        %v1365 = vpop.permute.xlu0 %1364
        %1366 = vrot.lane.b32.xlu0 %v1341, 64
        %v1367 = vpop.permute.xlu0 %1366
        %1368 = vrot.lane.b32.xlu0 %v1345, 64
        %v1369 = vpop.permute.xlu0 %1368
        %1370 = vrot.lane.b32.xlu0 %v1349, 64
        %v1371 = vpop.permute.xlu0 %1370
        %1372 = vrot.lane.b32.xlu0 %v1353, 64
        %v1373 = vpop.permute.xlu0 %1372
        %1374 = vrot.lane.b32.xlu0 %v1357, 64
        %v1375 = vpop.permute.xlu0 %1374
        %1376 = vrot.lane.b32.xlu0 %v1361, 64
        %v1377 = vpop.permute.xlu0 %1376
        %vm1386 = vcmask 781824
        %1387 = vst.msk [vmem:[#allocation3] sm:$0xf] %vm1386, %v1363
        %1388 = vst.msk [vmem:[#allocation3 + $0xc] sm:$0xf] %vm1386, %v1365
        %1389 = vst.msk [vmem:[#allocation3 + $0x18] sm:$0xf] %vm1386, %v1367
        %1390 = vst.msk [vmem:[#allocation3 + $0x24] sm:$0xf] %vm1386, %v1369
        %1391 = vst.msk [vmem:[#allocation3 + $0x30] sm:$0xf] %vm1386, %v1371
        %1392 = vst.msk [vmem:[#allocation3 + $0x3c] sm:$0xf] %vm1386, %v1373
        %1393 = vst.msk [vmem:[#allocation3 + $0x48] sm:$0xf] %vm1386, %v1375
        %1394 = vst.msk [vmem:[#allocation3 + $0x54] sm:$0xf] %vm1386, %v1377
        %v1395 = vld [vmem:[%s923] sm:$0xf]
        %v1396 = vld [vmem:[%s923 + $0x8] sm:$0xf]
        %v1397 = vld [vmem:[%s923 + $0x10] sm:$0xf]
        %v1398 = vld [vmem:[%s923 + $0x18] sm:$0xf]
        %v1399 = vld [vmem:[%s923 + $0x20] sm:$0xf]
        %v1400 = vld [vmem:[%s923 + $0x28] sm:$0xf]
        %v1401 = vld [vmem:[%s923 + $0x30] sm:$0xf]
        %v1402 = vld [vmem:[%s923 + $0x38] sm:$0xf]
        %1411 = vrot.lane.b32.xlu0 %v1395, 96
        %v1412 = vpop.permute.xlu0 %1411
        %1413 = vrot.lane.b32.xlu0 %v1396, 96
        %v1414 = vpop.permute.xlu0 %1413
        %1415 = vrot.lane.b32.xlu0 %v1397, 96
        %v1416 = vpop.permute.xlu0 %1415
        %1417 = vrot.lane.b32.xlu0 %v1398, 96
        %v1418 = vpop.permute.xlu0 %1417
        %1419 = vrot.lane.b32.xlu0 %v1399, 96
        %v1420 = vpop.permute.xlu0 %1419
        %1421 = vrot.lane.b32.xlu0 %v1400, 96
        %v1422 = vpop.permute.xlu0 %1421
        %1423 = vrot.lane.b32.xlu0 %v1401, 96
        %v1424 = vpop.permute.xlu0 %1423
        %1425 = vrot.lane.b32.xlu0 %v1402, 96
        %v1426 = vpop.permute.xlu0 %1425
        %vm1435 = vcmask 1044224
        %1436 = vst.msk [vmem:[#allocation3] sm:$0xf] %vm1435, %v1412
        %1437 = vst.msk [vmem:[#allocation3 + $0xc] sm:$0xf] %vm1435, %v1414
        %1438 = vst.msk [vmem:[#allocation3 + $0x18] sm:$0xf] %vm1435, %v1416
        %1439 = vst.msk [vmem:[#allocation3 + $0x24] sm:$0xf] %vm1435, %v1418
        %1440 = vst.msk [vmem:[#allocation3 + $0x30] sm:$0xf] %vm1435, %v1420
        %1441 = vst.msk [vmem:[#allocation3 + $0x3c] sm:$0xf] %vm1435, %v1422
        %1442 = vst.msk [vmem:[#allocation3 + $0x48] sm:$0xf] %vm1435, %v1424
        %1443 = vst.msk [vmem:[#allocation3 + $0x54] sm:$0xf] %vm1435, %v1426
        %v1444 = vld [vmem:[%s923] sm:$0xf]
        %v1445 = vld [vmem:[%s923 + $0x4] sm:$0x1]
        %v1446 = vld [vmem:[%s923 + $0x8] sm:$0xf]
        %v1447 = vld [vmem:[%s923 + $0xc] sm:$0x1]
        %v1448 = vld [vmem:[%s923 + $0x10] sm:$0xf]
        %v1449 = vld [vmem:[%s923 + $0x14] sm:$0x1]
        %v1450 = vld [vmem:[%s923 + $0x18] sm:$0xf]
        %v1451 = vld [vmem:[%s923 + $0x1c] sm:$0x1]
        %v1452 = vld [vmem:[%s923 + $0x20] sm:$0xf]
        %v1453 = vld [vmem:[%s923 + $0x24] sm:$0x1]
        %v1454 = vld [vmem:[%s923 + $0x28] sm:$0xf]
        %v1455 = vld [vmem:[%s923 + $0x2c] sm:$0x1]
        %v1456 = vld [vmem:[%s923 + $0x30] sm:$0xf]
        %v1457 = vld [vmem:[%s923 + $0x34] sm:$0x1]
        %v1458 = vld [vmem:[%s923 + $0x38] sm:$0xf]
        %v1459 = vld [vmem:[%s923 + $0x3c] sm:$0x1]
        %v1461 = vshrl.u32 %v1444, 16
        %v1463 = vrot.slane %v1461, 4
        %v1464 = vshll.u32 %v1444, 16
        %v1466 = vrot.slane %v1464, 5
        %v1467 = vor.u32 %v1463, %v1466
        %v1468 = vrot.slane %v1467, 4
        %v1470 = vshll.u32 %v1445, 16
        %v1472 = vrot.slane %v1470, 5
        %v1473 = vsel %vm1149, %v1468, %v1472
        %v1475 = vshrl.u32 %v1446, 16
        %v1477 = vrot.slane %v1475, 4
        %v1478 = vshll.u32 %v1446, 16
        %v1480 = vrot.slane %v1478, 5
        %v1481 = vor.u32 %v1477, %v1480
        %v1482 = vrot.slane %v1481, 4
        %v1484 = vshll.u32 %v1447, 16
        %v1486 = vrot.slane %v1484, 5
        %v1487 = vsel %vm1149, %v1482, %v1486
        %v1489 = vshrl.u32 %v1448, 16
        %v1491 = vrot.slane %v1489, 4
        %v1492 = vshll.u32 %v1448, 16
        %v1494 = vrot.slane %v1492, 5
        %v1495 = vor.u32 %v1491, %v1494
        %v1496 = vrot.slane %v1495, 4
        %v1498 = vshll.u32 %v1449, 16
        %v1500 = vrot.slane %v1498, 5
        %v1501 = vsel %vm1149, %v1496, %v1500
        %v1503 = vshrl.u32 %v1450, 16
        %v1505 = vrot.slane %v1503, 4
        %v1506 = vshll.u32 %v1450, 16
        %v1508 = vrot.slane %v1506, 5
        %v1509 = vor.u32 %v1505, %v1508
        %v1510 = vrot.slane %v1509, 4
        %v1512 = vshll.u32 %v1451, 16
        %v1514 = vrot.slane %v1512, 5
        %v1515 = vsel %vm1149, %v1510, %v1514
        %v1517 = vshrl.u32 %v1452, 16
        %v1519 = vrot.slane %v1517, 4
        %v1520 = vshll.u32 %v1452, 16
        %v1522 = vrot.slane %v1520, 5
        %v1523 = vor.u32 %v1519, %v1522
        %v1524 = vrot.slane %v1523, 4
        %v1526 = vshll.u32 %v1453, 16
        %v1528 = vrot.slane %v1526, 5
        %v1529 = vsel %vm1149, %v1524, %v1528
        %v1531 = vshrl.u32 %v1454, 16
        %v1533 = vrot.slane %v1531, 4
        %v1534 = vshll.u32 %v1454, 16
        %v1536 = vrot.slane %v1534, 5
        %v1537 = vor.u32 %v1533, %v1536
        %v1538 = vrot.slane %v1537, 4
        %v1540 = vshll.u32 %v1455, 16
        %v1542 = vrot.slane %v1540, 5
        %v1543 = vsel %vm1149, %v1538, %v1542
        %v1545 = vshrl.u32 %v1456, 16
        %v1547 = vrot.slane %v1545, 4
        %v1548 = vshll.u32 %v1456, 16
        %v1550 = vrot.slane %v1548, 5
        %v1551 = vor.u32 %v1547, %v1550
        %v1552 = vrot.slane %v1551, 4
        %v1554 = vshll.u32 %v1457, 16
        %v1556 = vrot.slane %v1554, 5
        %v1557 = vsel %vm1149, %v1552, %v1556
        %v1559 = vshrl.u32 %v1458, 16
        %v1561 = vrot.slane %v1559, 4
        %v1562 = vshll.u32 %v1458, 16
        %v1564 = vrot.slane %v1562, 5
        %v1565 = vor.u32 %v1561, %v1564
        %v1566 = vrot.slane %v1565, 4
        %v1568 = vshll.u32 %v1459, 16
        %v1570 = vrot.slane %v1568, 5
        %v1571 = vsel %vm1149, %v1566, %v1570
        %1580 = vst.msk [vmem:[#allocation3 + $0x4] sm:$0xf] %vm916, %v1473
        %1581 = vst.msk [vmem:[#allocation3 + $0x10] sm:$0xf] %vm916, %v1487
        %1582 = vst.msk [vmem:[#allocation3 + $0x1c] sm:$0xf] %vm916, %v1501
        %1583 = vst.msk [vmem:[#allocation3 + $0x28] sm:$0xf] %vm916, %v1515
        %1584 = vst.msk [vmem:[#allocation3 + $0x34] sm:$0xf] %vm916, %v1529
        %1585 = vst.msk [vmem:[#allocation3 + $0x40] sm:$0xf] %vm916, %v1543
        %1586 = vst.msk [vmem:[#allocation3 + $0x4c] sm:$0xf] %vm916, %v1557
        %1587 = vst.msk [vmem:[#allocation3 + $0x58] sm:$0xf] %vm916, %v1571
        %v1588 = vld [vmem:[%s923] sm:$0xe]
        %v1589 = vld [vmem:[%s923 + $0x4] sm:$0x1]
        %v1590 = vld [vmem:[%s923 + $0x8] sm:$0xe]
        %v1591 = vld [vmem:[%s923 + $0xc] sm:$0x1]
        %v1592 = vld [vmem:[%s923 + $0x10] sm:$0xe]
        %v1593 = vld [vmem:[%s923 + $0x14] sm:$0x1]
        %v1594 = vld [vmem:[%s923 + $0x18] sm:$0xe]
        %v1595 = vld [vmem:[%s923 + $0x1c] sm:$0x1]
        %v1596 = vld [vmem:[%s923 + $0x20] sm:$0xe]
        %v1597 = vld [vmem:[%s923 + $0x24] sm:$0x1]
        %v1598 = vld [vmem:[%s923 + $0x28] sm:$0xe]
        %v1599 = vld [vmem:[%s923 + $0x2c] sm:$0x1]
        %v1600 = vld [vmem:[%s923 + $0x30] sm:$0xe]
        %v1601 = vld [vmem:[%s923 + $0x34] sm:$0x1]
        %v1602 = vld [vmem:[%s923 + $0x38] sm:$0xe]
        %v1603 = vld [vmem:[%s923 + $0x3c] sm:$0x1]
        %v1620 = vrot.slane %v1588, 5
        %v1621 = vrot.slane %v1620, 4
        %v1622 = vrot.slane %v1589, 5
        %v1623 = vsel %vm1329, %v1621, %v1622
        %v1624 = vrot.slane %v1590, 5
        %v1625 = vrot.slane %v1624, 4
        %v1626 = vrot.slane %v1591, 5
        %v1627 = vsel %vm1329, %v1625, %v1626
        %v1628 = vrot.slane %v1592, 5
        %v1629 = vrot.slane %v1628, 4
        %v1630 = vrot.slane %v1593, 5
        %v1631 = vsel %vm1329, %v1629, %v1630
        %v1632 = vrot.slane %v1594, 5
        %v1633 = vrot.slane %v1632, 4
        %v1634 = vrot.slane %v1595, 5
        %v1635 = vsel %vm1329, %v1633, %v1634
        %v1636 = vrot.slane %v1596, 5
        %v1637 = vrot.slane %v1636, 4
        %v1638 = vrot.slane %v1597, 5
        %v1639 = vsel %vm1329, %v1637, %v1638
        %v1640 = vrot.slane %v1598, 5
        %v1641 = vrot.slane %v1640, 4
        %v1642 = vrot.slane %v1599, 5
        %v1643 = vsel %vm1329, %v1641, %v1642
        %v1644 = vrot.slane %v1600, 5
        %v1645 = vrot.slane %v1644, 4
        %v1646 = vrot.slane %v1601, 5
        %v1647 = vsel %vm1329, %v1645, %v1646
        %v1648 = vrot.slane %v1602, 5
        %v1649 = vrot.slane %v1648, 4
        %v1650 = vrot.slane %v1603, 5
        %v1651 = vsel %vm1329, %v1649, %v1650
        %1652 = vrot.lane.b32.xlu0 %v1623, 32
        %v1653 = vpop.permute.xlu0 %1652
        %1654 = vrot.lane.b32.xlu0 %v1627, 32
        %v1655 = vpop.permute.xlu0 %1654
        %1656 = vrot.lane.b32.xlu0 %v1631, 32
        %v1657 = vpop.permute.xlu0 %1656
        %1658 = vrot.lane.b32.xlu0 %v1635, 32
        %v1659 = vpop.permute.xlu0 %1658
        %1660 = vrot.lane.b32.xlu0 %v1639, 32
        %v1661 = vpop.permute.xlu0 %1660
        %1662 = vrot.lane.b32.xlu0 %v1643, 32
        %v1663 = vpop.permute.xlu0 %1662
        %1664 = vrot.lane.b32.xlu0 %v1647, 32
        %v1665 = vpop.permute.xlu0 %1664
        %1666 = vrot.lane.b32.xlu0 %v1651, 32
        %v1667 = vpop.permute.xlu0 %1666
        %1676 = vst.msk [vmem:[#allocation3 + $0x4] sm:$0xf] %vm1286, %v1653
        %1677 = vst.msk [vmem:[#allocation3 + $0x10] sm:$0xf] %vm1286, %v1655
        %1678 = vst.msk [vmem:[#allocation3 + $0x1c] sm:$0xf] %vm1286, %v1657
        %1679 = vst.msk [vmem:[#allocation3 + $0x28] sm:$0xf] %vm1286, %v1659
        %1680 = vst.msk [vmem:[#allocation3 + $0x34] sm:$0xf] %vm1286, %v1661
        %1681 = vst.msk [vmem:[#allocation3 + $0x40] sm:$0xf] %vm1286, %v1663
        %1682 = vst.msk [vmem:[#allocation3 + $0x4c] sm:$0xf] %vm1286, %v1665
        %1683 = vst.msk [vmem:[#allocation3 + $0x58] sm:$0xf] %vm1286, %v1667
        %s1684 = scalar_lea.vmem [#allocation2], 16
        %v1685 = vld [vmem:[%s1684] sm:$0xf]
        %v1686 = vld [vmem:[%s1684 + $0x8] sm:$0xf]
        %v1687 = vld [vmem:[%s1684 + $0x10] sm:$0xf]
        %v1688 = vld [vmem:[%s1684 + $0x18] sm:$0xf]
        %v1689 = vld [vmem:[%s1684 + $0x20] sm:$0xf]
        %v1690 = vld [vmem:[%s1684 + $0x28] sm:$0xf]
        %v1691 = vld [vmem:[%s1684 + $0x30] sm:$0xf]
        %v1692 = vld [vmem:[%s1684 + $0x38] sm:$0xf]
        %1701 = vrot.lane.b32.xlu0 %v1685, 64
        %v1702 = vpop.permute.xlu0 %1701
        %1703 = vrot.lane.b32.xlu0 %v1686, 64
        %v1704 = vpop.permute.xlu0 %1703
        %1705 = vrot.lane.b32.xlu0 %v1687, 64
        %v1706 = vpop.permute.xlu0 %1705
        %1707 = vrot.lane.b32.xlu0 %v1688, 64
        %v1708 = vpop.permute.xlu0 %1707
        %1709 = vrot.lane.b32.xlu0 %v1689, 64
        %v1710 = vpop.permute.xlu0 %1709
        %1711 = vrot.lane.b32.xlu0 %v1690, 64
        %v1712 = vpop.permute.xlu0 %1711
        %1713 = vrot.lane.b32.xlu0 %v1691, 64
        %v1714 = vpop.permute.xlu0 %1713
        %1715 = vrot.lane.b32.xlu0 %v1692, 64
        %v1716 = vpop.permute.xlu0 %1715
        %1725 = vst.msk [vmem:[#allocation3 + $0x4] sm:$0xf] %vm1386, %v1702
        %1726 = vst.msk [vmem:[#allocation3 + $0x10] sm:$0xf] %vm1386, %v1704
        %1727 = vst.msk [vmem:[#allocation3 + $0x1c] sm:$0xf] %vm1386, %v1706
        %1728 = vst.msk [vmem:[#allocation3 + $0x28] sm:$0xf] %vm1386, %v1708
        %1729 = vst.msk [vmem:[#allocation3 + $0x34] sm:$0xf] %vm1386, %v1710
        %1730 = vst.msk [vmem:[#allocation3 + $0x40] sm:$0xf] %vm1386, %v1712
        %1731 = vst.msk [vmem:[#allocation3 + $0x4c] sm:$0xf] %vm1386, %v1714
        %1732 = vst.msk [vmem:[#allocation3 + $0x58] sm:$0xf] %vm1386, %v1716
        %v1733 = vld [vmem:[%s1684] sm:$0xf]
        %v1734 = vld [vmem:[%s1684 + $0x4] sm:$0x1]
        %v1735 = vld [vmem:[%s1684 + $0x8] sm:$0xf]
        %v1736 = vld [vmem:[%s1684 + $0xc] sm:$0x1]
        %v1737 = vld [vmem:[%s1684 + $0x10] sm:$0xf]
        %v1738 = vld [vmem:[%s1684 + $0x14] sm:$0x1]
        %v1739 = vld [vmem:[%s1684 + $0x18] sm:$0xf]
        %v1740 = vld [vmem:[%s1684 + $0x1c] sm:$0x1]
        %v1741 = vld [vmem:[%s1684 + $0x20] sm:$0xf]
        %v1742 = vld [vmem:[%s1684 + $0x24] sm:$0x1]
        %v1743 = vld [vmem:[%s1684 + $0x28] sm:$0xf]
        %v1744 = vld [vmem:[%s1684 + $0x2c] sm:$0x1]
        %v1745 = vld [vmem:[%s1684 + $0x30] sm:$0xf]
        %v1746 = vld [vmem:[%s1684 + $0x34] sm:$0x1]
        %v1747 = vld [vmem:[%s1684 + $0x38] sm:$0xf]
        %v1748 = vld [vmem:[%s1684 + $0x3c] sm:$0x1]
        %v1750 = vshrl.u32 %v1733, 16
        %v1752 = vrot.slane %v1750, 4
        %v1753 = vshll.u32 %v1733, 16
        %v1755 = vrot.slane %v1753, 5
        %v1756 = vor.u32 %v1752, %v1755
        %v1757 = vrot.slane %v1756, 4
        %v1759 = vshll.u32 %v1734, 16
        %v1761 = vrot.slane %v1759, 5
        %v1762 = vsel %vm1149, %v1757, %v1761
        %v1764 = vshrl.u32 %v1735, 16
        %v1766 = vrot.slane %v1764, 4
        %v1767 = vshll.u32 %v1735, 16
        %v1769 = vrot.slane %v1767, 5
        %v1770 = vor.u32 %v1766, %v1769
        %v1771 = vrot.slane %v1770, 4
        %v1773 = vshll.u32 %v1736, 16
        %v1775 = vrot.slane %v1773, 5
        %v1776 = vsel %vm1149, %v1771, %v1775
        %v1778 = vshrl.u32 %v1737, 16
        %v1780 = vrot.slane %v1778, 4
        %v1781 = vshll.u32 %v1737, 16
        %v1783 = vrot.slane %v1781, 5
        %v1784 = vor.u32 %v1780, %v1783
        %v1785 = vrot.slane %v1784, 4
        %v1787 = vshll.u32 %v1738, 16
        %v1789 = vrot.slane %v1787, 5
        %v1790 = vsel %vm1149, %v1785, %v1789
        %v1792 = vshrl.u32 %v1739, 16
        %v1794 = vrot.slane %v1792, 4
        %v1795 = vshll.u32 %v1739, 16
        %v1797 = vrot.slane %v1795, 5
        %v1798 = vor.u32 %v1794, %v1797
        %v1799 = vrot.slane %v1798, 4
        %v1801 = vshll.u32 %v1740, 16
        %v1803 = vrot.slane %v1801, 5
        %v1804 = vsel %vm1149, %v1799, %v1803
        %v1806 = vshrl.u32 %v1741, 16
        %v1808 = vrot.slane %v1806, 4
        %v1809 = vshll.u32 %v1741, 16
        %v1811 = vrot.slane %v1809, 5
        %v1812 = vor.u32 %v1808, %v1811
        %v1813 = vrot.slane %v1812, 4
        %v1815 = vshll.u32 %v1742, 16
        %v1817 = vrot.slane %v1815, 5
        %v1818 = vsel %vm1149, %v1813, %v1817
        %v1820 = vshrl.u32 %v1743, 16
        %v1822 = vrot.slane %v1820, 4
        %v1823 = vshll.u32 %v1743, 16
        %v1825 = vrot.slane %v1823, 5
        %v1826 = vor.u32 %v1822, %v1825
        %v1827 = vrot.slane %v1826, 4
        %v1829 = vshll.u32 %v1744, 16
        %v1831 = vrot.slane %v1829, 5
        %v1832 = vsel %vm1149, %v1827, %v1831
        %v1834 = vshrl.u32 %v1745, 16
        %v1836 = vrot.slane %v1834, 4
        %v1837 = vshll.u32 %v1745, 16
        %v1839 = vrot.slane %v1837, 5
        %v1840 = vor.u32 %v1836, %v1839
        %v1841 = vrot.slane %v1840, 4
        %v1843 = vshll.u32 %v1746, 16
        %v1845 = vrot.slane %v1843, 5
        %v1846 = vsel %vm1149, %v1841, %v1845
        %v1848 = vshrl.u32 %v1747, 16
        %v1850 = vrot.slane %v1848, 4
        %v1851 = vshll.u32 %v1747, 16
        %v1853 = vrot.slane %v1851, 5
        %v1854 = vor.u32 %v1850, %v1853
        %v1855 = vrot.slane %v1854, 4
        %v1857 = vshll.u32 %v1748, 16
        %v1859 = vrot.slane %v1857, 5
        %v1860 = vsel %vm1149, %v1855, %v1859
        %1861 = vrot.lane.b32.xlu0 %v1762, 96
        %v1862 = vpop.permute.xlu0 %1861
        %1863 = vrot.lane.b32.xlu0 %v1776, 96
        %v1864 = vpop.permute.xlu0 %1863
        %1865 = vrot.lane.b32.xlu0 %v1790, 96
        %v1866 = vpop.permute.xlu0 %1865
        %1867 = vrot.lane.b32.xlu0 %v1804, 96
        %v1868 = vpop.permute.xlu0 %1867
        %1869 = vrot.lane.b32.xlu0 %v1818, 96
        %v1870 = vpop.permute.xlu0 %1869
        %1871 = vrot.lane.b32.xlu0 %v1832, 96
        %v1872 = vpop.permute.xlu0 %1871
        %1873 = vrot.lane.b32.xlu0 %v1846, 96
        %v1874 = vpop.permute.xlu0 %1873
        %1875 = vrot.lane.b32.xlu0 %v1860, 96
        %v1876 = vpop.permute.xlu0 %1875
        %1885 = vst.msk [vmem:[#allocation3 + $0x4] sm:$0xf] %vm1435, %v1862
        %1886 = vst.msk [vmem:[#allocation3 + $0x10] sm:$0xf] %vm1435, %v1864
        %1887 = vst.msk [vmem:[#allocation3 + $0x1c] sm:$0xf] %vm1435, %v1866
        %1888 = vst.msk [vmem:[#allocation3 + $0x28] sm:$0xf] %vm1435, %v1868
        %1889 = vst.msk [vmem:[#allocation3 + $0x34] sm:$0xf] %vm1435, %v1870
        %1890 = vst.msk [vmem:[#allocation3 + $0x40] sm:$0xf] %vm1435, %v1872
        %1891 = vst.msk [vmem:[#allocation3 + $0x4c] sm:$0xf] %vm1435, %v1874
        %1892 = vst.msk [vmem:[#allocation3 + $0x58] sm:$0xf] %vm1435, %v1876
        %v1893 = vld [vmem:[%s1684] sm:$0xe]
        %v1894 = vld [vmem:[%s1684 + $0x4] sm:$0x1]
        %v1895 = vld [vmem:[%s1684 + $0x8] sm:$0xe]
        %v1896 = vld [vmem:[%s1684 + $0xc] sm:$0x1]
        %v1897 = vld [vmem:[%s1684 + $0x10] sm:$0xe]
        %v1898 = vld [vmem:[%s1684 + $0x14] sm:$0x1]
        %v1899 = vld [vmem:[%s1684 + $0x18] sm:$0xe]
        %v1900 = vld [vmem:[%s1684 + $0x1c] sm:$0x1]
        %v1901 = vld [vmem:[%s1684 + $0x20] sm:$0xe]
        %v1902 = vld [vmem:[%s1684 + $0x24] sm:$0x1]
        %v1903 = vld [vmem:[%s1684 + $0x28] sm:$0xe]
        %v1904 = vld [vmem:[%s1684 + $0x2c] sm:$0x1]
        %v1905 = vld [vmem:[%s1684 + $0x30] sm:$0xe]
        %v1906 = vld [vmem:[%s1684 + $0x34] sm:$0x1]
        %v1907 = vld [vmem:[%s1684 + $0x38] sm:$0xe]
        %v1908 = vld [vmem:[%s1684 + $0x3c] sm:$0x1]
        %v1925 = vrot.slane %v1893, 5
        %v1926 = vrot.slane %v1925, 4
        %v1927 = vrot.slane %v1894, 5
        %v1928 = vsel %vm1329, %v1926, %v1927
        %v1929 = vrot.slane %v1895, 5
        %v1930 = vrot.slane %v1929, 4
        %v1931 = vrot.slane %v1896, 5
        %v1932 = vsel %vm1329, %v1930, %v1931
        %v1933 = vrot.slane %v1897, 5
        %v1934 = vrot.slane %v1933, 4
        %v1935 = vrot.slane %v1898, 5
        %v1936 = vsel %vm1329, %v1934, %v1935
        %v1937 = vrot.slane %v1899, 5
        %v1938 = vrot.slane %v1937, 4
        %v1939 = vrot.slane %v1900, 5
        %v1940 = vsel %vm1329, %v1938, %v1939
        %v1941 = vrot.slane %v1901, 5
        %v1942 = vrot.slane %v1941, 4
        %v1943 = vrot.slane %v1902, 5
        %v1944 = vsel %vm1329, %v1942, %v1943
        %v1945 = vrot.slane %v1903, 5
        %v1946 = vrot.slane %v1945, 4
        %v1947 = vrot.slane %v1904, 5
        %v1948 = vsel %vm1329, %v1946, %v1947
        %v1949 = vrot.slane %v1905, 5
        %v1950 = vrot.slane %v1949, 4
        %v1951 = vrot.slane %v1906, 5
        %v1952 = vsel %vm1329, %v1950, %v1951
        %v1953 = vrot.slane %v1907, 5
        %v1954 = vrot.slane %v1953, 4
        %v1955 = vrot.slane %v1908, 5
        %v1956 = vsel %vm1329, %v1954, %v1955
        %1965 = vst.msk [vmem:[#allocation3 + $0x8] sm:$0xf] %vm916, %v1928
        %1966 = vst.msk [vmem:[#allocation3 + $0x14] sm:$0xf] %vm916, %v1932
        %1967 = vst.msk [vmem:[#allocation3 + $0x20] sm:$0xf] %vm916, %v1936
        %1968 = vst.msk [vmem:[#allocation3 + $0x2c] sm:$0xf] %vm916, %v1940
        %1969 = vst.msk [vmem:[#allocation3 + $0x38] sm:$0xf] %vm916, %v1944
        %1970 = vst.msk [vmem:[#allocation3 + $0x44] sm:$0xf] %vm916, %v1948
        %1971 = vst.msk [vmem:[#allocation3 + $0x50] sm:$0xf] %vm916, %v1952
        %1972 = vst.msk [vmem:[#allocation3 + $0x5c] sm:$0xf] %vm916, %v1956
        %v1973 = vld [vmem:[#allocation3] sm:$0xff]
        %v1974 = vld [vmem:[#allocation3 + $0x8] sm:$0xf]
        %v1975 = vld [vmem:[#allocation3 + $0xc] sm:$0xff]
        %v1976 = vld [vmem:[#allocation3 + $0x14] sm:$0xf]
        %v1977 = vld [vmem:[#allocation3 + $0x18] sm:$0xff]
        %v1978 = vld [vmem:[#allocation3 + $0x20] sm:$0xf]
        %v1979 = vld [vmem:[#allocation3 + $0x24] sm:$0xff]
        %v1980 = vld [vmem:[#allocation3 + $0x2c] sm:$0xf]
        %v1981 = vld [vmem:[#allocation3 + $0x30] sm:$0xff]
        %v1982 = vld [vmem:[#allocation3 + $0x38] sm:$0xf]
        %v1983 = vld [vmem:[#allocation3 + $0x3c] sm:$0xff]
        %v1984 = vld [vmem:[#allocation3 + $0x44] sm:$0xf]
        %v1985 = vld [vmem:[#allocation3 + $0x48] sm:$0xff]
        %v1986 = vld [vmem:[#allocation3 + $0x50] sm:$0xf]
        %v1987 = vld [vmem:[#allocation3 + $0x54] sm:$0xff]
        %v1988 = vld [vmem:[#allocation3 + $0x5c] sm:$0xf]
        %v1989 = vld [vmem:[%s6] sm:$0xf]
        %v1990 = vld [vmem:[%s6 + $0x4] sm:$0xf]
        %v1991 = vld [vmem:[%s6 + $0x8] sm:$0xf]
        %v1992 = vld [vmem:[%s6 + $0xc] sm:$0xf]
        %v1993 = vld [vmem:[%s6 + $0x10] sm:$0xf]
        %v1994 = vld [vmem:[%s6 + $0x14] sm:$0xf]
        %v1995 = vld [vmem:[%s6 + $0x18] sm:$0xf]
        %v1996 = vld [vmem:[%s6 + $0x1c] sm:$0xf]
        %v1997 = vld [vmem:[%s6 + $0x20] sm:$0xf]
        %v1998 = vld [vmem:[%s6 + $0x24] sm:$0xf]
        %v1999 = vld [vmem:[%s6 + $0x28] sm:$0xf]
        %v2000 = vld [vmem:[%s6 + $0x2c] sm:$0xf]
        %v2001 = vld [vmem:[%s6 + $0x30] sm:$0xf]
        %v2002 = vld [vmem:[%s6 + $0x34] sm:$0xf]
        %v2003 = vld [vmem:[%s6 + $0x38] sm:$0xf]
        %v2004 = vld [vmem:[%s6 + $0x3c] sm:$0xf]
        %v2005 = vld [vmem:[%s6 + $0x40] sm:$0xf]
        %v2006 = vld [vmem:[%s6 + $0x44] sm:$0xf]
        %v2007 = vld [vmem:[%s6 + $0x48] sm:$0xf]
        %v2008 = vld [vmem:[%s6 + $0x4c] sm:$0xf]
        %v2009 = vld [vmem:[%s6 + $0x50] sm:$0xf]
        %v2010 = vld [vmem:[%s6 + $0x54] sm:$0xf]
        %v2011 = vld [vmem:[%s6 + $0x58] sm:$0xf]
        %v2012 = vld [vmem:[%s6 + $0x5c] sm:$0xf]
        %v2013 = vld [vmem:[%s6 + $0x60] sm:$0xf]
        %v2014 = vld [vmem:[%s6 + $0x64] sm:$0xf]
        %v2015 = vld [vmem:[%s6 + $0x68] sm:$0xf]
        %v2016 = vld [vmem:[%s6 + $0x6c] sm:$0xf]
        %v2017 = vld [vmem:[%s6 + $0x70] sm:$0xf]
        %v2018 = vld [vmem:[%s6 + $0x74] sm:$0xf]
        %v2019 = vld [vmem:[%s6 + $0x78] sm:$0xf]
        %v2020 = vld [vmem:[%s6 + $0x7c] sm:$0xf]
        %v2021 = vld [vmem:[%s6 + $0x80] sm:$0xf]
        %v2022 = vld [vmem:[%s6 + $0x84] sm:$0xf]
        %v2023 = vld [vmem:[%s6 + $0x88] sm:$0xf]
        %v2024 = vld [vmem:[%s6 + $0x8c] sm:$0xf]
        %v2026 = vperm.slane %v915, 0
        %v2044 = vunpack.c.l.b16 %v1973
        %v2045 = vunpack.c.h.b16 %v1973
        %v2046 = vunpack.c.l.b16 %v1974
        %v2047 = vunpack.c.l.b16 %v1975
        %v2048 = vunpack.c.h.b16 %v1975
        %v2049 = vunpack.c.l.b16 %v1976
        %v2050 = vunpack.c.l.b16 %v1977
        %v2051 = vunpack.c.h.b16 %v1977
        %v2052 = vunpack.c.l.b16 %v1978
        %v2053 = vunpack.c.l.b16 %v1979
        %v2054 = vunpack.c.h.b16 %v1979
        %v2055 = vunpack.c.l.b16 %v1980
        %v2056 = vunpack.c.l.b16 %v1981
        %v2057 = vunpack.c.h.b16 %v1981
        %v2058 = vunpack.c.l.b16 %v1982
        %v2059 = vunpack.c.l.b16 %v1983
        %v2060 = vunpack.c.h.b16 %v1983
        %v2061 = vunpack.c.l.b16 %v1984
        %v2062 = vunpack.c.l.b16 %v1985
        %v2063 = vunpack.c.h.b16 %v1985
        %v2064 = vunpack.c.l.b16 %v1986
        %v2065 = vunpack.c.l.b16 %v1987
        %v2066 = vunpack.c.h.b16 %v1987
        %v2067 = vunpack.c.l.b16 %v1988
        %v2068 = vpack.c.b16 %v2047, %v2044
        %v2069 = vpack.c.b16 %v2048, %v2045
        %v2070 = vpack.c.b16 %v2049, %v2046
        %v2071 = vpack.c.b16 %v2053, %v2050
        %v2072 = vpack.c.b16 %v2054, %v2051
        %v2073 = vpack.c.b16 %v2055, %v2052
        %v2074 = vpack.c.b16 %v2059, %v2056
        %v2075 = vpack.c.b16 %v2060, %v2057
        %v2076 = vpack.c.b16 %v2061, %v2058
        %v2077 = vpack.c.b16 %v2065, %v2062
        %v2078 = vpack.c.b16 %v2066, %v2063
        %v2079 = vpack.c.b16 %v2067, %v2064
        %v2124 = vunpack.c.l.b16 %v1989
        %v2125 = vunpack.c.l.b16 %v1990
        %v2126 = vunpack.c.l.b16 %v1991
        %v2127 = vunpack.c.l.b16 %v1992
        %v2128 = vunpack.c.l.b16 %v1993
        %v2129 = vunpack.c.l.b16 %v1994
        %v2130 = vunpack.c.l.b16 %v1995
        %v2131 = vunpack.c.l.b16 %v1996
        %v2132 = vunpack.c.l.b16 %v1997
        %v2133 = vunpack.c.l.b16 %v1998
        %v2134 = vunpack.c.l.b16 %v1999
        %v2135 = vunpack.c.l.b16 %v2000
        %v2136 = vunpack.c.l.b16 %v2001
        %v2137 = vunpack.c.l.b16 %v2002
        %v2138 = vunpack.c.l.b16 %v2003
        %v2139 = vunpack.c.l.b16 %v2004
        %v2140 = vunpack.c.l.b16 %v2005
        %v2141 = vunpack.c.l.b16 %v2006
        %v2142 = vunpack.c.l.b16 %v2007
        %v2143 = vunpack.c.l.b16 %v2008
        %v2144 = vunpack.c.l.b16 %v2009
        %v2145 = vunpack.c.l.b16 %v2010
        %v2146 = vunpack.c.l.b16 %v2011
        %v2147 = vunpack.c.l.b16 %v2012
        %v2148 = vunpack.c.l.b16 %v2013
        %v2149 = vunpack.c.l.b16 %v2014
        %v2150 = vunpack.c.l.b16 %v2015
        %v2151 = vunpack.c.l.b16 %v2016
        %v2152 = vunpack.c.l.b16 %v2017
        %v2153 = vunpack.c.l.b16 %v2018
        %v2154 = vunpack.c.l.b16 %v2019
        %v2155 = vunpack.c.l.b16 %v2020
        %v2156 = vunpack.c.l.b16 %v2021
        %v2157 = vunpack.c.l.b16 %v2022
        %v2158 = vunpack.c.l.b16 %v2023
        %v2159 = vunpack.c.l.b16 %v2024
        %v2160 = vpack.c.b16 %v2125, %v2124
        %v2161 = vpack.c.b16 %v2127, %v2126
        %v2162 = vpack.c.b16 %v2129, %v2128
        %v2163 = vpack.c.b16 %v2131, %v2130
        %v2164 = vpack.c.b16 %v2133, %v2132
        %v2165 = vpack.c.b16 %v2135, %v2134
        %v2166 = vpack.c.b16 %v2137, %v2136
        %v2167 = vpack.c.b16 %v2139, %v2138
        %v2168 = vpack.c.b16 %v2141, %v2140
        %v2169 = vpack.c.b16 %v2143, %v2142
        %v2170 = vpack.c.b16 %v2145, %v2144
        %v2171 = vpack.c.b16 %v2147, %v2146
        %v2172 = vpack.c.b16 %v2149, %v2148
        %v2173 = vpack.c.b16 %v2151, %v2150
        %v2174 = vpack.c.b16 %v2153, %v2152
        %v2175 = vpack.c.b16 %v2155, %v2154
        %v2176 = vpack.c.b16 %v2157, %v2156
        %v2177 = vpack.c.b16 %v2159, %v2158
        %v2197 = vsel %vm553, %v2070, 0
        %v2200 = vsel %vm553, %v2073, 0
        %v2203 = vsel %vm553, %v2076, 0
        %v2206 = vsel %vm553, %v2079, 0
        %2208 = vmatpush.bf16.msra.mxu0 %v2167
        %2209 = vmatpush.bf16.msra.mxu0 %v2166
        %2210 = vmatpush.bf16.msra.mxu0 %v2165
        %2211 = vmatpush.bf16.msra.mxu0 %v2164
        %2212 = vmatpush.bf16.msra.mxu0 %v2163
        %2213 = vmatpush.bf16.msra.mxu0 %v2162
        %2214 = vmatpush.bf16.msra.mxu0 %v2161
        %2215 = vmatpush.bf16.msra.mxu0 %v2160
        %2216 = vmatmul.bf16.gmra.mxu0 %v2068
        %v2217 = vpop.f32.mrf.mxu0
        %v2218 = vadd.f32 %v2026, %v2217
        %v2219 = vpop.f32.mrf.mxu0
        %v2220 = vadd.f32 %v2026, %v2219
        %2221 = vmatmul.bf16.gmra.mxu0 %v2071
        %v2222 = vpop.f32.mrf.mxu0
        %v2223 = vadd.f32 %v2026, %v2222
        %v2224 = vpop.f32.mrf.mxu0
        %v2225 = vadd.f32 %v2026, %v2224
        %2226 = vmatmul.bf16.gmra.mxu0 %v2074
        %v2227 = vpop.f32.mrf.mxu0
        %v2228 = vadd.f32 %v2026, %v2227
        %v2229 = vpop.f32.mrf.mxu0
        %v2230 = vadd.f32 %v2026, %v2229
        %2231 = vmatmul.bf16.gmra.mxu0 %v2077
        %v2232 = vpop.f32.mrf.mxu0
        %v2233 = vadd.f32 %v2026, %v2232
        %v2234 = vpop.f32.mrf.mxu0
        %v2235 = vadd.f32 %v2026, %v2234
        %2236 = vdwg.mxu0
        %2237 = vmatpush.bf16.msra.mxu0 %v2175
        %2238 = vmatpush.bf16.msra.mxu0 %v2174
        %2239 = vmatpush.bf16.msra.mxu0 %v2173
        %2240 = vmatpush.bf16.msra.mxu0 %v2172
        %2241 = vmatpush.bf16.msra.mxu0 %v2171
        %2242 = vmatpush.bf16.msra.mxu0 %v2170
        %2243 = vmatpush.bf16.msra.mxu0 %v2169
        %2244 = vmatpush.bf16.msra.mxu0 %v2168
        %2245 = vmatmul.bf16.gmra.mxu0 %v2069
        %v2246 = vpop.f32.mrf.mxu0
        %v2247 = vadd.f32 %v2218, %v2246
        %v2248 = vpop.f32.mrf.mxu0
        %v2249 = vadd.f32 %v2220, %v2248
        %2250 = vmatmul.bf16.gmra.mxu0 %v2072
        %v2251 = vpop.f32.mrf.mxu0
        %v2252 = vadd.f32 %v2223, %v2251
        %v2253 = vpop.f32.mrf.mxu0
        %v2254 = vadd.f32 %v2225, %v2253
        %2255 = vmatmul.bf16.gmra.mxu0 %v2075
        %v2256 = vpop.f32.mrf.mxu0
        %v2257 = vadd.f32 %v2228, %v2256
        %v2258 = vpop.f32.mrf.mxu0
        %v2259 = vadd.f32 %v2230, %v2258
        %2260 = vmatmul.bf16.gmra.mxu0 %v2078
        %v2261 = vpop.f32.mrf.mxu0
        %v2262 = vadd.f32 %v2233, %v2261
        %v2263 = vpop.f32.mrf.mxu0
        %v2264 = vadd.f32 %v2235, %v2263
        %2265 = vdwg.mxu0
        %2266 = vmatpush.bf16.msra.mxu0 0
        %2267 = vmatpush.bf16.msra.mxu0 0
        %2268 = vmatpush.bf16.msra.mxu0 0
        %2269 = vmatpush.bf16.msra.mxu0 0
        %2270 = vmatpush.bf16.msra.mxu0 0
        %2271 = vmatpush.bf16.msra.mxu0 0
        %2272 = vmatpush.bf16.msra.mxu0 %v2177
        %2273 = vmatpush.bf16.msra.mxu0 %v2176
        %2274 = vmatmul.bf16.gmra.mxu0 %v2197
        %v2275 = vpop.f32.mrf.mxu0
        %v2276 = vadd.f32 %v2247, %v2275
        %v2277 = vpop.f32.mrf.mxu0
        %v2278 = vadd.f32 %v2249, %v2277
        %2279 = vmatmul.bf16.gmra.mxu0 %v2200
        %v2280 = vpop.f32.mrf.mxu0
        %v2281 = vadd.f32 %v2252, %v2280
        %v2282 = vpop.f32.mrf.mxu0
        %v2283 = vadd.f32 %v2254, %v2282
        %2284 = vmatmul.bf16.gmra.mxu0 %v2203
        %v2285 = vpop.f32.mrf.mxu0
        %v2286 = vadd.f32 %v2257, %v2285
        %v2287 = vpop.f32.mrf.mxu0
        %v2288 = vadd.f32 %v2259, %v2287
        %2289 = vmatmul.bf16.gmra.mxu0 %v2206
        %v2290 = vpop.f32.mrf.mxu0
        %v2291 = vadd.f32 %v2262, %v2290
        %v2292 = vpop.f32.mrf.mxu0
        %v2293 = vadd.f32 %v2264, %v2292
        %2294 = vdwg.mxu0
        %v2295 = vld [vmem:[%s533] sm:$0x1]
        %v2297 = vperm.slane %v2295, 0
        %v2299 = vadd.f32 %v2276, %v2297
        %v2300 = vadd.f32 %v2278, %v2297
        %v2301 = vadd.f32 %v2281, %v2297
        %v2302 = vadd.f32 %v2283, %v2297
        %v2303 = vadd.f32 %v2286, %v2297
        %v2304 = vadd.f32 %v2288, %v2297
        %v2305 = vadd.f32 %v2291, %v2297
        %v2306 = vadd.f32 %v2293, %v2297
        %v2307 = vld [vmem:[%s8] sm:$0xff]
        %v2308 = vld [vmem:[%s8 + $0x8] sm:$0xff]
        %v2309 = vld [vmem:[%s8 + $0x10] sm:$0xff]
        %v2310 = vld [vmem:[%s8 + $0x18] sm:$0xff]
        %v2311 = vld [vmem:[%s8 + $0x20] sm:$0xff]
        %v2312 = vld [vmem:[%s8 + $0x28] sm:$0xff]
        %v2313 = vld [vmem:[%s8 + $0x30] sm:$0xff]
        %v2314 = vld [vmem:[%s8 + $0x38] sm:$0xff]
        %v2315 = vld [vmem:[%s9] sm:$0xff]
        %v2316 = vld [vmem:[%s9 + $0x8] sm:$0xff]
        %v2317 = vld [vmem:[%s9 + $0x10] sm:$0xff]
        %v2318 = vld [vmem:[%s9 + $0x18] sm:$0xff]
        %v2319 = vld [vmem:[%s10] sm:$0x1]
        %v2320 = vld [vmem:[%s11] sm:$0x1]
        %vm2321 = vcmask 523264
        %v2322 = vsel %vm2321, %v2299, 0.0
        %v2323 = vsel %vm2321, %v2300, 0.0
        %v2324 = vadd.f32 %v2322, %v2323
        %v2325 = vsel %vm2321, %v2301, 0.0
        %v2326 = vadd.f32 %v2324, %v2325
        %v2327 = vsel %vm2321, %v2302, 0.0
        %v2328 = vadd.f32 %v2326, %v2327
        %v2329 = vsel %vm2321, %v2303, 0.0
        %v2330 = vadd.f32 %v2328, %v2329
        %v2331 = vsel %vm2321, %v2304, 0.0
        %v2332 = vadd.f32 %v2330, %v2331
        %v2333 = vsel %vm2321, %v2305, 0.0
        %v2334 = vadd.f32 %v2332, %v2333
        %v2335 = vsel %vm2321, %v2306, 0.0
        %v2336 = vadd.f32 %v2334, %v2335
        %v2337 = vrot.slane %v2336, 4
        %v2338 = vadd.f32 %v2336, %v2337
        %v2339 = vrot.slane %v2338, 2
        %v2340 = vadd.f32 %v2338, %v2339
        %v2341 = vrot.slane %v2340, 1
        %v2342 = vadd.f32 %v2340, %v2341
        %v2344 = vsel %vm2321, %v2342, 0
        %2346 = vmatpush.msra.mxu0 0.0
        %2347 = vmatpush.msra.mxu0 0.0
        %2348 = vmatpush.msra.mxu0 0.0
        %2349 = vmatpush.msra.mxu0 0.0
        %2350 = vmatpush.msra.mxu0 0.0
        %2351 = vmatpush.msra.mxu0 0.0
        %2352 = vmatpush.msra.mxu0 0.0
        %2353 = vmatpush.msra.mxu0 0.0
        %2354 = vmatpush.msra.mxu0 %v2314
        %2355 = vmatpush.msra.mxu0 %v2313
        %2356 = vmatpush.msra.mxu0 %v2312
        %2357 = vmatpush.msra.mxu0 %v2311
        %2358 = vmatpush.msra.mxu0 %v2310
        %2359 = vmatpush.msra.mxu0 %v2309
        %2360 = vmatpush.msra.mxu0 %v2308
        %2361 = vmatpush.msra.mxu0 %v2307
        %2362 = vmatmul.f32.gmra.mxu0 %v2344
        %v2363 = vpop.f32.mrf.mxu0
        %v2364 = vadd.f32 0.0, %v2363
        %2365 = vdwg.mxu0
        %v2366 = vrcp.pop 128.0
        %v2367 = vmul.f32 128.0, %v2366
        %v2368 = vsub.f32 1.0, %v2367
        %v2369 = vmul.f32 %v2366, %v2368
        %v2370 = vadd.f32 %v2366, %v2369
        %vm2371 = vweird.f32 %v2366
        %v2372 = vsel %vm2371, %v2366, %v2370
        %v2373 = vmul.f32 %v2364, %v2372
        %v2375 = vsel %vm553, %v2373, 0
        %2377 = vmatpush.msra.mxu0 0.0
        %2378 = vmatpush.msra.mxu0 0.0
        %2379 = vmatpush.msra.mxu0 0.0
        %2380 = vmatpush.msra.mxu0 0.0
        %2381 = vmatpush.msra.mxu0 0.0
        %2382 = vmatpush.msra.mxu0 0.0
        %2383 = vmatpush.msra.mxu0 0.0
        %2384 = vmatpush.msra.mxu0 0.0
        %2385 = vmatpush.msra.mxu0 0.0
        %2386 = vmatpush.msra.mxu0 0.0
        %2387 = vmatpush.msra.mxu0 0.0
        %2388 = vmatpush.msra.mxu0 0.0
        %2389 = vmatpush.msra.mxu0 %v2318
        %2390 = vmatpush.msra.mxu0 %v2317
        %2391 = vmatpush.msra.mxu0 %v2316
        %2392 = vmatpush.msra.mxu0 %v2315
        %2393 = vmatmul.f32.gmra.mxu0 %v2375
        %v2394 = vpop.f32.mrf.mxu0
        %v2395 = vadd.f32 0.0, %v2394
        %2396 = vdwg.mxu0
        %v2397 = vperm.slane %v2395, 0
        %v2398 = vsub.f32 %v2299, %v2397
        %v2399 = vsub.f32 %v2300, %v2397
        %v2400 = vsub.f32 %v2301, %v2397
        %v2401 = vsub.f32 %v2302, %v2397
        %v2402 = vsub.f32 %v2303, %v2397
        %v2403 = vsub.f32 %v2304, %v2397
        %v2404 = vsub.f32 %v2305, %v2397
        %v2405 = vsub.f32 %v2306, %v2397
        %v2406 = vmul.f32 %v2398, %v2398
        %v2407 = vmul.f32 %v2399, %v2399
        %v2408 = vmul.f32 %v2400, %v2400
        %v2409 = vmul.f32 %v2401, %v2401
        %v2410 = vmul.f32 %v2402, %v2402
        %v2411 = vmul.f32 %v2403, %v2403
        %v2412 = vmul.f32 %v2404, %v2404
        %v2413 = vmul.f32 %v2405, %v2405
        %v2414 = vsel %vm2321, %v2406, 0.0
        %v2415 = vsel %vm2321, %v2407, 0.0
        %v2416 = vadd.f32 %v2414, %v2415
        %v2417 = vsel %vm2321, %v2408, 0.0
        %v2418 = vadd.f32 %v2416, %v2417
        %v2419 = vsel %vm2321, %v2409, 0.0
        %v2420 = vadd.f32 %v2418, %v2419
        %v2421 = vsel %vm2321, %v2410, 0.0
        %v2422 = vadd.f32 %v2420, %v2421
        %v2423 = vsel %vm2321, %v2411, 0.0
        %v2424 = vadd.f32 %v2422, %v2423
        %v2425 = vsel %vm2321, %v2412, 0.0
        %v2426 = vadd.f32 %v2424, %v2425
        %v2427 = vsel %vm2321, %v2413, 0.0
        %v2428 = vadd.f32 %v2426, %v2427
        %v2429 = vrot.slane %v2428, 4
        %v2430 = vadd.f32 %v2428, %v2429
        %v2431 = vrot.slane %v2430, 2
        %v2432 = vadd.f32 %v2430, %v2431
        %v2433 = vrot.slane %v2432, 1
        %v2434 = vadd.f32 %v2432, %v2433
        %v2436 = vsel %vm2321, %v2434, 0
        %2438 = vmatpush.msra.mxu0 0.0
        %2439 = vmatpush.msra.mxu0 0.0
        %2440 = vmatpush.msra.mxu0 0.0
        %2441 = vmatpush.msra.mxu0 0.0
        %2442 = vmatpush.msra.mxu0 0.0
        %2443 = vmatpush.msra.mxu0 0.0
        %2444 = vmatpush.msra.mxu0 0.0
        %2445 = vmatpush.msra.mxu0 0.0
        %2446 = vmatpush.msra.mxu0 %v2314
        %2447 = vmatpush.msra.mxu0 %v2313
        %2448 = vmatpush.msra.mxu0 %v2312
        %2449 = vmatpush.msra.mxu0 %v2311
        %2450 = vmatpush.msra.mxu0 %v2310
        %2451 = vmatpush.msra.mxu0 %v2309
        %2452 = vmatpush.msra.mxu0 %v2308
        %2453 = vmatpush.msra.mxu0 %v2307
        %2454 = vmatmul.f32.gmra.mxu0 %v2436
        %v2455 = vpop.f32.mrf.mxu0
        %v2456 = vadd.f32 0.0, %v2455
        %2457 = vdwg.mxu0
        %v2458 = vmul.f32 %v2456, %v2372
        %v2460 = vsel %vm553, %v2458, 0
        %2462 = vmatpush.msra.mxu0 0.0
        %2463 = vmatpush.msra.mxu0 0.0
        %2464 = vmatpush.msra.mxu0 0.0
        %2465 = vmatpush.msra.mxu0 0.0
        %2466 = vmatpush.msra.mxu0 0.0
        %2467 = vmatpush.msra.mxu0 0.0
        %2468 = vmatpush.msra.mxu0 0.0
        %2469 = vmatpush.msra.mxu0 0.0
        %2470 = vmatpush.msra.mxu0 0.0
        %2471 = vmatpush.msra.mxu0 0.0
        %2472 = vmatpush.msra.mxu0 0.0
        %2473 = vmatpush.msra.mxu0 0.0
        %2474 = vmatpush.msra.mxu0 %v2318
        %2475 = vmatpush.msra.mxu0 %v2317
        %2476 = vmatpush.msra.mxu0 %v2316
        %2477 = vmatpush.msra.mxu0 %v2315
        %2478 = vmatmul.f32.gmra.mxu0 %v2460
        %v2479 = vpop.f32.mrf.mxu0
        %v2480 = vadd.f32 1e-05, %v2479
        %2481 = vdwg.mxu0
        %v2482 = vrsqrt.pop %v2480
        %v2483 = vmul.f32 %v2482, %v2480
        %v2484 = vmul.f32 %v2483, %v2482
        %v2485 = vmul.f32 0.5, %v2484
        %v2486 = vsub.f32 1.5, %v2485
        %v2487 = vmul.f32 %v2482, %v2486
        %vm2488 = vweird.f32 %v2480
        %vm2489 = vweird.f32 %v2482
        %vm2490 = vmor %vm2488, %vm2489
        %v2491 = vsel %vm2490, %v2482, %v2487
        %v2492 = vperm.slane %v2491, 0
        %v2493 = vmul.f32 %v2398, %v2492
        %v2494 = vmul.f32 %v2399, %v2492
        %v2495 = vmul.f32 %v2400, %v2492
        %v2496 = vmul.f32 %v2401, %v2492
        %v2497 = vmul.f32 %v2402, %v2492
        %v2498 = vmul.f32 %v2403, %v2492
        %v2499 = vmul.f32 %v2404, %v2492
        %v2500 = vmul.f32 %v2405, %v2492
        %v2502 = vperm.slane %v2319, 0
        %v2504 = vmul.f32 %v2493, %v2502
        %v2505 = vmul.f32 %v2494, %v2502
        %v2506 = vmul.f32 %v2495, %v2502
        %v2507 = vmul.f32 %v2496, %v2502
        %v2508 = vmul.f32 %v2497, %v2502
        %v2509 = vmul.f32 %v2498, %v2502
        %v2510 = vmul.f32 %v2499, %v2502
        %v2511 = vmul.f32 %v2500, %v2502
        %v2513 = vperm.slane %v2320, 0
        %v2515 = vadd.f32 %v2504, %v2513
        %v2516 = vadd.f32 %v2505, %v2513
        %v2517 = vadd.f32 %v2506, %v2513
        %v2518 = vadd.f32 %v2507, %v2513
        %v2519 = vadd.f32 %v2508, %v2513
        %v2520 = vadd.f32 %v2509, %v2513
        %v2521 = vadd.f32 %v2510, %v2513
        %v2522 = vadd.f32 %v2511, %v2513
        %v2523 = vxor.u32 %v2515, 2147483648
        %v2524 = vxor.u32 %v2516, 2147483648
        %v2525 = vxor.u32 %v2517, 2147483648
        %v2526 = vxor.u32 %v2518, 2147483648
        %v2527 = vxor.u32 %v2519, 2147483648
        %v2528 = vxor.u32 %v2520, 2147483648
        %v2529 = vxor.u32 %v2521, 2147483648
        %v2530 = vxor.u32 %v2522, 2147483648
        %v2531 = vmul.f32 %v2523, 1.442695
        %v2532 = vpow.pop %v2531
        %v2533 = vmul.f32 %v2524, 1.442695
        %v2534 = vpow.pop %v2533
        %v2535 = vmul.f32 %v2525, 1.442695
        %v2536 = vpow.pop %v2535
        %v2537 = vmul.f32 %v2526, 1.442695
        %v2538 = vpow.pop %v2537
        %v2539 = vmul.f32 %v2527, 1.442695
        %v2540 = vpow.pop %v2539
        %v2541 = vmul.f32 %v2528, 1.442695
        %v2542 = vpow.pop %v2541
        %v2543 = vmul.f32 %v2529, 1.442695
        %v2544 = vpow.pop %v2543
        %v2545 = vmul.f32 %v2530, 1.442695
        %v2546 = vpow.pop %v2545
        %v2547 = vadd.f32 %v2532, 1.0
        %v2548 = vadd.f32 %v2534, 1.0
        %v2549 = vadd.f32 %v2536, 1.0
        %v2550 = vadd.f32 %v2538, 1.0
        %v2551 = vadd.f32 %v2540, 1.0
        %v2552 = vadd.f32 %v2542, 1.0
        %v2553 = vadd.f32 %v2544, 1.0
        %v2554 = vadd.f32 %v2546, 1.0
        %v2555 = vrcp.pop %v2547
        %v2556 = vmul.f32 %v2547, %v2555
        %v2557 = vsub.f32 1.0, %v2556
        %v2558 = vmul.f32 %v2555, %v2557
        %v2559 = vadd.f32 %v2555, %v2558
        %vm2560 = vweird.f32 %v2547
        %vm2561 = vweird.f32 %v2555
        %vm2562 = vmor %vm2560, %vm2561
        %v2563 = vsel %vm2562, %v2555, %v2559
        %v2564 = vand.u32 2147483647, %v2547
        %vm2565 = vcmp.eq.f32.partialorder %v2564, 8.507059e+37
        %v2566 = vand.u32 %v2547, 2147483648
        %v2567 = vor.u32 1.1754944e-38, %v2566
        %v2568 = vsel %vm2565, %v2567, %v2563
        %v2569 = vmul.f32 1.0, %v2568
        %v2570 = vrcp.pop %v2548
        %v2571 = vmul.f32 %v2548, %v2570
        %v2572 = vsub.f32 1.0, %v2571
        %v2573 = vmul.f32 %v2570, %v2572
        %v2574 = vadd.f32 %v2570, %v2573
        %vm2575 = vweird.f32 %v2548
        %vm2576 = vweird.f32 %v2570
        %vm2577 = vmor %vm2575, %vm2576
        %v2578 = vsel %vm2577, %v2570, %v2574
        %v2579 = vand.u32 2147483647, %v2548
        %vm2580 = vcmp.eq.f32.partialorder %v2579, 8.507059e+37
        %v2581 = vand.u32 %v2548, 2147483648
        %v2582 = vor.u32 1.1754944e-38, %v2581
        %v2583 = vsel %vm2580, %v2582, %v2578
        %v2584 = vmul.f32 1.0, %v2583
        %v2585 = vrcp.pop %v2549
        %v2586 = vmul.f32 %v2549, %v2585
        %v2587 = vsub.f32 1.0, %v2586
        %v2588 = vmul.f32 %v2585, %v2587
        %v2589 = vadd.f32 %v2585, %v2588
        %vm2590 = vweird.f32 %v2549
        %vm2591 = vweird.f32 %v2585
        %vm2592 = vmor %vm2590, %vm2591
        %v2593 = vsel %vm2592, %v2585, %v2589
        %v2594 = vand.u32 2147483647, %v2549
        %vm2595 = vcmp.eq.f32.partialorder %v2594, 8.507059e+37
        %v2596 = vand.u32 %v2549, 2147483648
        %v2597 = vor.u32 1.1754944e-38, %v2596
        %v2598 = vsel %vm2595, %v2597, %v2593
        %v2599 = vmul.f32 1.0, %v2598
        %v2600 = vrcp.pop %v2550
        %v2601 = vmul.f32 %v2550, %v2600
        %v2602 = vsub.f32 1.0, %v2601
        %v2603 = vmul.f32 %v2600, %v2602
        %v2604 = vadd.f32 %v2600, %v2603
        %vm2605 = vweird.f32 %v2550
        %vm2606 = vweird.f32 %v2600
        %vm2607 = vmor %vm2605, %vm2606
        %v2608 = vsel %vm2607, %v2600, %v2604
        %v2609 = vand.u32 2147483647, %v2550
        %vm2610 = vcmp.eq.f32.partialorder %v2609, 8.507059e+37
        %v2611 = vand.u32 %v2550, 2147483648
        %v2612 = vor.u32 1.1754944e-38, %v2611
        %v2613 = vsel %vm2610, %v2612, %v2608
        %v2614 = vmul.f32 1.0, %v2613
        %v2615 = vrcp.pop %v2551
        %v2616 = vmul.f32 %v2551, %v2615
        %v2617 = vsub.f32 1.0, %v2616
        %v2618 = vmul.f32 %v2615, %v2617
        %v2619 = vadd.f32 %v2615, %v2618
        %vm2620 = vweird.f32 %v2551
        %vm2621 = vweird.f32 %v2615
        %vm2622 = vmor %vm2620, %vm2621
        %v2623 = vsel %vm2622, %v2615, %v2619
        %v2624 = vand.u32 2147483647, %v2551
        %vm2625 = vcmp.eq.f32.partialorder %v2624, 8.507059e+37
        %v2626 = vand.u32 %v2551, 2147483648
        %v2627 = vor.u32 1.1754944e-38, %v2626
        %v2628 = vsel %vm2625, %v2627, %v2623
        %v2629 = vmul.f32 1.0, %v2628
        %v2630 = vrcp.pop %v2552
        %v2631 = vmul.f32 %v2552, %v2630
        %v2632 = vsub.f32 1.0, %v2631
        %v2633 = vmul.f32 %v2630, %v2632
        %v2634 = vadd.f32 %v2630, %v2633
        %vm2635 = vweird.f32 %v2552
        %vm2636 = vweird.f32 %v2630
        %vm2637 = vmor %vm2635, %vm2636
        %v2638 = vsel %vm2637, %v2630, %v2634
        %v2639 = vand.u32 2147483647, %v2552
        %vm2640 = vcmp.eq.f32.partialorder %v2639, 8.507059e+37
        %v2641 = vand.u32 %v2552, 2147483648
        %v2642 = vor.u32 1.1754944e-38, %v2641
        %v2643 = vsel %vm2640, %v2642, %v2638
        %v2644 = vmul.f32 1.0, %v2643
        %v2645 = vrcp.pop %v2553
        %v2646 = vmul.f32 %v2553, %v2645
        %v2647 = vsub.f32 1.0, %v2646
        %v2648 = vmul.f32 %v2645, %v2647
        %v2649 = vadd.f32 %v2645, %v2648
        %vm2650 = vweird.f32 %v2553
        %vm2651 = vweird.f32 %v2645
        %vm2652 = vmor %vm2650, %vm2651
        %v2653 = vsel %vm2652, %v2645, %v2649
        %v2654 = vand.u32 2147483647, %v2553
        %vm2655 = vcmp.eq.f32.partialorder %v2654, 8.507059e+37
        %v2656 = vand.u32 %v2553, 2147483648
        %v2657 = vor.u32 1.1754944e-38, %v2656
        %v2658 = vsel %vm2655, %v2657, %v2653
        %v2659 = vmul.f32 1.0, %v2658
        %v2660 = vrcp.pop %v2554
        %v2661 = vmul.f32 %v2554, %v2660
        %v2662 = vsub.f32 1.0, %v2661
        %v2663 = vmul.f32 %v2660, %v2662
        %v2664 = vadd.f32 %v2660, %v2663
        %vm2665 = vweird.f32 %v2554
        %vm2666 = vweird.f32 %v2660
        %vm2667 = vmor %vm2665, %vm2666
        %v2668 = vsel %vm2667, %v2660, %v2664
        %v2669 = vand.u32 2147483647, %v2554
        %vm2670 = vcmp.eq.f32.partialorder %v2669, 8.507059e+37
        %v2671 = vand.u32 %v2554, 2147483648
        %v2672 = vor.u32 1.1754944e-38, %v2671
        %v2673 = vsel %vm2670, %v2672, %v2668
        %v2674 = vmul.f32 1.0, %v2673
        %v2675 = vmul.f32 %v2515, %v2569
        %v2676 = vmul.f32 %v2516, %v2584
        %v2677 = vmul.f32 %v2517, %v2599
        %v2678 = vmul.f32 %v2518, %v2614
        %v2679 = vmul.f32 %v2519, %v2629
        %v2680 = vmul.f32 %v2520, %v2644
        %v2681 = vmul.f32 %v2521, %v2659
        %v2682 = vmul.f32 %v2522, %v2674
        %v2683 = vld [vmem:[%s13] sm:$0x1]
        %vm2684 = vcmask 519168
        %2685 = vst.msk [vmem:[#allocation4] sm:$0xf] %vm2684, 0
        %vm2686 = vcmask 516096
        %2687 = vst.msk [vmem:[#allocation4 + $0x4] sm:$0x1] %vm2686, 0
        %s2688 = scalar_lea.vmem [#allocation4], 72
        %2689 = vst.msk [vmem:[%s2688] sm:$0xf] %vm2684, 0
        %2690 = vst.msk [vmem:[%s2688 + $0x4] sm:$0x1] %vm2686, 0
        %s2691 = scalar_lea.vmem [#allocation4], 8
        %vm2692 = vcmask 516096
        %vm2693 = vmand %vm2692, %vm925
        %v2694 = vld [vmem:[%s2691] sm:$0x1]
        %v2695 = vsel %vm2693, 0, %v2694
        %2696 = vst [vmem:[%s2691] sm:$0x1] %v2695
        %v2697 = vld [vmem:[%s2691 + $0x8] sm:$0x1]
        %v2698 = vsel %vm2693, 0, %v2697
        %2699 = vst [vmem:[%s2691 + $0x8] sm:$0x1] %v2698
        %v2700 = vld [vmem:[%s2691 + $0x10] sm:$0x1]
        %v2701 = vsel %vm2693, 0, %v2700
        %2702 = vst [vmem:[%s2691 + $0x10] sm:$0x1] %v2701
        %v2703 = vld [vmem:[%s2691 + $0x18] sm:$0x1]
        %v2704 = vsel %vm2693, 0, %v2703
        %2705 = vst [vmem:[%s2691 + $0x18] sm:$0x1] %v2704
        %v2706 = vld [vmem:[%s2691 + $0x20] sm:$0x1]
        %v2707 = vsel %vm2693, 0, %v2706
        %2708 = vst [vmem:[%s2691 + $0x20] sm:$0x1] %v2707
        %v2709 = vld [vmem:[%s2691 + $0x28] sm:$0x1]
        %v2710 = vsel %vm2693, 0, %v2709
        %2711 = vst [vmem:[%s2691 + $0x28] sm:$0x1] %v2710
        %v2712 = vld [vmem:[%s2691 + $0x30] sm:$0x1]
        %v2713 = vsel %vm2693, 0, %v2712
        %2714 = vst [vmem:[%s2691 + $0x30] sm:$0x1] %v2713
        %v2715 = vld [vmem:[%s2691 + $0x38] sm:$0x1]
        %v2716 = vsel %vm2693, 0, %v2715
        %2717 = vst [vmem:[%s2691 + $0x38] sm:$0x1] %v2716
        %vm2718 = vmand %vm2692, %vm951
        %v2719 = vld [vmem:[%s2691 + $0x4] sm:$0x1]
        %v2720 = vsel %vm2718, 0, %v2719
        %2721 = vst [vmem:[%s2691 + $0x4] sm:$0x1] %v2720
        %v2722 = vld [vmem:[%s2691 + $0xc] sm:$0x1]
        %v2723 = vsel %vm2718, 0, %v2722
        %2724 = vst [vmem:[%s2691 + $0xc] sm:$0x1] %v2723
        %v2725 = vld [vmem:[%s2691 + $0x14] sm:$0x1]
        %v2726 = vsel %vm2718, 0, %v2725
        %2727 = vst [vmem:[%s2691 + $0x14] sm:$0x1] %v2726
        %v2728 = vld [vmem:[%s2691 + $0x1c] sm:$0x1]
        %v2729 = vsel %vm2718, 0, %v2728
        %2730 = vst [vmem:[%s2691 + $0x1c] sm:$0x1] %v2729
        %v2731 = vld [vmem:[%s2691 + $0x24] sm:$0x1]
        %v2732 = vsel %vm2718, 0, %v2731
        %2733 = vst [vmem:[%s2691 + $0x24] sm:$0x1] %v2732
        %v2734 = vld [vmem:[%s2691 + $0x2c] sm:$0x1]
        %v2735 = vsel %vm2718, 0, %v2734
        %2736 = vst [vmem:[%s2691 + $0x2c] sm:$0x1] %v2735
        %v2737 = vld [vmem:[%s2691 + $0x34] sm:$0x1]
        %v2738 = vsel %vm2718, 0, %v2737
        %2739 = vst [vmem:[%s2691 + $0x34] sm:$0x1] %v2738
        %v2740 = vld [vmem:[%s2691 + $0x3c] sm:$0x1]
        %v2741 = vsel %vm2718, 0, %v2740
        %2742 = vst [vmem:[%s2691 + $0x3c] sm:$0x1] %v2741
        %v2743 = vpack.c.bf16 %v2675, %v2675
        %v2744 = vpack.c.bf16 %v2676, %v2676
        %v2745 = vpack.c.bf16 %v2677, %v2677
        %v2746 = vpack.c.bf16 %v2678, %v2678
        %v2747 = vpack.c.bf16 %v2679, %v2679
        %v2748 = vpack.c.bf16 %v2680, %v2680
        %v2749 = vpack.c.bf16 %v2681, %v2681
        %v2750 = vpack.c.bf16 %v2682, %v2682
        %v2752 = vshrl.u32 %v2743, 16
        %v2754 = vrot.slane %v2752, 7
        %v2755 = vshll.u32 %v2743, 16
        %v2757 = vor.u32 %v2754, %v2755
        %v2758 = vrot.slane %v2754, 4
        %v2760 = vshrl.u32 %v2744, 16
        %v2762 = vrot.slane %v2760, 7
        %v2763 = vshll.u32 %v2744, 16
        %v2765 = vor.u32 %v2762, %v2763
        %v2766 = vrot.slane %v2762, 4
        %v2768 = vshrl.u32 %v2745, 16
        %v2770 = vrot.slane %v2768, 7
        %v2771 = vshll.u32 %v2745, 16
        %v2773 = vor.u32 %v2770, %v2771
        %v2774 = vrot.slane %v2770, 4
        %v2776 = vshrl.u32 %v2746, 16
        %v2778 = vrot.slane %v2776, 7
        %v2779 = vshll.u32 %v2746, 16
        %v2781 = vor.u32 %v2778, %v2779
        %v2782 = vrot.slane %v2778, 4
        %v2784 = vshrl.u32 %v2747, 16
        %v2786 = vrot.slane %v2784, 7
        %v2787 = vshll.u32 %v2747, 16
        %v2789 = vor.u32 %v2786, %v2787
        %v2790 = vrot.slane %v2786, 4
        %v2792 = vshrl.u32 %v2748, 16
        %v2794 = vrot.slane %v2792, 7
        %v2795 = vshll.u32 %v2748, 16
        %v2797 = vor.u32 %v2794, %v2795
        %v2798 = vrot.slane %v2794, 4
        %v2800 = vshrl.u32 %v2749, 16
        %v2802 = vrot.slane %v2800, 7
        %v2803 = vshll.u32 %v2749, 16
        %v2805 = vor.u32 %v2802, %v2803
        %v2806 = vrot.slane %v2802, 4
        %v2808 = vshrl.u32 %v2750, 16
        %v2810 = vrot.slane %v2808, 7
        %v2811 = vshll.u32 %v2750, 16
        %v2813 = vor.u32 %v2810, %v2811
        %v2814 = vrot.slane %v2810, 4
        %vm2831 = vcmask 519168
        %vm2832 = vmand %vm2831, %vm951
        %v2833 = vld [vmem:[%s2691] sm:$0xf]
        %v2834 = vsel %vm2832, %v2757, %v2833
        %2835 = vst [vmem:[%s2691] sm:$0xf] %v2834
        %v2836 = vld [vmem:[%s2691 + $0x4] sm:$0x1]
        %v2837 = vsel %vm2693, %v2758, %v2836
        %2838 = vst [vmem:[%s2691 + $0x4] sm:$0x1] %v2837
        %v2839 = vld [vmem:[%s2691 + $0x8] sm:$0xf]
        %v2840 = vsel %vm2832, %v2765, %v2839
        %2841 = vst [vmem:[%s2691 + $0x8] sm:$0xf] %v2840
        %v2842 = vld [vmem:[%s2691 + $0xc] sm:$0x1]
        %v2843 = vsel %vm2693, %v2766, %v2842
        %2844 = vst [vmem:[%s2691 + $0xc] sm:$0x1] %v2843
        %v2845 = vld [vmem:[%s2691 + $0x10] sm:$0xf]
        %v2846 = vsel %vm2832, %v2773, %v2845
        %2847 = vst [vmem:[%s2691 + $0x10] sm:$0xf] %v2846
        %v2848 = vld [vmem:[%s2691 + $0x14] sm:$0x1]
        %v2849 = vsel %vm2693, %v2774, %v2848
        %2850 = vst [vmem:[%s2691 + $0x14] sm:$0x1] %v2849
        %v2851 = vld [vmem:[%s2691 + $0x18] sm:$0xf]
        %v2852 = vsel %vm2832, %v2781, %v2851
        %2853 = vst [vmem:[%s2691 + $0x18] sm:$0xf] %v2852
        %v2854 = vld [vmem:[%s2691 + $0x1c] sm:$0x1]
        %v2855 = vsel %vm2693, %v2782, %v2854
        %2856 = vst [vmem:[%s2691 + $0x1c] sm:$0x1] %v2855
        %v2857 = vld [vmem:[%s2691 + $0x20] sm:$0xf]
        %v2858 = vsel %vm2832, %v2789, %v2857
        %2859 = vst [vmem:[%s2691 + $0x20] sm:$0xf] %v2858
        %v2860 = vld [vmem:[%s2691 + $0x24] sm:$0x1]
        %v2861 = vsel %vm2693, %v2790, %v2860
        %2862 = vst [vmem:[%s2691 + $0x24] sm:$0x1] %v2861
        %v2863 = vld [vmem:[%s2691 + $0x28] sm:$0xf]
        %v2864 = vsel %vm2832, %v2797, %v2863
        %2865 = vst [vmem:[%s2691 + $0x28] sm:$0xf] %v2864
        %v2866 = vld [vmem:[%s2691 + $0x2c] sm:$0x1]
        %v2867 = vsel %vm2693, %v2798, %v2866
        %2868 = vst [vmem:[%s2691 + $0x2c] sm:$0x1] %v2867
        %v2869 = vld [vmem:[%s2691 + $0x30] sm:$0xf]
        %v2870 = vsel %vm2832, %v2805, %v2869
        %2871 = vst [vmem:[%s2691 + $0x30] sm:$0xf] %v2870
        %v2872 = vld [vmem:[%s2691 + $0x34] sm:$0x1]
        %v2873 = vsel %vm2693, %v2806, %v2872
        %2874 = vst [vmem:[%s2691 + $0x34] sm:$0x1] %v2873
        %v2875 = vld [vmem:[%s2691 + $0x38] sm:$0xf]
        %v2876 = vsel %vm2832, %v2813, %v2875
        %2877 = vst [vmem:[%s2691 + $0x38] sm:$0xf] %v2876
        %v2878 = vld [vmem:[%s2691 + $0x3c] sm:$0x1]
        %v2879 = vsel %vm2693, %v2814, %v2878
        %2880 = vst [vmem:[%s2691 + $0x3c] sm:$0x1] %v2879
        %v2881 = vld [vmem:[#allocation4] sm:$0xf]
        %v2882 = vld [vmem:[#allocation4 + $0x8] sm:$0xf]
        %v2883 = vld [vmem:[#allocation4 + $0x10] sm:$0xf]
        %v2884 = vld [vmem:[#allocation4 + $0x18] sm:$0xf]
        %v2885 = vld [vmem:[#allocation4 + $0x20] sm:$0xf]
        %v2886 = vld [vmem:[#allocation4 + $0x28] sm:$0xf]
        %v2887 = vld [vmem:[#allocation4 + $0x30] sm:$0xf]
        %v2888 = vld [vmem:[#allocation4 + $0x38] sm:$0xf]
        %2889 = vst.msk [vmem:[#allocation5] sm:$0xf] %vm2684, %v2881
        %2890 = vst.msk [vmem:[#allocation5 + $0x14] sm:$0xf] %vm2684, %v2882
        %2891 = vst.msk [vmem:[#allocation5 + $0x28] sm:$0xf] %vm2684, %v2883
        %2892 = vst.msk [vmem:[#allocation5 + $0x3c] sm:$0xf] %vm2684, %v2884
        %2893 = vst.msk [vmem:[#allocation5 + $0x50] sm:$0xf] %vm2684, %v2885
        %2894 = vst.msk [vmem:[#allocation5 + $0x64] sm:$0xf] %vm2684, %v2886
        %2895 = vst.msk [vmem:[#allocation5 + $0x78] sm:$0xf] %vm2684, %v2887
        %2896 = vst.msk [vmem:[#allocation5 + $0x8c] sm:$0xf] %vm2684, %v2888
        %v2897 = vld [vmem:[#allocation4] sm:$0xf]
        %v2898 = vld [vmem:[#allocation4 + $0x4] sm:$0x1]
        %v2899 = vld [vmem:[#allocation4 + $0x8] sm:$0xf]
        %v2900 = vld [vmem:[#allocation4 + $0xc] sm:$0x1]
        %v2901 = vld [vmem:[#allocation4 + $0x10] sm:$0xf]
        %v2902 = vld [vmem:[#allocation4 + $0x14] sm:$0x1]
        %v2903 = vld [vmem:[#allocation4 + $0x18] sm:$0xf]
        %v2904 = vld [vmem:[#allocation4 + $0x1c] sm:$0x1]
        %v2905 = vld [vmem:[#allocation4 + $0x20] sm:$0xf]
        %v2906 = vld [vmem:[#allocation4 + $0x24] sm:$0x1]
        %v2907 = vld [vmem:[#allocation4 + $0x28] sm:$0xf]
        %v2908 = vld [vmem:[#allocation4 + $0x2c] sm:$0x1]
        %v2909 = vld [vmem:[#allocation4 + $0x30] sm:$0xf]
        %v2910 = vld [vmem:[#allocation4 + $0x34] sm:$0x1]
        %v2911 = vld [vmem:[#allocation4 + $0x38] sm:$0xf]
        %v2912 = vld [vmem:[#allocation4 + $0x3c] sm:$0x1]
        %v2914 = vshrl.u32 %v2897, 16
        %v2916 = vrot.slane %v2914, 4
        %v2917 = vshll.u32 %v2897, 16
        %v2919 = vrot.slane %v2917, 5
        %v2920 = vor.u32 %v2916, %v2919
        %v2921 = vrot.slane %v2920, 4
        %v2923 = vshll.u32 %v2898, 16
        %v2925 = vrot.slane %v2923, 5
        %v2926 = vsel %vm1149, %v2921, %v2925
        %v2928 = vshrl.u32 %v2899, 16
        %v2930 = vrot.slane %v2928, 4
        %v2931 = vshll.u32 %v2899, 16
        %v2933 = vrot.slane %v2931, 5
        %v2934 = vor.u32 %v2930, %v2933
        %v2935 = vrot.slane %v2934, 4
        %v2937 = vshll.u32 %v2900, 16
        %v2939 = vrot.slane %v2937, 5
        %v2940 = vsel %vm1149, %v2935, %v2939
        %v2942 = vshrl.u32 %v2901, 16
        %v2944 = vrot.slane %v2942, 4
        %v2945 = vshll.u32 %v2901, 16
        %v2947 = vrot.slane %v2945, 5
        %v2948 = vor.u32 %v2944, %v2947
        %v2949 = vrot.slane %v2948, 4
        %v2951 = vshll.u32 %v2902, 16
        %v2953 = vrot.slane %v2951, 5
        %v2954 = vsel %vm1149, %v2949, %v2953
        %v2956 = vshrl.u32 %v2903, 16
        %v2958 = vrot.slane %v2956, 4
        %v2959 = vshll.u32 %v2903, 16
        %v2961 = vrot.slane %v2959, 5
        %v2962 = vor.u32 %v2958, %v2961
        %v2963 = vrot.slane %v2962, 4
        %v2965 = vshll.u32 %v2904, 16
        %v2967 = vrot.slane %v2965, 5
        %v2968 = vsel %vm1149, %v2963, %v2967
        %v2970 = vshrl.u32 %v2905, 16
        %v2972 = vrot.slane %v2970, 4
        %v2973 = vshll.u32 %v2905, 16
        %v2975 = vrot.slane %v2973, 5
        %v2976 = vor.u32 %v2972, %v2975
        %v2977 = vrot.slane %v2976, 4
        %v2979 = vshll.u32 %v2906, 16
        %v2981 = vrot.slane %v2979, 5
        %v2982 = vsel %vm1149, %v2977, %v2981
        %v2984 = vshrl.u32 %v2907, 16
        %v2986 = vrot.slane %v2984, 4
        %v2987 = vshll.u32 %v2907, 16
        %v2989 = vrot.slane %v2987, 5
        %v2990 = vor.u32 %v2986, %v2989
        %v2991 = vrot.slane %v2990, 4
        %v2993 = vshll.u32 %v2908, 16
        %v2995 = vrot.slane %v2993, 5
        %v2996 = vsel %vm1149, %v2991, %v2995
        %v2998 = vshrl.u32 %v2909, 16
        %v3000 = vrot.slane %v2998, 4
        %v3001 = vshll.u32 %v2909, 16
        %v3003 = vrot.slane %v3001, 5
        %v3004 = vor.u32 %v3000, %v3003
        %v3005 = vrot.slane %v3004, 4
        %v3007 = vshll.u32 %v2910, 16
        %v3009 = vrot.slane %v3007, 5
        %v3010 = vsel %vm1149, %v3005, %v3009
        %v3012 = vshrl.u32 %v2911, 16
        %v3014 = vrot.slane %v3012, 4
        %v3015 = vshll.u32 %v2911, 16
        %v3017 = vrot.slane %v3015, 5
        %v3018 = vor.u32 %v3014, %v3017
        %v3019 = vrot.slane %v3018, 4
        %v3021 = vshll.u32 %v2912, 16
        %v3023 = vrot.slane %v3021, 5
        %v3024 = vsel %vm1149, %v3019, %v3023
        %3025 = vrot.lane.b32.xlu0 %v2926, 64
        %v3026 = vpop.permute.xlu0 %3025
        %3027 = vrot.lane.b32.xlu0 %v2940, 64
        %v3028 = vpop.permute.xlu0 %3027
        %3029 = vrot.lane.b32.xlu0 %v2954, 64
        %v3030 = vpop.permute.xlu0 %3029
        %3031 = vrot.lane.b32.xlu0 %v2968, 64
        %v3032 = vpop.permute.xlu0 %3031
        %3033 = vrot.lane.b32.xlu0 %v2982, 64
        %v3034 = vpop.permute.xlu0 %3033
        %3035 = vrot.lane.b32.xlu0 %v2996, 64
        %v3036 = vpop.permute.xlu0 %3035
        %3037 = vrot.lane.b32.xlu0 %v3010, 64
        %v3038 = vpop.permute.xlu0 %3037
        %3039 = vrot.lane.b32.xlu0 %v3024, 64
        %v3040 = vpop.permute.xlu0 %3039
        %vm3049 = vcmask 1043968
        %3050 = vst.msk [vmem:[#allocation5] sm:$0xf] %vm3049, %v3026
        %3051 = vst.msk [vmem:[#allocation5 + $0x14] sm:$0xf] %vm3049, %v3028
        %3052 = vst.msk [vmem:[#allocation5 + $0x28] sm:$0xf] %vm3049, %v3030
        %3053 = vst.msk [vmem:[#allocation5 + $0x3c] sm:$0xf] %vm3049, %v3032
        %3054 = vst.msk [vmem:[#allocation5 + $0x50] sm:$0xf] %vm3049, %v3034
        %3055 = vst.msk [vmem:[#allocation5 + $0x64] sm:$0xf] %vm3049, %v3036
        %3056 = vst.msk [vmem:[#allocation5 + $0x78] sm:$0xf] %vm3049, %v3038
        %3057 = vst.msk [vmem:[#allocation5 + $0x8c] sm:$0xf] %vm3049, %v3040
        %v3058 = vld [vmem:[#allocation4] sm:$0xe]
        %v3059 = vld [vmem:[#allocation4 + $0x4] sm:$0x1]
        %v3060 = vld [vmem:[#allocation4 + $0x8] sm:$0xe]
        %v3061 = vld [vmem:[#allocation4 + $0xc] sm:$0x1]
        %v3062 = vld [vmem:[#allocation4 + $0x10] sm:$0xe]
        %v3063 = vld [vmem:[#allocation4 + $0x14] sm:$0x1]
        %v3064 = vld [vmem:[#allocation4 + $0x18] sm:$0xe]
        %v3065 = vld [vmem:[#allocation4 + $0x1c] sm:$0x1]
        %v3066 = vld [vmem:[#allocation4 + $0x20] sm:$0xe]
        %v3067 = vld [vmem:[#allocation4 + $0x24] sm:$0x1]
        %v3068 = vld [vmem:[#allocation4 + $0x28] sm:$0xe]
        %v3069 = vld [vmem:[#allocation4 + $0x2c] sm:$0x1]
        %v3070 = vld [vmem:[#allocation4 + $0x30] sm:$0xe]
        %v3071 = vld [vmem:[#allocation4 + $0x34] sm:$0x1]
        %v3072 = vld [vmem:[#allocation4 + $0x38] sm:$0xe]
        %v3073 = vld [vmem:[#allocation4 + $0x3c] sm:$0x1]
        %v3090 = vrot.slane %v3058, 5
        %v3091 = vrot.slane %v3090, 4
        %v3092 = vrot.slane %v3059, 5
        %v3093 = vsel %vm1329, %v3091, %v3092
        %v3094 = vrot.slane %v3060, 5
        %v3095 = vrot.slane %v3094, 4
        %v3096 = vrot.slane %v3061, 5
        %v3097 = vsel %vm1329, %v3095, %v3096
        %v3098 = vrot.slane %v3062, 5
        %v3099 = vrot.slane %v3098, 4
        %v3100 = vrot.slane %v3063, 5
        %v3101 = vsel %vm1329, %v3099, %v3100
        %v3102 = vrot.slane %v3064, 5
        %v3103 = vrot.slane %v3102, 4
        %v3104 = vrot.slane %v3065, 5
        %v3105 = vsel %vm1329, %v3103, %v3104
        %v3106 = vrot.slane %v3066, 5
        %v3107 = vrot.slane %v3106, 4
        %v3108 = vrot.slane %v3067, 5
        %v3109 = vsel %vm1329, %v3107, %v3108
        %v3110 = vrot.slane %v3068, 5
        %v3111 = vrot.slane %v3110, 4
        %v3112 = vrot.slane %v3069, 5
        %v3113 = vsel %vm1329, %v3111, %v3112
        %v3114 = vrot.slane %v3070, 5
        %v3115 = vrot.slane %v3114, 4
        %v3116 = vrot.slane %v3071, 5
        %v3117 = vsel %vm1329, %v3115, %v3116
        %v3118 = vrot.slane %v3072, 5
        %v3119 = vrot.slane %v3118, 4
        %v3120 = vrot.slane %v3073, 5
        %v3121 = vsel %vm1329, %v3119, %v3120
        %3130 = vst.msk [vmem:[#allocation5 + $0x4] sm:$0xf] %vm2684, %v3093
        %3131 = vst.msk [vmem:[#allocation5 + $0x18] sm:$0xf] %vm2684, %v3097
        %3132 = vst.msk [vmem:[#allocation5 + $0x2c] sm:$0xf] %vm2684, %v3101
        %3133 = vst.msk [vmem:[#allocation5 + $0x40] sm:$0xf] %vm2684, %v3105
        %3134 = vst.msk [vmem:[#allocation5 + $0x54] sm:$0xf] %vm2684, %v3109
        %3135 = vst.msk [vmem:[#allocation5 + $0x68] sm:$0xf] %vm2684, %v3113
        %3136 = vst.msk [vmem:[#allocation5 + $0x7c] sm:$0xf] %vm2684, %v3117
        %3137 = vst.msk [vmem:[#allocation5 + $0x90] sm:$0xf] %vm2684, %v3121
        %v3138 = vld [vmem:[%s2691] sm:$0xf]
        %v3139 = vld [vmem:[%s2691 + $0x8] sm:$0xf]
        %v3140 = vld [vmem:[%s2691 + $0x10] sm:$0xf]
        %v3141 = vld [vmem:[%s2691 + $0x18] sm:$0xf]
        %v3142 = vld [vmem:[%s2691 + $0x20] sm:$0xf]
        %v3143 = vld [vmem:[%s2691 + $0x28] sm:$0xf]
        %v3144 = vld [vmem:[%s2691 + $0x30] sm:$0xf]
        %v3145 = vld [vmem:[%s2691 + $0x38] sm:$0xf]
        %3154 = vrot.lane.b32.xlu0 %v3138, 64
        %v3155 = vpop.permute.xlu0 %3154
        %3156 = vrot.lane.b32.xlu0 %v3139, 64
        %v3157 = vpop.permute.xlu0 %3156
        %3158 = vrot.lane.b32.xlu0 %v3140, 64
        %v3159 = vpop.permute.xlu0 %3158
        %3160 = vrot.lane.b32.xlu0 %v3141, 64
        %v3161 = vpop.permute.xlu0 %3160
        %3162 = vrot.lane.b32.xlu0 %v3142, 64
        %v3163 = vpop.permute.xlu0 %3162
        %3164 = vrot.lane.b32.xlu0 %v3143, 64
        %v3165 = vpop.permute.xlu0 %3164
        %3166 = vrot.lane.b32.xlu0 %v3144, 64
        %v3167 = vpop.permute.xlu0 %3166
        %3168 = vrot.lane.b32.xlu0 %v3145, 64
        %v3169 = vpop.permute.xlu0 %3168
        %3178 = vst.msk [vmem:[#allocation5 + $0x4] sm:$0xf] %vm3049, %v3155
        %3179 = vst.msk [vmem:[#allocation5 + $0x18] sm:$0xf] %vm3049, %v3157
        %3180 = vst.msk [vmem:[#allocation5 + $0x2c] sm:$0xf] %vm3049, %v3159
        %3181 = vst.msk [vmem:[#allocation5 + $0x40] sm:$0xf] %vm3049, %v3161
        %3182 = vst.msk [vmem:[#allocation5 + $0x54] sm:$0xf] %vm3049, %v3163
        %3183 = vst.msk [vmem:[#allocation5 + $0x68] sm:$0xf] %vm3049, %v3165
        %3184 = vst.msk [vmem:[#allocation5 + $0x7c] sm:$0xf] %vm3049, %v3167
        %3185 = vst.msk [vmem:[#allocation5 + $0x90] sm:$0xf] %vm3049, %v3169
        %v3186 = vld [vmem:[%s2691] sm:$0xf]
        %v3187 = vld [vmem:[%s2691 + $0x4] sm:$0x1]
        %v3188 = vld [vmem:[%s2691 + $0x8] sm:$0xf]
        %v3189 = vld [vmem:[%s2691 + $0xc] sm:$0x1]
        %v3190 = vld [vmem:[%s2691 + $0x10] sm:$0xf]
        %v3191 = vld [vmem:[%s2691 + $0x14] sm:$0x1]
        %v3192 = vld [vmem:[%s2691 + $0x18] sm:$0xf]
        %v3193 = vld [vmem:[%s2691 + $0x1c] sm:$0x1]
        %v3194 = vld [vmem:[%s2691 + $0x20] sm:$0xf]
        %v3195 = vld [vmem:[%s2691 + $0x24] sm:$0x1]
        %v3196 = vld [vmem:[%s2691 + $0x28] sm:$0xf]
        %v3197 = vld [vmem:[%s2691 + $0x2c] sm:$0x1]
        %v3198 = vld [vmem:[%s2691 + $0x30] sm:$0xf]
        %v3199 = vld [vmem:[%s2691 + $0x34] sm:$0x1]
        %v3200 = vld [vmem:[%s2691 + $0x38] sm:$0xf]
        %v3201 = vld [vmem:[%s2691 + $0x3c] sm:$0x1]
        %v3203 = vshrl.u32 %v3186, 16
        %v3205 = vrot.slane %v3203, 4
        %v3206 = vshll.u32 %v3186, 16
        %v3208 = vrot.slane %v3206, 5
        %v3209 = vor.u32 %v3205, %v3208
        %v3210 = vrot.slane %v3209, 4
        %v3212 = vshll.u32 %v3187, 16
        %v3214 = vrot.slane %v3212, 5
        %v3215 = vsel %vm1149, %v3210, %v3214
        %v3217 = vshrl.u32 %v3188, 16
        %v3219 = vrot.slane %v3217, 4
        %v3220 = vshll.u32 %v3188, 16
        %v3222 = vrot.slane %v3220, 5
        %v3223 = vor.u32 %v3219, %v3222
        %v3224 = vrot.slane %v3223, 4
        %v3226 = vshll.u32 %v3189, 16
        %v3228 = vrot.slane %v3226, 5
        %v3229 = vsel %vm1149, %v3224, %v3228
        %v3231 = vshrl.u32 %v3190, 16
        %v3233 = vrot.slane %v3231, 4
        %v3234 = vshll.u32 %v3190, 16
        %v3236 = vrot.slane %v3234, 5
        %v3237 = vor.u32 %v3233, %v3236
        %v3238 = vrot.slane %v3237, 4
        %v3240 = vshll.u32 %v3191, 16
        %v3242 = vrot.slane %v3240, 5
        %v3243 = vsel %vm1149, %v3238, %v3242
        %v3245 = vshrl.u32 %v3192, 16
        %v3247 = vrot.slane %v3245, 4
        %v3248 = vshll.u32 %v3192, 16
        %v3250 = vrot.slane %v3248, 5
        %v3251 = vor.u32 %v3247, %v3250
        %v3252 = vrot.slane %v3251, 4
        %v3254 = vshll.u32 %v3193, 16
        %v3256 = vrot.slane %v3254, 5
        %v3257 = vsel %vm1149, %v3252, %v3256
        %v3259 = vshrl.u32 %v3194, 16
        %v3261 = vrot.slane %v3259, 4
        %v3262 = vshll.u32 %v3194, 16
        %v3264 = vrot.slane %v3262, 5
        %v3265 = vor.u32 %v3261, %v3264
        %v3266 = vrot.slane %v3265, 4
        %v3268 = vshll.u32 %v3195, 16
        %v3270 = vrot.slane %v3268, 5
        %v3271 = vsel %vm1149, %v3266, %v3270
        %v3273 = vshrl.u32 %v3196, 16
        %v3275 = vrot.slane %v3273, 4
        %v3276 = vshll.u32 %v3196, 16
        %v3278 = vrot.slane %v3276, 5
        %v3279 = vor.u32 %v3275, %v3278
        %v3280 = vrot.slane %v3279, 4
        %v3282 = vshll.u32 %v3197, 16
        %v3284 = vrot.slane %v3282, 5
        %v3285 = vsel %vm1149, %v3280, %v3284
        %v3287 = vshrl.u32 %v3198, 16
        %v3289 = vrot.slane %v3287, 4
        %v3290 = vshll.u32 %v3198, 16
        %v3292 = vrot.slane %v3290, 5
        %v3293 = vor.u32 %v3289, %v3292
        %v3294 = vrot.slane %v3293, 4
        %v3296 = vshll.u32 %v3199, 16
        %v3298 = vrot.slane %v3296, 5
        %v3299 = vsel %vm1149, %v3294, %v3298
        %v3301 = vshrl.u32 %v3200, 16
        %v3303 = vrot.slane %v3301, 4
        %v3304 = vshll.u32 %v3200, 16
        %v3306 = vrot.slane %v3304, 5
        %v3307 = vor.u32 %v3303, %v3306
        %v3308 = vrot.slane %v3307, 4
        %v3310 = vshll.u32 %v3201, 16
        %v3312 = vrot.slane %v3310, 5
        %v3313 = vsel %vm1149, %v3308, %v3312
        %3322 = vst.msk [vmem:[#allocation5 + $0x8] sm:$0xf] %vm2684, %v3215
        %3323 = vst.msk [vmem:[#allocation5 + $0x1c] sm:$0xf] %vm2684, %v3229
        %3324 = vst.msk [vmem:[#allocation5 + $0x30] sm:$0xf] %vm2684, %v3243
        %3325 = vst.msk [vmem:[#allocation5 + $0x44] sm:$0xf] %vm2684, %v3257
        %3326 = vst.msk [vmem:[#allocation5 + $0x58] sm:$0xf] %vm2684, %v3271
        %3327 = vst.msk [vmem:[#allocation5 + $0x6c] sm:$0xf] %vm2684, %v3285
        %3328 = vst.msk [vmem:[#allocation5 + $0x80] sm:$0xf] %vm2684, %v3299
        %3329 = vst.msk [vmem:[#allocation5 + $0x94] sm:$0xf] %vm2684, %v3313
        %v3330 = vld [vmem:[%s2691] sm:$0xe]
        %v3331 = vld [vmem:[%s2691 + $0x4] sm:$0x1]
        %v3332 = vld [vmem:[%s2691 + $0x8] sm:$0xe]
        %v3333 = vld [vmem:[%s2691 + $0xc] sm:$0x1]
        %v3334 = vld [vmem:[%s2691 + $0x10] sm:$0xe]
        %v3335 = vld [vmem:[%s2691 + $0x14] sm:$0x1]
        %v3336 = vld [vmem:[%s2691 + $0x18] sm:$0xe]
        %v3337 = vld [vmem:[%s2691 + $0x1c] sm:$0x1]
        %v3338 = vld [vmem:[%s2691 + $0x20] sm:$0xe]
        %v3339 = vld [vmem:[%s2691 + $0x24] sm:$0x1]
        %v3340 = vld [vmem:[%s2691 + $0x28] sm:$0xe]
        %v3341 = vld [vmem:[%s2691 + $0x2c] sm:$0x1]
        %v3342 = vld [vmem:[%s2691 + $0x30] sm:$0xe]
        %v3343 = vld [vmem:[%s2691 + $0x34] sm:$0x1]
        %v3344 = vld [vmem:[%s2691 + $0x38] sm:$0xe]
        %v3345 = vld [vmem:[%s2691 + $0x3c] sm:$0x1]
        %v3362 = vrot.slane %v3330, 5
        %v3363 = vrot.slane %v3362, 4
        %v3364 = vrot.slane %v3331, 5
        %v3365 = vsel %vm1329, %v3363, %v3364
        %v3366 = vrot.slane %v3332, 5
        %v3367 = vrot.slane %v3366, 4
        %v3368 = vrot.slane %v3333, 5
        %v3369 = vsel %vm1329, %v3367, %v3368
        %v3370 = vrot.slane %v3334, 5
        %v3371 = vrot.slane %v3370, 4
        %v3372 = vrot.slane %v3335, 5
        %v3373 = vsel %vm1329, %v3371, %v3372
        %v3374 = vrot.slane %v3336, 5
        %v3375 = vrot.slane %v3374, 4
        %v3376 = vrot.slane %v3337, 5
        %v3377 = vsel %vm1329, %v3375, %v3376
        %v3378 = vrot.slane %v3338, 5
        %v3379 = vrot.slane %v3378, 4
        %v3380 = vrot.slane %v3339, 5
        %v3381 = vsel %vm1329, %v3379, %v3380
        %v3382 = vrot.slane %v3340, 5
        %v3383 = vrot.slane %v3382, 4
        %v3384 = vrot.slane %v3341, 5
        %v3385 = vsel %vm1329, %v3383, %v3384
        %v3386 = vrot.slane %v3342, 5
        %v3387 = vrot.slane %v3386, 4
        %v3388 = vrot.slane %v3343, 5
        %v3389 = vsel %vm1329, %v3387, %v3388
        %v3390 = vrot.slane %v3344, 5
        %v3391 = vrot.slane %v3390, 4
        %v3392 = vrot.slane %v3345, 5
        %v3393 = vsel %vm1329, %v3391, %v3392
        %3394 = vrot.lane.b32.xlu0 %v3365, 64
        %v3395 = vpop.permute.xlu0 %3394
        %3396 = vrot.lane.b32.xlu0 %v3369, 64
        %v3397 = vpop.permute.xlu0 %3396
        %3398 = vrot.lane.b32.xlu0 %v3373, 64
        %v3399 = vpop.permute.xlu0 %3398
        %3400 = vrot.lane.b32.xlu0 %v3377, 64
        %v3401 = vpop.permute.xlu0 %3400
        %3402 = vrot.lane.b32.xlu0 %v3381, 64
        %v3403 = vpop.permute.xlu0 %3402
        %3404 = vrot.lane.b32.xlu0 %v3385, 64
        %v3405 = vpop.permute.xlu0 %3404
        %3406 = vrot.lane.b32.xlu0 %v3389, 64
        %v3407 = vpop.permute.xlu0 %3406
        %3408 = vrot.lane.b32.xlu0 %v3393, 64
        %v3409 = vpop.permute.xlu0 %3408
        %3418 = vst.msk [vmem:[#allocation5 + $0x8] sm:$0xf] %vm3049, %v3395
        %3419 = vst.msk [vmem:[#allocation5 + $0x1c] sm:$0xf] %vm3049, %v3397
        %3420 = vst.msk [vmem:[#allocation5 + $0x30] sm:$0xf] %vm3049, %v3399
        %3421 = vst.msk [vmem:[#allocation5 + $0x44] sm:$0xf] %vm3049, %v3401
        %3422 = vst.msk [vmem:[#allocation5 + $0x58] sm:$0xf] %vm3049, %v3403
        %3423 = vst.msk [vmem:[#allocation5 + $0x6c] sm:$0xf] %vm3049, %v3405
        %3424 = vst.msk [vmem:[#allocation5 + $0x80] sm:$0xf] %vm3049, %v3407
        %3425 = vst.msk [vmem:[#allocation5 + $0x94] sm:$0xf] %vm3049, %v3409
        %s3426 = scalar_lea.vmem [#allocation4], 16
        %v3427 = vld [vmem:[%s3426] sm:$0xf]
        %v3428 = vld [vmem:[%s3426 + $0x8] sm:$0xf]
        %v3429 = vld [vmem:[%s3426 + $0x10] sm:$0xf]
        %v3430 = vld [vmem:[%s3426 + $0x18] sm:$0xf]
        %v3431 = vld [vmem:[%s3426 + $0x20] sm:$0xf]
        %v3432 = vld [vmem:[%s3426 + $0x28] sm:$0xf]
        %v3433 = vld [vmem:[%s3426 + $0x30] sm:$0xf]
        %v3434 = vld [vmem:[%s3426 + $0x38] sm:$0xf]
        %3435 = vst.msk [vmem:[#allocation5 + $0xc] sm:$0xf] %vm2684, %v3427
        %3436 = vst.msk [vmem:[#allocation5 + $0x20] sm:$0xf] %vm2684, %v3428
        %3437 = vst.msk [vmem:[#allocation5 + $0x34] sm:$0xf] %vm2684, %v3429
        %3438 = vst.msk [vmem:[#allocation5 + $0x48] sm:$0xf] %vm2684, %v3430
        %3439 = vst.msk [vmem:[#allocation5 + $0x5c] sm:$0xf] %vm2684, %v3431
        %3440 = vst.msk [vmem:[#allocation5 + $0x70] sm:$0xf] %vm2684, %v3432
        %3441 = vst.msk [vmem:[#allocation5 + $0x84] sm:$0xf] %vm2684, %v3433
        %3442 = vst.msk [vmem:[#allocation5 + $0x98] sm:$0xf] %vm2684, %v3434
        %v3443 = vld [vmem:[%s3426] sm:$0xf]
        %v3444 = vld [vmem:[%s3426 + $0x4] sm:$0x1]
        %v3445 = vld [vmem:[%s3426 + $0x8] sm:$0xf]
        %v3446 = vld [vmem:[%s3426 + $0xc] sm:$0x1]
        %v3447 = vld [vmem:[%s3426 + $0x10] sm:$0xf]
        %v3448 = vld [vmem:[%s3426 + $0x14] sm:$0x1]
        %v3449 = vld [vmem:[%s3426 + $0x18] sm:$0xf]
        %v3450 = vld [vmem:[%s3426 + $0x1c] sm:$0x1]
        %v3451 = vld [vmem:[%s3426 + $0x20] sm:$0xf]
        %v3452 = vld [vmem:[%s3426 + $0x24] sm:$0x1]
        %v3453 = vld [vmem:[%s3426 + $0x28] sm:$0xf]
        %v3454 = vld [vmem:[%s3426 + $0x2c] sm:$0x1]
        %v3455 = vld [vmem:[%s3426 + $0x30] sm:$0xf]
        %v3456 = vld [vmem:[%s3426 + $0x34] sm:$0x1]
        %v3457 = vld [vmem:[%s3426 + $0x38] sm:$0xf]
        %v3458 = vld [vmem:[%s3426 + $0x3c] sm:$0x1]
        %v3460 = vshrl.u32 %v3443, 16
        %v3462 = vrot.slane %v3460, 4
        %v3463 = vshll.u32 %v3443, 16
        %v3465 = vrot.slane %v3463, 5
        %v3466 = vor.u32 %v3462, %v3465
        %v3467 = vrot.slane %v3466, 4
        %v3469 = vshll.u32 %v3444, 16
        %v3471 = vrot.slane %v3469, 5
        %v3472 = vsel %vm1149, %v3467, %v3471
        %v3474 = vshrl.u32 %v3445, 16
        %v3476 = vrot.slane %v3474, 4
        %v3477 = vshll.u32 %v3445, 16
        %v3479 = vrot.slane %v3477, 5
        %v3480 = vor.u32 %v3476, %v3479
        %v3481 = vrot.slane %v3480, 4
        %v3483 = vshll.u32 %v3446, 16
        %v3485 = vrot.slane %v3483, 5
        %v3486 = vsel %vm1149, %v3481, %v3485
        %v3488 = vshrl.u32 %v3447, 16
        %v3490 = vrot.slane %v3488, 4
        %v3491 = vshll.u32 %v3447, 16
        %v3493 = vrot.slane %v3491, 5
        %v3494 = vor.u32 %v3490, %v3493
        %v3495 = vrot.slane %v3494, 4
        %v3497 = vshll.u32 %v3448, 16
        %v3499 = vrot.slane %v3497, 5
        %v3500 = vsel %vm1149, %v3495, %v3499
        %v3502 = vshrl.u32 %v3449, 16
        %v3504 = vrot.slane %v3502, 4
        %v3505 = vshll.u32 %v3449, 16
        %v3507 = vrot.slane %v3505, 5
        %v3508 = vor.u32 %v3504, %v3507
        %v3509 = vrot.slane %v3508, 4
        %v3511 = vshll.u32 %v3450, 16
        %v3513 = vrot.slane %v3511, 5
        %v3514 = vsel %vm1149, %v3509, %v3513
        %v3516 = vshrl.u32 %v3451, 16
        %v3518 = vrot.slane %v3516, 4
        %v3519 = vshll.u32 %v3451, 16
        %v3521 = vrot.slane %v3519, 5
        %v3522 = vor.u32 %v3518, %v3521
        %v3523 = vrot.slane %v3522, 4
        %v3525 = vshll.u32 %v3452, 16
        %v3527 = vrot.slane %v3525, 5
        %v3528 = vsel %vm1149, %v3523, %v3527
        %v3530 = vshrl.u32 %v3453, 16
        %v3532 = vrot.slane %v3530, 4
        %v3533 = vshll.u32 %v3453, 16
        %v3535 = vrot.slane %v3533, 5
        %v3536 = vor.u32 %v3532, %v3535
        %v3537 = vrot.slane %v3536, 4
        %v3539 = vshll.u32 %v3454, 16
        %v3541 = vrot.slane %v3539, 5
        %v3542 = vsel %vm1149, %v3537, %v3541
        %v3544 = vshrl.u32 %v3455, 16
        %v3546 = vrot.slane %v3544, 4
        %v3547 = vshll.u32 %v3455, 16
        %v3549 = vrot.slane %v3547, 5
        %v3550 = vor.u32 %v3546, %v3549
        %v3551 = vrot.slane %v3550, 4
        %v3553 = vshll.u32 %v3456, 16
        %v3555 = vrot.slane %v3553, 5
        %v3556 = vsel %vm1149, %v3551, %v3555
        %v3558 = vshrl.u32 %v3457, 16
        %v3560 = vrot.slane %v3558, 4
        %v3561 = vshll.u32 %v3457, 16
        %v3563 = vrot.slane %v3561, 5
        %v3564 = vor.u32 %v3560, %v3563
        %v3565 = vrot.slane %v3564, 4
        %v3567 = vshll.u32 %v3458, 16
        %v3569 = vrot.slane %v3567, 5
        %v3570 = vsel %vm1149, %v3565, %v3569
        %3571 = vrot.lane.b32.xlu0 %v3472, 64
        %v3572 = vpop.permute.xlu0 %3571
        %3573 = vrot.lane.b32.xlu0 %v3486, 64
        %v3574 = vpop.permute.xlu0 %3573
        %3575 = vrot.lane.b32.xlu0 %v3500, 64
        %v3576 = vpop.permute.xlu0 %3575
        %3577 = vrot.lane.b32.xlu0 %v3514, 64
        %v3578 = vpop.permute.xlu0 %3577
        %3579 = vrot.lane.b32.xlu0 %v3528, 64
        %v3580 = vpop.permute.xlu0 %3579
        %3581 = vrot.lane.b32.xlu0 %v3542, 64
        %v3582 = vpop.permute.xlu0 %3581
        %3583 = vrot.lane.b32.xlu0 %v3556, 64
        %v3584 = vpop.permute.xlu0 %3583
        %3585 = vrot.lane.b32.xlu0 %v3570, 64
        %v3586 = vpop.permute.xlu0 %3585
        %3595 = vst.msk [vmem:[#allocation5 + $0xc] sm:$0xf] %vm3049, %v3572
        %3596 = vst.msk [vmem:[#allocation5 + $0x20] sm:$0xf] %vm3049, %v3574
        %3597 = vst.msk [vmem:[#allocation5 + $0x34] sm:$0xf] %vm3049, %v3576
        %3598 = vst.msk [vmem:[#allocation5 + $0x48] sm:$0xf] %vm3049, %v3578
        %3599 = vst.msk [vmem:[#allocation5 + $0x5c] sm:$0xf] %vm3049, %v3580
        %3600 = vst.msk [vmem:[#allocation5 + $0x70] sm:$0xf] %vm3049, %v3582
        %3601 = vst.msk [vmem:[#allocation5 + $0x84] sm:$0xf] %vm3049, %v3584
        %3602 = vst.msk [vmem:[#allocation5 + $0x98] sm:$0xf] %vm3049, %v3586
        %v3603 = vld [vmem:[%s3426] sm:$0xe]
        %v3604 = vld [vmem:[%s3426 + $0x4] sm:$0x1]
        %v3605 = vld [vmem:[%s3426 + $0x8] sm:$0xe]
        %v3606 = vld [vmem:[%s3426 + $0xc] sm:$0x1]
        %v3607 = vld [vmem:[%s3426 + $0x10] sm:$0xe]
        %v3608 = vld [vmem:[%s3426 + $0x14] sm:$0x1]
        %v3609 = vld [vmem:[%s3426 + $0x18] sm:$0xe]
        %v3610 = vld [vmem:[%s3426 + $0x1c] sm:$0x1]
        %v3611 = vld [vmem:[%s3426 + $0x20] sm:$0xe]
        %v3612 = vld [vmem:[%s3426 + $0x24] sm:$0x1]
        %v3613 = vld [vmem:[%s3426 + $0x28] sm:$0xe]
        %v3614 = vld [vmem:[%s3426 + $0x2c] sm:$0x1]
        %v3615 = vld [vmem:[%s3426 + $0x30] sm:$0xe]
        %v3616 = vld [vmem:[%s3426 + $0x34] sm:$0x1]
        %v3617 = vld [vmem:[%s3426 + $0x38] sm:$0xe]
        %v3618 = vld [vmem:[%s3426 + $0x3c] sm:$0x1]
        %v3635 = vrot.slane %v3603, 5
        %v3636 = vrot.slane %v3635, 4
        %v3637 = vrot.slane %v3604, 5
        %v3638 = vsel %vm1329, %v3636, %v3637
        %v3639 = vrot.slane %v3605, 5
        %v3640 = vrot.slane %v3639, 4
        %v3641 = vrot.slane %v3606, 5
        %v3642 = vsel %vm1329, %v3640, %v3641
        %v3643 = vrot.slane %v3607, 5
        %v3644 = vrot.slane %v3643, 4
        %v3645 = vrot.slane %v3608, 5
        %v3646 = vsel %vm1329, %v3644, %v3645
        %v3647 = vrot.slane %v3609, 5
        %v3648 = vrot.slane %v3647, 4
        %v3649 = vrot.slane %v3610, 5
        %v3650 = vsel %vm1329, %v3648, %v3649
        %v3651 = vrot.slane %v3611, 5
        %v3652 = vrot.slane %v3651, 4
        %v3653 = vrot.slane %v3612, 5
        %v3654 = vsel %vm1329, %v3652, %v3653
        %v3655 = vrot.slane %v3613, 5
        %v3656 = vrot.slane %v3655, 4
        %v3657 = vrot.slane %v3614, 5
        %v3658 = vsel %vm1329, %v3656, %v3657
        %v3659 = vrot.slane %v3615, 5
        %v3660 = vrot.slane %v3659, 4
        %v3661 = vrot.slane %v3616, 5
        %v3662 = vsel %vm1329, %v3660, %v3661
        %v3663 = vrot.slane %v3617, 5
        %v3664 = vrot.slane %v3663, 4
        %v3665 = vrot.slane %v3618, 5
        %v3666 = vsel %vm1329, %v3664, %v3665
        %3675 = vst.msk [vmem:[#allocation5 + $0x10] sm:$0xf] %vm2684, %v3638
        %3676 = vst.msk [vmem:[#allocation5 + $0x24] sm:$0xf] %vm2684, %v3642
        %3677 = vst.msk [vmem:[#allocation5 + $0x38] sm:$0xf] %vm2684, %v3646
        %3678 = vst.msk [vmem:[#allocation5 + $0x4c] sm:$0xf] %vm2684, %v3650
        %3679 = vst.msk [vmem:[#allocation5 + $0x60] sm:$0xf] %vm2684, %v3654
        %3680 = vst.msk [vmem:[#allocation5 + $0x74] sm:$0xf] %vm2684, %v3658
        %3681 = vst.msk [vmem:[#allocation5 + $0x88] sm:$0xf] %vm2684, %v3662
        %3682 = vst.msk [vmem:[#allocation5 + $0x9c] sm:$0xf] %vm2684, %v3666
        %v3683 = vld [vmem:[#allocation5] sm:$0xff]
        %v3684 = vld [vmem:[#allocation5 + $0x8] sm:$0xff]
        %v3685 = vld [vmem:[#allocation5 + $0x10] sm:$0xf]
        %v3686 = vld [vmem:[#allocation5 + $0x14] sm:$0xff]
        %v3687 = vld [vmem:[#allocation5 + $0x1c] sm:$0xff]
        %v3688 = vld [vmem:[#allocation5 + $0x24] sm:$0xf]
        %v3689 = vld [vmem:[#allocation5 + $0x28] sm:$0xff]
        %v3690 = vld [vmem:[#allocation5 + $0x30] sm:$0xff]
        %v3691 = vld [vmem:[#allocation5 + $0x38] sm:$0xf]
        %v3692 = vld [vmem:[#allocation5 + $0x3c] sm:$0xff]
        %v3693 = vld [vmem:[#allocation5 + $0x44] sm:$0xff]
        %v3694 = vld [vmem:[#allocation5 + $0x4c] sm:$0xf]
        %v3695 = vld [vmem:[#allocation5 + $0x50] sm:$0xff]
        %v3696 = vld [vmem:[#allocation5 + $0x58] sm:$0xff]
        %v3697 = vld [vmem:[#allocation5 + $0x60] sm:$0xf]
        %v3698 = vld [vmem:[#allocation5 + $0x64] sm:$0xff]
        %v3699 = vld [vmem:[#allocation5 + $0x6c] sm:$0xff]
        %v3700 = vld [vmem:[#allocation5 + $0x74] sm:$0xf]
        %v3701 = vld [vmem:[#allocation5 + $0x78] sm:$0xff]
        %v3702 = vld [vmem:[#allocation5 + $0x80] sm:$0xff]
        %v3703 = vld [vmem:[#allocation5 + $0x88] sm:$0xf]
        %v3704 = vld [vmem:[#allocation5 + $0x8c] sm:$0xff]
        %v3705 = vld [vmem:[#allocation5 + $0x94] sm:$0xff]
        %v3706 = vld [vmem:[#allocation5 + $0x9c] sm:$0xf]
        %v3707 = vld [vmem:[%s12] sm:$0xf]
        %v3708 = vld [vmem:[%s12 + $0x4] sm:$0xf]
        %v3709 = vld [vmem:[%s12 + $0x8] sm:$0xf]
        %v3710 = vld [vmem:[%s12 + $0xc] sm:$0xf]
        %v3711 = vld [vmem:[%s12 + $0x10] sm:$0xf]
        %v3712 = vld [vmem:[%s12 + $0x14] sm:$0xf]
        %v3713 = vld [vmem:[%s12 + $0x18] sm:$0xf]
        %v3714 = vld [vmem:[%s12 + $0x1c] sm:$0xf]
        %v3715 = vld [vmem:[%s12 + $0x20] sm:$0xf]
        %v3716 = vld [vmem:[%s12 + $0x24] sm:$0xf]
        %v3717 = vld [vmem:[%s12 + $0x28] sm:$0xf]
        %v3718 = vld [vmem:[%s12 + $0x2c] sm:$0xf]
        %v3719 = vld [vmem:[%s12 + $0x30] sm:$0xf]
        %v3720 = vld [vmem:[%s12 + $0x34] sm:$0xf]
        %v3721 = vld [vmem:[%s12 + $0x38] sm:$0xf]
        %v3722 = vld [vmem:[%s12 + $0x3c] sm:$0xf]
        %v3723 = vld [vmem:[%s12 + $0x40] sm:$0xf]
        %v3724 = vld [vmem:[%s12 + $0x44] sm:$0xf]
        %v3725 = vld [vmem:[%s12 + $0x48] sm:$0xf]
        %v3726 = vld [vmem:[%s12 + $0x4c] sm:$0xf]
        %v3727 = vld [vmem:[%s12 + $0x50] sm:$0xf]
        %v3728 = vld [vmem:[%s12 + $0x54] sm:$0xf]
        %v3729 = vld [vmem:[%s12 + $0x58] sm:$0xf]
        %v3730 = vld [vmem:[%s12 + $0x5c] sm:$0xf]
        %v3731 = vld [vmem:[%s12 + $0x60] sm:$0xf]
        %v3732 = vld [vmem:[%s12 + $0x64] sm:$0xf]
        %v3733 = vld [vmem:[%s12 + $0x68] sm:$0xf]
        %v3734 = vld [vmem:[%s12 + $0x6c] sm:$0xf]
        %v3735 = vld [vmem:[%s12 + $0x70] sm:$0xf]
        %v3736 = vld [vmem:[%s12 + $0x74] sm:$0xf]
        %v3737 = vld [vmem:[%s12 + $0x78] sm:$0xf]
        %v3738 = vld [vmem:[%s12 + $0x7c] sm:$0xf]
        %v3739 = vld [vmem:[%s12 + $0x80] sm:$0xf]
        %v3740 = vld [vmem:[%s12 + $0x84] sm:$0xf]
        %v3741 = vld [vmem:[%s12 + $0x88] sm:$0xf]
        %v3742 = vld [vmem:[%s12 + $0x8c] sm:$0xf]
        %v3743 = vld [vmem:[%s12 + $0x90] sm:$0xf]
        %v3744 = vld [vmem:[%s12 + $0x94] sm:$0xf]
        %v3745 = vld [vmem:[%s12 + $0x98] sm:$0xf]
        %v3746 = vld [vmem:[%s12 + $0x9c] sm:$0xf]
        %v3747 = vld [vmem:[%s12 + $0xa0] sm:$0xf]
        %v3748 = vld [vmem:[%s12 + $0xa4] sm:$0xf]
        %v3749 = vld [vmem:[%s12 + $0xa8] sm:$0xf]
        %v3750 = vld [vmem:[%s12 + $0xac] sm:$0xf]
        %v3751 = vld [vmem:[%s12 + $0xb0] sm:$0xf]
        %v3752 = vld [vmem:[%s12 + $0xb4] sm:$0xf]
        %v3753 = vld [vmem:[%s12 + $0xb8] sm:$0xf]
        %v3754 = vld [vmem:[%s12 + $0xbc] sm:$0xf]
        %v3755 = vld [vmem:[%s12 + $0xc0] sm:$0xf]
        %v3756 = vld [vmem:[%s12 + $0xc4] sm:$0xf]
        %v3757 = vld [vmem:[%s12 + $0xc8] sm:$0xf]
        %v3758 = vld [vmem:[%s12 + $0xcc] sm:$0xf]
        %v3759 = vld [vmem:[%s12 + $0xd0] sm:$0xf]
        %v3760 = vld [vmem:[%s12 + $0xd4] sm:$0xf]
        %v3761 = vld [vmem:[%s12 + $0xd8] sm:$0xf]
        %v3762 = vld [vmem:[%s12 + $0xdc] sm:$0xf]
        %v3763 = vld [vmem:[%s12 + $0xe0] sm:$0xf]
        %v3764 = vld [vmem:[%s12 + $0xe4] sm:$0xf]
        %v3765 = vld [vmem:[%s12 + $0xe8] sm:$0xf]
        %v3766 = vld [vmem:[%s12 + $0xec] sm:$0xf]
        %v3767 = vld [vmem:[%s12 + $0xf0] sm:$0xf]
        %v3768 = vld [vmem:[%s12 + $0xf4] sm:$0xf]
        %v3769 = vld [vmem:[%s12 + $0xf8] sm:$0xf]
        %v3770 = vld [vmem:[%s12 + $0xfc] sm:$0xf]
        %v3771 = vld [vmem:[%s12 + $0x100] sm:$0xf]
        %v3772 = vld [vmem:[%s12 + $0x104] sm:$0xf]
        %v3773 = vld [vmem:[%s12 + $0x108] sm:$0xf]
        %v3774 = vld [vmem:[%s12 + $0x10c] sm:$0xf]
        %v3775 = vld [vmem:[%s12 + $0x110] sm:$0xf]
        %v3776 = vld [vmem:[%s12 + $0x114] sm:$0xf]
        %v3777 = vld [vmem:[%s12 + $0x118] sm:$0xf]
        %v3778 = vld [vmem:[%s12 + $0x11c] sm:$0xf]
        %v3780 = vperm.slane %v2683, 0
        %v3806 = vunpack.c.l.b16 %v3683
        %v3807 = vunpack.c.h.b16 %v3683
        %v3808 = vunpack.c.l.b16 %v3684
        %v3809 = vunpack.c.h.b16 %v3684
        %v3810 = vunpack.c.l.b16 %v3685
        %v3811 = vunpack.c.l.b16 %v3686
        %v3812 = vunpack.c.h.b16 %v3686
        %v3813 = vunpack.c.l.b16 %v3687
        %v3814 = vunpack.c.h.b16 %v3687
        %v3815 = vunpack.c.l.b16 %v3688
        %v3816 = vunpack.c.l.b16 %v3689
        %v3817 = vunpack.c.h.b16 %v3689
        %v3818 = vunpack.c.l.b16 %v3690
        %v3819 = vunpack.c.h.b16 %v3690
        %v3820 = vunpack.c.l.b16 %v3691
        %v3821 = vunpack.c.l.b16 %v3692
        %v3822 = vunpack.c.h.b16 %v3692
        %v3823 = vunpack.c.l.b16 %v3693
        %v3824 = vunpack.c.h.b16 %v3693
        %v3825 = vunpack.c.l.b16 %v3694
        %v3826 = vunpack.c.l.b16 %v3695
        %v3827 = vunpack.c.h.b16 %v3695
        %v3828 = vunpack.c.l.b16 %v3696
        %v3829 = vunpack.c.h.b16 %v3696
        %v3830 = vunpack.c.l.b16 %v3697
        %v3831 = vunpack.c.l.b16 %v3698
        %v3832 = vunpack.c.h.b16 %v3698
        %v3833 = vunpack.c.l.b16 %v3699
        %v3834 = vunpack.c.h.b16 %v3699
        %v3835 = vunpack.c.l.b16 %v3700
        %v3836 = vunpack.c.l.b16 %v3701
        %v3837 = vunpack.c.h.b16 %v3701
        %v3838 = vunpack.c.l.b16 %v3702
        %v3839 = vunpack.c.h.b16 %v3702
        %v3840 = vunpack.c.l.b16 %v3703
        %v3841 = vunpack.c.l.b16 %v3704
        %v3842 = vunpack.c.h.b16 %v3704
        %v3843 = vunpack.c.l.b16 %v3705
        %v3844 = vunpack.c.h.b16 %v3705
        %v3845 = vunpack.c.l.b16 %v3706
        %v3846 = vpack.c.b16 %v3811, %v3806
        %v3847 = vpack.c.b16 %v3812, %v3807
        %v3848 = vpack.c.b16 %v3813, %v3808
        %v3849 = vpack.c.b16 %v3814, %v3809
        %v3850 = vpack.c.b16 %v3815, %v3810
        %v3851 = vpack.c.b16 %v3821, %v3816
        %v3852 = vpack.c.b16 %v3822, %v3817
        %v3853 = vpack.c.b16 %v3823, %v3818
        %v3854 = vpack.c.b16 %v3824, %v3819
        %v3855 = vpack.c.b16 %v3825, %v3820
        %v3856 = vpack.c.b16 %v3831, %v3826
        %v3857 = vpack.c.b16 %v3832, %v3827
        %v3858 = vpack.c.b16 %v3833, %v3828
        %v3859 = vpack.c.b16 %v3834, %v3829
        %v3860 = vpack.c.b16 %v3835, %v3830
        %v3861 = vpack.c.b16 %v3841, %v3836
        %v3862 = vpack.c.b16 %v3842, %v3837
        %v3863 = vpack.c.b16 %v3843, %v3838
        %v3864 = vpack.c.b16 %v3844, %v3839
        %v3865 = vpack.c.b16 %v3845, %v3840
        %v3954 = vunpack.c.l.b16 %v3707
        %v3955 = vunpack.c.l.b16 %v3708
        %v3956 = vunpack.c.l.b16 %v3709
        %v3957 = vunpack.c.l.b16 %v3710
        %v3958 = vunpack.c.l.b16 %v3711
        %v3959 = vunpack.c.l.b16 %v3712
        %v3960 = vunpack.c.l.b16 %v3713
        %v3961 = vunpack.c.l.b16 %v3714
        %v3962 = vunpack.c.l.b16 %v3715
        %v3963 = vunpack.c.l.b16 %v3716
        %v3964 = vunpack.c.l.b16 %v3717
        %v3965 = vunpack.c.l.b16 %v3718
        %v3966 = vunpack.c.l.b16 %v3719
        %v3967 = vunpack.c.l.b16 %v3720
        %v3968 = vunpack.c.l.b16 %v3721
        %v3969 = vunpack.c.l.b16 %v3722
        %v3970 = vunpack.c.l.b16 %v3723
        %v3971 = vunpack.c.l.b16 %v3724
        %v3972 = vunpack.c.l.b16 %v3725
        %v3973 = vunpack.c.l.b16 %v3726
        %v3974 = vunpack.c.l.b16 %v3727
        %v3975 = vunpack.c.l.b16 %v3728
        %v3976 = vunpack.c.l.b16 %v3729
        %v3977 = vunpack.c.l.b16 %v3730
        %v3978 = vunpack.c.l.b16 %v3731
        %v3979 = vunpack.c.l.b16 %v3732
        %v3980 = vunpack.c.l.b16 %v3733
        %v3981 = vunpack.c.l.b16 %v3734
        %v3982 = vunpack.c.l.b16 %v3735
        %v3983 = vunpack.c.l.b16 %v3736
        %v3984 = vunpack.c.l.b16 %v3737
        %v3985 = vunpack.c.l.b16 %v3738
        %v3986 = vunpack.c.l.b16 %v3739
        %v3987 = vunpack.c.l.b16 %v3740
        %v3988 = vunpack.c.l.b16 %v3741
        %v3989 = vunpack.c.l.b16 %v3742
        %v3990 = vunpack.c.l.b16 %v3743
        %v3991 = vunpack.c.l.b16 %v3744
        %v3992 = vunpack.c.l.b16 %v3745
        %v3993 = vunpack.c.l.b16 %v3746
        %v3994 = vunpack.c.l.b16 %v3747
        %v3995 = vunpack.c.l.b16 %v3748
        %v3996 = vunpack.c.l.b16 %v3749
        %v3997 = vunpack.c.l.b16 %v3750
        %v3998 = vunpack.c.l.b16 %v3751
        %v3999 = vunpack.c.l.b16 %v3752
        %v4000 = vunpack.c.l.b16 %v3753
        %v4001 = vunpack.c.l.b16 %v3754
        %v4002 = vunpack.c.l.b16 %v3755
        %v4003 = vunpack.c.l.b16 %v3756
        %v4004 = vunpack.c.l.b16 %v3757
        %v4005 = vunpack.c.l.b16 %v3758
        %v4006 = vunpack.c.l.b16 %v3759
        %v4007 = vunpack.c.l.b16 %v3760
        %v4008 = vunpack.c.l.b16 %v3761
        %v4009 = vunpack.c.l.b16 %v3762
        %v4010 = vunpack.c.l.b16 %v3763
        %v4011 = vunpack.c.l.b16 %v3764
        %v4012 = vunpack.c.l.b16 %v3765
        %v4013 = vunpack.c.l.b16 %v3766
        %v4014 = vunpack.c.l.b16 %v3767
        %v4015 = vunpack.c.l.b16 %v3768
        %v4016 = vunpack.c.l.b16 %v3769
        %v4017 = vunpack.c.l.b16 %v3770
        %v4018 = vunpack.c.l.b16 %v3771
        %v4019 = vunpack.c.l.b16 %v3772
        %v4020 = vunpack.c.l.b16 %v3773
        %v4021 = vunpack.c.l.b16 %v3774
        %v4022 = vunpack.c.l.b16 %v3775
        %v4023 = vunpack.c.l.b16 %v3776
        %v4024 = vunpack.c.l.b16 %v3777
        %v4025 = vunpack.c.l.b16 %v3778
        %v4026 = vpack.c.b16 %v3955, %v3954
        %v4027 = vpack.c.b16 %v3957, %v3956
        %v4028 = vpack.c.b16 %v3959, %v3958
        %v4029 = vpack.c.b16 %v3961, %v3960
        %v4030 = vpack.c.b16 %v3963, %v3962
        %v4031 = vpack.c.b16 %v3965, %v3964
        %v4032 = vpack.c.b16 %v3967, %v3966
        %v4033 = vpack.c.b16 %v3969, %v3968
        %v4034 = vpack.c.b16 %v3971, %v3970
        %v4035 = vpack.c.b16 %v3973, %v3972
        %v4036 = vpack.c.b16 %v3975, %v3974
        %v4037 = vpack.c.b16 %v3977, %v3976
        %v4038 = vpack.c.b16 %v3979, %v3978
        %v4039 = vpack.c.b16 %v3981, %v3980
        %v4040 = vpack.c.b16 %v3983, %v3982
        %v4041 = vpack.c.b16 %v3985, %v3984
        %v4042 = vpack.c.b16 %v3987, %v3986
        %v4043 = vpack.c.b16 %v3989, %v3988
        %v4044 = vpack.c.b16 %v3991, %v3990
        %v4045 = vpack.c.b16 %v3993, %v3992
        %v4046 = vpack.c.b16 %v3995, %v3994
        %v4047 = vpack.c.b16 %v3997, %v3996
        %v4048 = vpack.c.b16 %v3999, %v3998
        %v4049 = vpack.c.b16 %v4001, %v4000
        %v4050 = vpack.c.b16 %v4003, %v4002
        %v4051 = vpack.c.b16 %v4005, %v4004
        %v4052 = vpack.c.b16 %v4007, %v4006
        %v4053 = vpack.c.b16 %v4009, %v4008
        %v4054 = vpack.c.b16 %v4011, %v4010
        %v4055 = vpack.c.b16 %v4013, %v4012
        %v4056 = vpack.c.b16 %v4015, %v4014
        %v4057 = vpack.c.b16 %v4017, %v4016
        %v4058 = vpack.c.b16 %v4019, %v4018
        %v4059 = vpack.c.b16 %v4021, %v4020
        %v4060 = vpack.c.b16 %v4023, %v4022
        %v4061 = vpack.c.b16 %v4025, %v4024
        %v4099 = vsel %vm2321, %v3850, 0
        %v4102 = vsel %vm2321, %v3855, 0
        %v4105 = vsel %vm2321, %v3860, 0
        %v4108 = vsel %vm2321, %v3865, 0
        %4110 = vmatpush.bf16.msra.mxu0 %v4033
        %4111 = vmatpush.bf16.msra.mxu0 %v4032
        %4112 = vmatpush.bf16.msra.mxu0 %v4031
        %4113 = vmatpush.bf16.msra.mxu0 %v4030
        %4114 = vmatpush.bf16.msra.mxu0 %v4029
        %4115 = vmatpush.bf16.msra.mxu0 %v4028
        %4116 = vmatpush.bf16.msra.mxu0 %v4027
        %4117 = vmatpush.bf16.msra.mxu0 %v4026
        %4118 = vmatmul.bf16.gmra.mxu0 %v3846
        %v4119 = vpop.f32.mrf.mxu0
        %v4120 = vadd.f32 %v3780, %v4119
        %v4121 = vpop.f32.mrf.mxu0
        %v4122 = vadd.f32 %v3780, %v4121
        %4123 = vmatmul.bf16.gmra.mxu0 %v3851
        %v4124 = vpop.f32.mrf.mxu0
        %v4125 = vadd.f32 %v3780, %v4124
        %v4126 = vpop.f32.mrf.mxu0
        %v4127 = vadd.f32 %v3780, %v4126
        %4128 = vmatmul.bf16.gmra.mxu0 %v3856
        %v4129 = vpop.f32.mrf.mxu0
        %v4130 = vadd.f32 %v3780, %v4129
        %v4131 = vpop.f32.mrf.mxu0
        %v4132 = vadd.f32 %v3780, %v4131
        %4133 = vmatmul.bf16.gmra.mxu0 %v3861
        %v4134 = vpop.f32.mrf.mxu0
        %v4135 = vadd.f32 %v3780, %v4134
        %v4136 = vpop.f32.mrf.mxu0
        %v4137 = vadd.f32 %v3780, %v4136
        %4138 = vdwg.mxu0
        %4139 = vmatpush.bf16.msra.mxu0 %v4041
        %4140 = vmatpush.bf16.msra.mxu0 %v4040
        %4141 = vmatpush.bf16.msra.mxu0 %v4039
        %4142 = vmatpush.bf16.msra.mxu0 %v4038
        %4143 = vmatpush.bf16.msra.mxu0 %v4037
        %4144 = vmatpush.bf16.msra.mxu0 %v4036
        %4145 = vmatpush.bf16.msra.mxu0 %v4035
        %4146 = vmatpush.bf16.msra.mxu0 %v4034
        %4147 = vmatmul.bf16.gmra.mxu0 %v3847
        %v4148 = vpop.f32.mrf.mxu0
        %v4149 = vadd.f32 %v4120, %v4148
        %v4150 = vpop.f32.mrf.mxu0
        %v4151 = vadd.f32 %v4122, %v4150
        %4152 = vmatmul.bf16.gmra.mxu0 %v3852
        %v4153 = vpop.f32.mrf.mxu0
        %v4154 = vadd.f32 %v4125, %v4153
        %v4155 = vpop.f32.mrf.mxu0
        %v4156 = vadd.f32 %v4127, %v4155
        %4157 = vmatmul.bf16.gmra.mxu0 %v3857
        %v4158 = vpop.f32.mrf.mxu0
        %v4159 = vadd.f32 %v4130, %v4158
        %v4160 = vpop.f32.mrf.mxu0
        %v4161 = vadd.f32 %v4132, %v4160
        %4162 = vmatmul.bf16.gmra.mxu0 %v3862
        %v4163 = vpop.f32.mrf.mxu0
        %v4164 = vadd.f32 %v4135, %v4163
        %v4165 = vpop.f32.mrf.mxu0
        %v4166 = vadd.f32 %v4137, %v4165
        %4167 = vdwg.mxu0
        %4168 = vmatpush.bf16.msra.mxu0 %v4049
        %4169 = vmatpush.bf16.msra.mxu0 %v4048
        %4170 = vmatpush.bf16.msra.mxu0 %v4047
        %4171 = vmatpush.bf16.msra.mxu0 %v4046
        %4172 = vmatpush.bf16.msra.mxu0 %v4045
        %4173 = vmatpush.bf16.msra.mxu0 %v4044
        %4174 = vmatpush.bf16.msra.mxu0 %v4043
        %4175 = vmatpush.bf16.msra.mxu0 %v4042
        %4176 = vmatmul.bf16.gmra.mxu0 %v3848
        %v4177 = vpop.f32.mrf.mxu0
        %v4178 = vadd.f32 %v4149, %v4177
        %v4179 = vpop.f32.mrf.mxu0
        %v4180 = vadd.f32 %v4151, %v4179
        %4181 = vmatmul.bf16.gmra.mxu0 %v3853
        %v4182 = vpop.f32.mrf.mxu0
        %v4183 = vadd.f32 %v4154, %v4182
        %v4184 = vpop.f32.mrf.mxu0
        %v4185 = vadd.f32 %v4156, %v4184
        %4186 = vmatmul.bf16.gmra.mxu0 %v3858
        %v4187 = vpop.f32.mrf.mxu0
        %v4188 = vadd.f32 %v4159, %v4187
        %v4189 = vpop.f32.mrf.mxu0
        %v4190 = vadd.f32 %v4161, %v4189
        %4191 = vmatmul.bf16.gmra.mxu0 %v3863
        %v4192 = vpop.f32.mrf.mxu0
        %v4193 = vadd.f32 %v4164, %v4192
        %v4194 = vpop.f32.mrf.mxu0
        %v4195 = vadd.f32 %v4166, %v4194
        %4196 = vdwg.mxu0
        %4197 = vmatpush.bf16.msra.mxu0 %v4057
        %4198 = vmatpush.bf16.msra.mxu0 %v4056
        %4199 = vmatpush.bf16.msra.mxu0 %v4055
        %4200 = vmatpush.bf16.msra.mxu0 %v4054
        %4201 = vmatpush.bf16.msra.mxu0 %v4053
        %4202 = vmatpush.bf16.msra.mxu0 %v4052
        %4203 = vmatpush.bf16.msra.mxu0 %v4051
        %4204 = vmatpush.bf16.msra.mxu0 %v4050
        %4205 = vmatmul.bf16.gmra.mxu0 %v3849
        %v4206 = vpop.f32.mrf.mxu0
        %v4207 = vadd.f32 %v4178, %v4206
        %v4208 = vpop.f32.mrf.mxu0
        %v4209 = vadd.f32 %v4180, %v4208
        %4210 = vmatmul.bf16.gmra.mxu0 %v3854
        %v4211 = vpop.f32.mrf.mxu0
        %v4212 = vadd.f32 %v4183, %v4211
        %v4213 = vpop.f32.mrf.mxu0
        %v4214 = vadd.f32 %v4185, %v4213
        %4215 = vmatmul.bf16.gmra.mxu0 %v3859
        %v4216 = vpop.f32.mrf.mxu0
        %v4217 = vadd.f32 %v4188, %v4216
        %v4218 = vpop.f32.mrf.mxu0
        %v4219 = vadd.f32 %v4190, %v4218
        %4220 = vmatmul.bf16.gmra.mxu0 %v3864
        %v4221 = vpop.f32.mrf.mxu0
        %v4222 = vadd.f32 %v4193, %v4221
        %v4223 = vpop.f32.mrf.mxu0
        %v4224 = vadd.f32 %v4195, %v4223
        %4225 = vdwg.mxu0
        %4226 = vmatpush.bf16.msra.mxu0 0
        %4227 = vmatpush.bf16.msra.mxu0 0
        %4228 = vmatpush.bf16.msra.mxu0 0
        %4229 = vmatpush.bf16.msra.mxu0 0
        %4230 = vmatpush.bf16.msra.mxu0 %v4061
        %4231 = vmatpush.bf16.msra.mxu0 %v4060
        %4232 = vmatpush.bf16.msra.mxu0 %v4059
        %4233 = vmatpush.bf16.msra.mxu0 %v4058
        %4234 = vmatmul.bf16.gmra.mxu0 %v4099
        %v4235 = vpop.f32.mrf.mxu0
        %v4236 = vadd.f32 %v4207, %v4235
        %v4237 = vpop.f32.mrf.mxu0
        %v4238 = vadd.f32 %v4209, %v4237
        %4239 = vmatmul.bf16.gmra.mxu0 %v4102
        %v4240 = vpop.f32.mrf.mxu0
        %v4241 = vadd.f32 %v4212, %v4240
        %v4242 = vpop.f32.mrf.mxu0
        %v4243 = vadd.f32 %v4214, %v4242
        %4244 = vmatmul.bf16.gmra.mxu0 %v4105
        %v4245 = vpop.f32.mrf.mxu0
        %v4246 = vadd.f32 %v4217, %v4245
        %v4247 = vpop.f32.mrf.mxu0
        %v4248 = vadd.f32 %v4219, %v4247
        %4249 = vmatmul.bf16.gmra.mxu0 %v4108
        %v4250 = vpop.f32.mrf.mxu0
        %v4251 = vadd.f32 %v4222, %v4250
        %v4252 = vpop.f32.mrf.mxu0
        %v4253 = vadd.f32 %v4224, %v4252
        %4254 = vdwg.mxu0
        %v4255 = vpack.c.bf16 %v536, %v535
        %v4256 = vpack.c.bf16 %v538, %v537
        %v4257 = vpack.c.bf16 %v540, %v539
        %v4258 = vpack.c.bf16 %v542, %v541
        %v4259 = vld [vmem:[%s14] sm:$0xf]
        %v4260 = vld [vmem:[%s14 + $0x4] sm:$0xf]
        %v4261 = vld [vmem:[%s14 + $0x8] sm:$0xf]
        %v4262 = vld [vmem:[%s14 + $0xc] sm:$0xf]
        %v4263 = vld [vmem:[%s15] sm:$0x1]
        %v4265 = vperm.slane %v4263, 0
        %v4271 = vunpack.c.l.b16 %v4259
        %v4272 = vunpack.c.l.b16 %v4260
        %v4273 = vunpack.c.l.b16 %v4261
        %v4274 = vunpack.c.l.b16 %v4262
        %v4275 = vpack.c.b16 %v4272, %v4271
        %v4276 = vpack.c.b16 %v4274, %v4273
        %v4280 = vsel %vm553, %v4255, 0
        %v4283 = vsel %vm553, %v4256, 0
        %v4286 = vsel %vm553, %v4257, 0
        %v4289 = vsel %vm553, %v4258, 0
        %4291 = vmatpush.bf16.msra.mxu0 0
        %4292 = vmatpush.bf16.msra.mxu0 0
        %4293 = vmatpush.bf16.msra.mxu0 0
        %4294 = vmatpush.bf16.msra.mxu0 0
        %4295 = vmatpush.bf16.msra.mxu0 0
        %4296 = vmatpush.bf16.msra.mxu0 0
        %4297 = vmatpush.bf16.msra.mxu0 %v4276
        %4298 = vmatpush.bf16.msra.mxu0 %v4275
        %4299 = vmatmul.bf16.gmra.mxu0 %v4280
        %v4300 = vpop.f32.mrf.mxu0
        %v4301 = vadd.f32 %v4265, %v4300
        %v4302 = vpop.f32.mrf.mxu0
        %v4303 = vadd.f32 %v4265, %v4302
        %4304 = vmatmul.bf16.gmra.mxu0 %v4283
        %v4305 = vpop.f32.mrf.mxu0
        %v4306 = vadd.f32 %v4265, %v4305
        %v4307 = vpop.f32.mrf.mxu0
        %v4308 = vadd.f32 %v4265, %v4307
        %4309 = vmatmul.bf16.gmra.mxu0 %v4286
        %v4310 = vpop.f32.mrf.mxu0
        %v4311 = vadd.f32 %v4265, %v4310
        %v4312 = vpop.f32.mrf.mxu0
        %v4313 = vadd.f32 %v4265, %v4312
        %4314 = vmatmul.bf16.gmra.mxu0 %v4289
        %v4315 = vpop.f32.mrf.mxu0
        %v4316 = vadd.f32 %v4265, %v4315
        %v4317 = vpop.f32.mrf.mxu0
        %v4318 = vadd.f32 %v4265, %v4317
        %4319 = vdwg.mxu0
        %v4320 = vadd.f32 %v4236, %v4301
        %v4321 = vadd.f32 %v4238, %v4303
        %v4322 = vadd.f32 %v4241, %v4306
        %v4323 = vadd.f32 %v4243, %v4308
        %v4324 = vadd.f32 %v4246, %v4311
        %v4325 = vadd.f32 %v4248, %v4313
        %v4326 = vadd.f32 %v4251, %v4316
        %v4327 = vadd.f32 %v4253, %v4318
        %4328 = vst.msk [vmem:[%s525] sm:$0xff] %vm2321, %v4320
        %4329 = vst.msk [vmem:[%s525 + $0x8] sm:$0xff] %vm2321, %v4321
        %4330 = vst.msk [vmem:[%s525 + $0x10] sm:$0xff] %vm2321, %v4322
        %4331 = vst.msk [vmem:[%s525 + $0x18] sm:$0xff] %vm2321, %v4323
        %4332 = vst.msk [vmem:[%s525 + $0x20] sm:$0xff] %vm2321, %v4324
        %4333 = vst.msk [vmem:[%s525 + $0x28] sm:$0xff] %vm2321, %v4325
        %4334 = vst.msk [vmem:[%s525 + $0x30] sm:$0xff] %vm2321, %v4326
        %4335 = vst.msk [vmem:[%s525 + $0x38] sm:$0xff] %vm2321, %v4327
        %s4336 = sand.u32 %s384, 1
        %s4337 = scalar_lea.sflag [#allocation7], %s4336
        %s4338 = sand.u32 %s384, 1
        %s4339 = smul.addr %s4338, 64
        %s4340 = scalar_lea.vmem [#allocation6], %s4339
        // Predicated region
        $region85: #{tpu_custom_call.1} parent=83 // pred_check
          %p4341 = pneg %p394
        $region86: #{tpu_custom_call.1} parent=83 // pred_check_branch
          %4343 = sbr.rel (%p4341) target = $region88
        $region87: #{tpu_custom_call.1} parent=83 // pred_region
          %4345 = vsyncadd %s4337, 0
          %s4346 = smul.addr %s30, 8
          %s4347 = smul.addr %s4346, 8
          %s4348 = scalar_lea.hbm %s16, %s4347
          %s4349 = sshll.u32 %s4340, 4
          %s4350 = int_to_ptr.vmem [resolvable:$true] %s4349
          %s4351 = sshll.u32 %s4348, 4
          %s4352 = int_to_ptr.hbm [resolvable:$true] %s4351
          %4357 = dma.vmem_to_hbm [thread:$0]  %s4350, 1024, %s4352, %s4337, 128, 128, 8
        $region88: #{tpu_custom_call.1} parent=83 // pred_fallthru
          _
      $region84: #{tpu_custom_call.1} parent=5 // pred_fallthru
        _
      %p4358 = scmp.le.s32.totalorder 2, %s25
      // Predicated region
      $region89: #{tpu_custom_call.1} parent=5 // pred_check
        %p4359 = pneg %p4358
      $region90: #{tpu_custom_call.1} parent=5 // pred_check_branch
        %4361 = sbr.rel (%p4359) target = $region92
      $region91: #{tpu_custom_call.1} parent=5 // pred_region
        %s4362 = ssub.s32 %s25, 2
        // Predicated region
        $region93: #{tpu_custom_call.1} parent=91 // pred_check
          %p4363 = pneg %p400
        $region94: #{tpu_custom_call.1} parent=91 // pred_check_branch
          %4365 = sbr.rel (%p4363) target = $region96
        $region95: #{tpu_custom_call.1} parent=91 // pred_region
          %s4366 = sand.u32 %s385, 1
          %s4367 = scalar_lea.sflag [#allocation7], %s4366
          %s4368 = sand.u32 %s385, 1
          %s4369 = smul.addr %s4368, 64
          %s4370 = scalar_lea.vmem [#allocation6], %s4369
          %4372 = dma.done %s4367, 1024
        $region96: #{tpu_custom_call.1} parent=91 // pred_fallthru
          _
      $region92: #{tpu_custom_call.1} parent=5 // pred_fallthru
        _
    $region6: #{tpu_custom_call.1} parent=1 // loop_footer
      %s29 = sadd.s32 1, %s25
    $region7: #{tpu_custom_call.1} parent=1 // loop_footer_branch
      %24 = sbr.rel target = $region3
    $region8: #{tpu_custom_call.1} parent=1 // loop_exit
      _
    %4373 = vsyncpa [#allocation7], 1
    %s4374 = scalar_lea.sflag [#allocation7], 1
    %4375 = vsyncpa %s4374, 1

</llo_original>
